<compile_context>
chip_gen: v6e
topology: v6e:2x2x1
jax: 0.10.0
libtpu: 0.0.40
codegen_flags: <defaults>
</compile_context>

<pallas_src>
import numpy as np
import jax
import jax.numpy as jnp
from jax import lax
from jax.experimental import pallas as pl
from jax.experimental.pallas import tpu as pltpu

NUM_VARS = 3  # configuration['Variables']
_SQRT_HALF = 0.7071067811865476
_LANE = 128


# --------------------- Kernel 1: complex spectral channel mix ----------------------
def _spectral_mix_kernel(xr_ref, xi_ref, wr_ref, wi_ref, or_ref, oi_ref,
                         wsum_ref, wdiff_ref):
    Ci, B, Pp = xr_ref.shape
    Co = wr_ref.shape[1]

    # Karatsuba weight combinations, computed once outside the Ci loop.
    wsum_ref[...] = wr_ref[...] + wi_ref[...]
    wdiff_ref[...] = wi_ref[...] - wr_ref[...]

    def body(c, carry):
        acc_r, acc_i = carry
        xr = xr_ref[c][:, None, :]        # (B, 1, Pp)
        xi = xi_ref[c][:, None, :]
        wr = wr_ref[c][None, :, :]        # (1, Co, Pp)
        ws = wsum_ref[c][None, :, :]      # wr + wi
        wd = wdiff_ref[c][None, :, :]     # wi - wr
        k1 = wr * (xr + xi)               # 3-multiply complex product
        acc_r = acc_r + (k1 - xi * ws)    # = xr*wr - xi*wi
        acc_i = acc_i + (k1 + xr * wd)    # = xr*wi + xi*wr
        return acc_r, acc_i

    zeros = jnp.zeros((B, Co, Pp), jnp.float32)
    acc_r, acc_i = lax.fori_loop(0, Ci, body, (zeros, zeros), unroll=True)
    or_ref[...] = acc_r
    oi_ref[...] = acc_i


def spectral_mix(xr, xi, wr, wi):
    """(xr+i*xi):[Ci,B,P] mixed with (wr+i*wi):[Ci,Co,P] -> real/imag each [B,Co,P]."""
    Ci, B, P = xr.shape
    Co = wr.shape[1]
    Pp = ((P + _LANE - 1) // _LANE) * _LANE          # lane-dense last axis
    pad = Pp - P
    if pad:
        padw = ((0, 0), (0, 0), (0, pad))
        xr = jnp.pad(xr, padw)
        xi = jnp.pad(xi, padw)
        wr = jnp.pad(wr, padw)
        wi = jnp.pad(wi, padw)
    out_sds = jax.ShapeDtypeStruct((B, Co, Pp), jnp.float32)
    cost = pl.CostEstimate(
        flops=8 * Ci * B * Co * Pp,
        transcendentals=0,
        bytes_accessed=4 * (2 * Ci * B * Pp + 2 * Ci * Co * Pp + 2 * B * Co * Pp))
    out_r, out_i = pl.pallas_call(
        _spectral_mix_kernel,
        out_shape=[out_sds, out_sds],
        scratch_shapes=[pltpu.VMEM((Ci, Co, Pp), jnp.float32),
                        pltpu.VMEM((Ci, Co, Pp), jnp.float32)],
        compiler_params=pltpu.CompilerParams(vmem_limit_bytes=32 * 1024 * 1024),
        cost_estimate=cost,
    )(xr, xi, wr, wi)
    if pad:
        out_r = out_r[..., :P]
        out_i = out_i[..., :P]
    return out_r, out_i


# ---------------- Kernel 2: 1x1x1 conv + residual add + exact GELU ----------------
def _erf(x):
    # Abramowitz & Stegun 7.1.26 (max abs err ~1.5e-7); exp lowers on the EUP and
    # avoids relying on an erf primitive lowering inside Mosaic.
    a1, a2, a3, a4, a5 = 0.254829592, -0.284496736, 1.421413741, -1.453152027, 1.061405429
    p = 0.3275911
    ax = jnp.abs(x)
    t = 1.0 / (1.0 + p * ax)
    poly = ((((a5 * t + a4) * t + a3) * t + a2) * t + a1) * t
    y = 1.0 - poly * jnp.exp(-ax * ax)
    return jnp.where(x < 0.0, -y, y)


def _pointwise_gelu_kernel(w_ref, b_ref, x_ref, x1_ref, o_ref):
    # out[Co, tn] = W[Co,Ci] @ X[Ci,tn] + bias + residual, then exact GELU.
    y = jnp.dot(w_ref[...], x_ref[...],
                preferred_element_type=jnp.float32,
                precision=lax.Precision.HIGHEST)
    z = y + x1_ref[...] + b_ref[...]
    o_ref[...] = (0.5 * z * (1.0 + _erf(z * _SQRT_HALF))).astype(o_ref.dtype)


def pointwise_add_gelu(x_cn, w_oc, b_o, x1_on, *, tn=None):
    """x_cn:[Ci,N], w_oc:[Co,Ci], b_o:[Co], x1_on:[Co,N] -> gelu(W@x + b + x1):[Co,N]."""
    Ci, N = x_cn.shape
    Co = w_oc.shape[0]
    if tn is None:
        # 768 lanes per tile -> grid of 2 at the test shapes (v7x megacore split),
        # always a multiple of 128 for unmasked, lane-dense stores.
        tn = min(6 * _LANE, ((N + _LANE - 1) // _LANE) * _LANE)
    Np = ((N + tn - 1) // tn) * tn
    if Np != N:
        x_cn = jnp.pad(x_cn, ((0, 0), (0, Np - N)))
        x1_on = jnp.pad(x1_on, ((0, 0), (0, Np - N)))
    cost = pl.CostEstimate(
        flops=2 * Co * Ci * Np + 16 * Co * Np,
        transcendentals=Co * Np,
        bytes_accessed=4 * (Ci * Np + 2 * Co * Np + Co * Ci + Co))
    out = pl.pallas_call(
        _pointwise_gelu_kernel,
        grid=(Np // tn,),
        in_specs=[
            pl.BlockSpec((Co, Ci), lambda n: (0, 0)),
            pl.BlockSpec((Co, 1), lambda n: (0, 0)),
            pl.BlockSpec((Ci, tn), lambda n: (0, n)),
            pl.BlockSpec((Co, tn), lambda n: (0, n)),
        ],
        out_specs=pl.BlockSpec((Co, tn), lambda n: (0, n)),
        out_shape=jax.ShapeDtypeStruct((Co, Np), jnp.float32),
        compiler_params=pltpu.CompilerParams(
            dimension_semantics=("parallel",),
            vmem_limit_bytes=32 * 1024 * 1024),
        cost_estimate=cost,
    )(w_oc, b_o.reshape(Co, 1), x_cn, x1_on)
    return out[:, :N]


# ---------------------------------- FNO2d forward ----------------------------------
def fno2d_forward(x, params):
    # x: [B, C(width), V, H, W] float32
    B, C, V, H, W = x.shape
    w1, w2 = params["w1"], params["w2"]           # [Ci, Co, V, m1, m2] complex64
    _, Co, _, m1, m2 = w1.shape                    # modes are static (from shapes)
    Wf = W // 2 + 1

    # ---- SpectralConv2d: FFTs in plain JAX, channel mixing in Pallas ----
    x_ft = jnp.fft.rfft2(x)                        # [B, C, V, H, Wf] complex64
    top = x_ft[:, :, :, :m1, :m2]
    bot = x_ft[:, :, :, H - m1:, :m2]
    P = 2 * V * m1 * m2
    xs = jnp.transpose(jnp.stack([top, bot], axis=2).reshape(B, C, P), (1, 0, 2))
    ws = jnp.stack([w1, w2], axis=2).reshape(C, Co, P)

    out_r, out_i = spectral_mix(jnp.real(xs), jnp.imag(xs),
                                jnp.real(ws), jnp.imag(ws))        # [B, Co, P] each
    out_c = (out_r + 1j * out_i).astype(jnp.complex64).reshape(B, Co, 2, V, m1, m2)

    out_ft = jnp.zeros((B, Co, V, H, Wf), jnp.complex64)
    out_ft = out_ft.at[:, :, :, :m1, :m2].set(out_c[:, :, 0])
    out_ft = out_ft.at[:, :, :, H - m1:, :m2].set(out_c[:, :, 1])
    x1 = jnp.fft.irfft2(out_ft, s=(H, W)).astype(jnp.float32)      # [B, Co, V, H, W]

    # ---- Conv3d(width, width, 1) + residual + GELU (fused Pallas kernel) ----
    # [C, N] layout: only the two leading axes are swapped (V,H,W stay contiguous)
    # and the kernel output is lane-dense along N = B*V*H*W.
    N = B * V * H * W
    x_cn = jnp.transpose(x, (1, 0, 2, 3, 4)).reshape(C, N)
    x1_on = jnp.transpose(x1, (1, 0, 2, 3, 4)).reshape(Co, N)
    w_oc = params["w_conv"].reshape(Co, C)
    b_o = params["b_conv"]

    out_on = pointwise_add_gelu(x_cn, w_oc, b_o, x1_on)            # [Co, N]
    out = out_on.reshape(Co, B, V, H, W)
    return jnp.transpose(out, (1, 0, 2, 3, 4))                     # [B, C, V, H, W]


# ------------------------------- pure-JAX reference --------------------------------
def fno2d_reference(x, params):
    B, C, V, H, W = x.shape
    w1, w2 = params["w1"], params["w2"]
    _, Co, _, m1, m2 = w1.shape
    Wf = W // 2 + 1
    hp = lax.Precision.HIGHEST
    x_ft = jnp.fft.rfft2(x)
    out_ft = jnp.zeros((B, Co, V, H, Wf), jnp.complex64)
    out_ft = out_ft.at[:, :, :, :m1, :m2].set(
        jnp.einsum("bivxy,iovxy->bovxy", x_ft[:, :, :, :m1, :m2], w1, precision=hp))
    out_ft = out_ft.at[:, :, :, H - m1:, :m2].set(
        jnp.einsum("bivxy,iovxy->bovxy", x_ft[:, :, :, H - m1:, :m2], w2, precision=hp))
    x1 = jnp.fft.irfft2(out_ft, s=(H, W))
    wc = params["w_conv"].reshape(Co, C)
    x2 = jnp.einsum("oi,bivhw->bovhw", wc, x, precision=hp) \
        + params["b_conv"][None, :, None, None, None]
    z = x1 + x2
    return 0.5 * z * (1.0 + jax.lax.erf(z * _SQRT_HALF))


if __name__ == "__main__":
    # width=16, modes=4, num_vars=3, batch=2, spatial 16x16
    B, width, V, H, W = 2, 16, NUM_VARS, 16, 16
    m1, m2 = 4, 4

    key = jax.random.PRNGKey(0)
    k1, k2, k3, k4, k5, k6, kx = jax.random.split(key, 7)
    scale = 1.0 / (width * width)
    w_shape = (width, width, V, m1, m2)
    bound = 1.0 / np.sqrt(width)
    params = {
        "w1": (scale * (jax.random.uniform(k1, w_shape)
                        + 1j * jax.random.uniform(k2, w_shape))).astype(jnp.complex64),
        "w2": (scale * (jax.random.uniform(k3, w_shape)
                        + 1j * jax.random.uniform(k4, w_shape))).astype(jnp.complex64),
        # nn.Conv3d(width, width, kernel_size=1): weight [Co, Ci, 1, 1, 1], bias [Co]
        "w_conv": jax.random.uniform(k5, (width, width, 1, 1, 1),
                                     minval=-bound, maxval=bound).astype(jnp.float32),
        "b_conv": jax.random.uniform(k6, (width,),
                                     minval=-bound, maxval=bound).astype(jnp.float32),
    }
    x = jax.random.normal(kx, (B, width, V, H, W), dtype=jnp.float32)

    out = jax.block_until_ready(jax.jit(fno2d_forward)(x, params))
    ref = jax.block_until_ready(fno2d_reference(x, params))
    np.testing.assert_allclose(np.asarray(out), np.asarray(ref), rtol=1e-3, atol=5e-4)

    print("KERNEL_OK")
</pallas_src>

<mosaic_0001>
module attributes {stable_mosaic.version = 11 : i64} {
  func.func @_spectral_mix_kernel(%arg0: memref<16x2x128xf32, #tpu.memory_space<vmem>>, %arg1: memref<16x2x128xf32, #tpu.memory_space<vmem>>, %arg2: memref<16x16x128xf32, #tpu.memory_space<vmem>>, %arg3: memref<16x16x128xf32, #tpu.memory_space<vmem>>, %arg4: memref<2x16x128xf32, #tpu.memory_space<vmem>>, %arg5: memref<2x16x128xf32, #tpu.memory_space<vmem>>, %arg6: memref<16x16x128xf32, #tpu.memory_space<vmem>>, %arg7: memref<16x16x128xf32, #tpu.memory_space<vmem>>) attributes {dimension_semantics = [], scalar_prefetch = 0 : i64, scratch_operands = 2 : i64, tpu.core_type = #tpu.core_type<tc>} {
    %c0 = arith.constant 0 : index
    %c0_0 = arith.constant 0 : index
    %c0_1 = arith.constant 0 : index
    %0 = vector.load %arg2[%c0, %c0_0, %c0_1] : memref<16x16x128xf32, #tpu.memory_space<vmem>>, vector<16x16x128xf32>
    %c0_2 = arith.constant 0 : index
    %c0_3 = arith.constant 0 : index
    %c0_4 = arith.constant 0 : index
    %1 = vector.load %arg3[%c0_2, %c0_3, %c0_4] : memref<16x16x128xf32, #tpu.memory_space<vmem>>, vector<16x16x128xf32>
    %2 = arith.addf %0, %1 : vector<16x16x128xf32>
    %c0_5 = arith.constant 0 : index
    %c0_6 = arith.constant 0 : index
    %c0_7 = arith.constant 0 : index
    %3 = vector.load %arg6[%c0_5, %c0_6, %c0_7] : memref<16x16x128xf32, #tpu.memory_space<vmem>>, vector<16x16x128xf32>
    tpu.vector_store %arg6[%c0_5, %c0_6, %c0_7], %2 {strides = array<i32>} : memref<16x16x128xf32, #tpu.memory_space<vmem>>, vector<16x16x128xf32>,
    %c0_8 = arith.constant 0 : index
    %c0_9 = arith.constant 0 : index
    %c0_10 = arith.constant 0 : index
    %4 = vector.load %arg3[%c0_8, %c0_9, %c0_10] : memref<16x16x128xf32, #tpu.memory_space<vmem>>, vector<16x16x128xf32>
    %c0_11 = arith.constant 0 : index
    %c0_12 = arith.constant 0 : index
    %c0_13 = arith.constant 0 : index
    %5 = vector.load %arg2[%c0_11, %c0_12, %c0_13] : memref<16x16x128xf32, #tpu.memory_space<vmem>>, vector<16x16x128xf32>
    %6 = arith.subf %4, %5 : vector<16x16x128xf32>
    %c0_14 = arith.constant 0 : index
    %c0_15 = arith.constant 0 : index
    %c0_16 = arith.constant 0 : index
    %7 = vector.load %arg7[%c0_14, %c0_15, %c0_16] : memref<16x16x128xf32, #tpu.memory_space<vmem>>, vector<16x16x128xf32>
    tpu.vector_store %arg7[%c0_14, %c0_15, %c0_16], %6 {strides = array<i32>} : memref<16x16x128xf32, #tpu.memory_space<vmem>>, vector<16x16x128xf32>,
    %cst = arith.constant 0.000000e+00 : f32
    %8 = vector.broadcast %cst : f32 to vector<2x16x128xf32>
    %c0_i32 = arith.constant 0 : i32
    %9 = arith.index_cast %c0_i32 : i32 to index
    %c0_17 = arith.constant 0 : index
    %c0_18 = arith.constant 0 : index
    %10 = vector.load %arg0[%9, %c0_17, %c0_18] : memref<16x2x128xf32, #tpu.memory_space<vmem>>, vector<1x2x128xf32>
    %11 = vector.shape_cast %10 : vector<1x2x128xf32> to vector<2x128xf32>
    %12 = vector.shape_cast %11 : vector<2x128xf32> to vector<2x1x128xf32>
    %13 = arith.index_cast %c0_i32 : i32 to index
    %c0_19 = arith.constant 0 : index
    %c0_20 = arith.constant 0 : index
    %14 = vector.load %arg1[%13, %c0_19, %c0_20] : memref<16x2x128xf32, #tpu.memory_space<vmem>>, vector<1x2x128xf32>
    %15 = vector.shape_cast %14 : vector<1x2x128xf32> to vector<2x128xf32>
    %16 = vector.shape_cast %15 : vector<2x128xf32> to vector<2x1x128xf32>
    %17 = arith.index_cast %c0_i32 : i32 to index
    %c0_21 = arith.constant 0 : index
    %c0_22 = arith.constant 0 : index
    %18 = vector.load %arg2[%17, %c0_21, %c0_22] : memref<16x16x128xf32, #tpu.memory_space<vmem>>, vector<1x16x128xf32>
    %19 = vector.shape_cast %18 : vector<1x16x128xf32> to vector<16x128xf32>
    %20 = vector.shape_cast %19 : vector<16x128xf32> to vector<1x16x128xf32>
    %21 = arith.index_cast %c0_i32 : i32 to index
    %c0_23 = arith.constant 0 : index
    %c0_24 = arith.constant 0 : index
    %22 = vector.load %arg6[%21, %c0_23, %c0_24] : memref<16x16x128xf32, #tpu.memory_space<vmem>>, vector<1x16x128xf32>
    %23 = vector.shape_cast %22 : vector<1x16x128xf32> to vector<16x128xf32>
    %24 = vector.shape_cast %23 : vector<16x128xf32> to vector<1x16x128xf32>
    %25 = arith.index_cast %c0_i32 : i32 to index
    %c0_25 = arith.constant 0 : index
    %c0_26 = arith.constant 0 : index
    %26 = vector.load %arg7[%25, %c0_25, %c0_26] : memref<16x16x128xf32, #tpu.memory_space<vmem>>, vector<1x16x128xf32>
    %27 = vector.shape_cast %26 : vector<1x16x128xf32> to vector<16x128xf32>
    %28 = vector.shape_cast %27 : vector<16x128xf32> to vector<1x16x128xf32>
    %29 = arith.addf %12, %16 : vector<2x1x128xf32>
    %30 = vector.broadcast %20 : vector<1x16x128xf32> to vector<2x16x128xf32>
    %31 = vector.broadcast %29 : vector<2x1x128xf32> to vector<2x16x128xf32>
    %32 = arith.mulf %30, %31 : vector<2x16x128xf32>
    %33 = vector.broadcast %16 : vector<2x1x128xf32> to vector<2x16x128xf32>
    %34 = vector.broadcast %24 : vector<1x16x128xf32> to vector<2x16x128xf32>
    %35 = arith.mulf %33, %34 : vector<2x16x128xf32>
    %36 = arith.subf %32, %35 : vector<2x16x128xf32>
    %37 = arith.addf %8, %36 : vector<2x16x128xf32>
    %38 = vector.broadcast %12 : vector<2x1x128xf32> to vector<2x16x128xf32>
    %39 = vector.broadcast %28 : vector<1x16x128xf32> to vector<2x16x128xf32>
    %40 = arith.mulf %38, %39 : vector<2x16x128xf32>
    %41 = arith.addf %32, %40 : vector<2x16x128xf32>
    %42 = arith.addf %8, %41 : vector<2x16x128xf32>
    %c1_i32 = arith.constant 1 : i32
    %43 = arith.index_cast %c1_i32 : i32 to index
    %c0_27 = arith.constant 0 : index
    %c0_28 = arith.constant 0 : index
    %44 = vector.load %arg0[%43, %c0_27, %c0_28] : memref<16x2x128xf32, #tpu.memory_space<vmem>>, vector<1x2x128xf32>
    %45 = vector.shape_cast %44 : vector<1x2x128xf32> to vector<2x128xf32>
    %46 = vector.shape_cast %45 : vector<2x128xf32> to vector<2x1x128xf32>
    %47 = arith.index_cast %c1_i32 : i32 to index
    %c0_29 = arith.constant 0 : index
    %c0_30 = arith.constant 0 : index
    %48 = vector.load %arg1[%47, %c0_29, %c0_30] : memref<16x2x128xf32, #tpu.memory_space<vmem>>, vector<1x2x128xf32>
    %49 = vector.shape_cast %48 : vector<1x2x128xf32> to vector<2x128xf32>
    %50 = vector.shape_cast %49 : vector<2x128xf32> to vector<2x1x128xf32>
    %51 = arith.index_cast %c1_i32 : i32 to index
    %c0_31 = arith.constant 0 : index
    %c0_32 = arith.constant 0 : index
    %52 = vector.load %arg2[%51, %c0_31, %c0_32] : memref<16x16x128xf32, #tpu.memory_space<vmem>>, vector<1x16x128xf32>
    %53 = vector.shape_cast %52 : vector<1x16x128xf32> to vector<16x128xf32>
    %54 = vector.shape_cast %53 : vector<16x128xf32> to vector<1x16x128xf32>
    %55 = arith.index_cast %c1_i32 : i32 to index
    %c0_33 = arith.constant 0 : index
    %c0_34 = arith.constant 0 : index
    %56 = vector.load %arg6[%55, %c0_33, %c0_34] : memref<16x16x128xf32, #tpu.memory_space<vmem>>, vector<1x16x128xf32>
    %57 = vector.shape_cast %56 : vector<1x16x128xf32> to vector<16x128xf32>
    %58 = vector.shape_cast %57 : vector<16x128xf32> to vector<1x16x128xf32>
    %59 = arith.index_cast %c1_i32 : i32 to index
    %c0_35 = arith.constant 0 : index
    %c0_36 = arith.constant 0 : index
    %60 = vector.load %arg7[%59, %c0_35, %c0_36] : memref<16x16x128xf32, #tpu.memory_space<vmem>>, vector<1x16x128xf32>
    %61 = vector.shape_cast %60 : vector<1x16x128xf32> to vector<16x128xf32>
    %62 = vector.shape_cast %61 : vector<16x128xf32> to vector<1x16x128xf32>
    %63 = arith.addf %46, %50 : vector<2x1x128xf32>
    %64 = vector.broadcast %54 : vector<1x16x128xf32> to vector<2x16x128xf32>
    %65 = vector.broadcast %63 : vector<2x1x128xf32> to vector<2x16x128xf32>
    %66 = arith.mulf %64, %65 : vector<2x16x128xf32>
    %67 = vector.broadcast %50 : vector<2x1x128xf32> to vector<2x16x128xf32>
    %68 = vector.broadcast %58 : vector<1x16x128xf32> to vector<2x16x128xf32>
    %69 = arith.mulf %67, %68 : vector<2x16x128xf32>
    %70 = arith.subf %66, %69 : vector<2x16x128xf32>
    %71 = arith.addf %37, %70 : vector<2x16x128xf32>
    %72 = vector.broadcast %46 : vector<2x1x128xf32> to vector<2x16x128xf32>
    %73 = vector.broadcast %62 : vector<1x16x128xf32> to vector<2x16x128xf32>
    %74 = arith.mulf %72, %73 : vector<2x16x128xf32>
    %75 = arith.addf %66, %74 : vector<2x16x128xf32>
    %76 = arith.addf %42, %75 : vector<2x16x128xf32>
    %c2_i32 = arith.constant 2 : i32
    %77 = arith.index_cast %c2_i32 : i32 to index
    %c0_37 = arith.constant 0 : index
    %c0_38 = arith.constant 0 : index
    %78 = vector.load %arg0[%77, %c0_37, %c0_38] : memref<16x2x128xf32, #tpu.memory_space<vmem>>, vector<1x2x128xf32>
    %79 = vector.shape_cast %78 : vector<1x2x128xf32> to vector<2x128xf32>
    %80 = vector.shape_cast %79 : vector<2x128xf32> to vector<2x1x128xf32>
    %81 = arith.index_cast %c2_i32 : i32 to index
    %c0_39 = arith.constant 0 : index
    %c0_40 = arith.constant 0 : index
    %82 = vector.load %arg1[%81, %c0_39, %c0_40] : memref<16x2x128xf32, #tpu.memory_space<vmem>>, vector<1x2x128xf32>
    %83 = vector.shape_cast %82 : vector<1x2x128xf32> to vector<2x128xf32>
    %84 = vector.shape_cast %83 : vector<2x128xf32> to vector<2x1x128xf32>
    %85 = arith.index_cast %c2_i32 : i32 to index
    %c0_41 = arith.constant 0 : index
    %c0_42 = arith.constant 0 : index
    %86 = vector.load %arg2[%85, %c0_41, %c0_42] : memref<16x16x128xf32, #tpu.memory_space<vmem>>, vector<1x16x128xf32>
    %87 = vector.shape_cast %86 : vector<1x16x128xf32> to vector<16x128xf32>
    %88 = vector.shape_cast %87 : vector<16x128xf32> to vector<1x16x128xf32>
    %89 = arith.index_cast %c2_i32 : i32 to index
    %c0_43 = arith.constant 0 : index
    %c0_44 = arith.constant 0 : index
    %90 = vector.load %arg6[%89, %c0_43, %c0_44] : memref<16x16x128xf32, #tpu.memory_space<vmem>>, vector<1x16x128xf32>
    %91 = vector.shape_cast %90 : vector<1x16x128xf32> to vector<16x128xf32>
    %92 = vector.shape_cast %91 : vector<16x128xf32> to vector<1x16x128xf32>
    %93 = arith.index_cast %c2_i32 : i32 to index
    %c0_45 = arith.constant 0 : index
    %c0_46 = arith.constant 0 : index
    %94 = vector.load %arg7[%93, %c0_45, %c0_46] : memref<16x16x128xf32, #tpu.memory_space<vmem>>, vector<1x16x128xf32>
    %95 = vector.shape_cast %94 : vector<1x16x128xf32> to vector<16x128xf32>
    %96 = vector.shape_cast %95 : vector<16x128xf32> to vector<1x16x128xf32>
    %97 = arith.addf %80, %84 : vector<2x1x128xf32>
    %98 = vector.broadcast %88 : vector<1x16x128xf32> to vector<2x16x128xf32>
    %99 = vector.broadcast %97 : vector<2x1x128xf32> to vector<2x16x128xf32>
    %100 = arith.mulf %98, %99 : vector<2x16x128xf32>
    %101 = vector.broadcast %84 : vector<2x1x128xf32> to vector<2x16x128xf32>
    %102 = vector.broadcast %92 : vector<1x16x128xf32> to vector<2x16x128xf32>
    %103 = arith.mulf %101, %102 : vector<2x16x128xf32>
    %104 = arith.subf %100, %103 : vector<2x16x128xf32>
    %105 = arith.addf %71, %104 : vector<2x16x128xf32>
    %106 = vector.broadcast %80 : vector<2x1x128xf32> to vector<2x16x128xf32>
    %107 = vector.broadcast %96 : vector<1x16x128xf32> to vector<2x16x128xf32>
    %108 = arith.mulf %106, %107 : vector<2x16x128xf32>
    %109 = arith.addf %100, %108 : vector<2x16x128xf32>
    %110 = arith.addf %76, %109 : vector<2x16x128xf32>
    %c3_i32 = arith.constant 3 : i32
    %111 = arith.index_cast %c3_i32 : i32 to index
    %c0_47 = arith.constant 0 : index
    %c0_48 = arith.constant 0 : index
    %112 = vector.load %arg0[%111, %c0_47, %c0_48] : memref<16x2x128xf32, #tpu.memory_space<vmem>>, vector<1x2x128xf32>
    %113 = vector.shape_cast %112 : vector<1x2x128xf32> to vector<2x128xf32>
    %114 = vector.shape_cast %113 : vector<2x128xf32> to vector<2x1x128xf32>
    %115 = arith.index_cast %c3_i32 : i32 to index
    %c0_49 = arith.constant 0 : index
    %c0_50 = arith.constant 0 : index
    %116 = vector.load %arg1[%115, %c0_49, %c0_50] : memref<16x2x128xf32, #tpu.memory_space<vmem>>, vector<1x2x128xf32>
    %117 = vector.shape_cast %116 : vector<1x2x128xf32> to vector<2x128xf32>
    %118 = vector.shape_cast %117 : vector<2x128xf32> to vector<2x1x128xf32>
    %119 = arith.index_cast %c3_i32 : i32 to index
    %c0_51 = arith.constant 0 : index
    %c0_52 = arith.constant 0 : index
    %120 = vector.load %arg2[%119, %c0_51, %c0_52] : memref<16x16x128xf32, #tpu.memory_space<vmem>>, vector<1x16x128xf32>
    %121 = vector.shape_cast %120 : vector<1x16x128xf32> to vector<16x128xf32>
    %122 = vector.shape_cast %121 : vector<16x128xf32> to vector<1x16x128xf32>
    %123 = arith.index_cast %c3_i32 : i32 to index
    %c0_53 = arith.constant 0 : index
    %c0_54 = arith.constant 0 : index
    %124 = vector.load %arg6[%123, %c0_53, %c0_54] : memref<16x16x128xf32, #tpu.memory_space<vmem>>, vector<1x16x128xf32>
    %125 = vector.shape_cast %124 : vector<1x16x128xf32> to vector<16x128xf32>
    %126 = vector.shape_cast %125 : vector<16x128xf32> to vector<1x16x128xf32>
    %127 = arith.index_cast %c3_i32 : i32 to index
    %c0_55 = arith.constant 0 : index
    %c0_56 = arith.constant 0 : index
    %128 = vector.load %arg7[%127, %c0_55, %c0_56] : memref<16x16x128xf32, #tpu.memory_space<vmem>>, vector<1x16x128xf32>
    %129 = vector.shape_cast %128 : vector<1x16x128xf32> to vector<16x128xf32>
    %130 = vector.shape_cast %129 : vector<16x128xf32> to vector<1x16x128xf32>
    %131 = arith.addf %114, %118 : vector<2x1x128xf32>
    %132 = vector.broadcast %122 : vector<1x16x128xf32> to vector<2x16x128xf32>
    %133 = vector.broadcast %131 : vector<2x1x128xf32> to vector<2x16x128xf32>
    %134 = arith.mulf %132, %133 : vector<2x16x128xf32>
    %135 = vector.broadcast %118 : vector<2x1x128xf32> to vector<2x16x128xf32>
    %136 = vector.broadcast %126 : vector<1x16x128xf32> to vector<2x16x128xf32>
    %137 = arith.mulf %135, %136 : vector<2x16x128xf32>
    %138 = arith.subf %134, %137 : vector<2x16x128xf32>
    %139 = arith.addf %105, %138 : vector<2x16x128xf32>
    %140 = vector.broadcast %114 : vector<2x1x128xf32> to vector<2x16x128xf32>
    %141 = vector.broadcast %130 : vector<1x16x128xf32> to vector<2x16x128xf32>
    %142 = arith.mulf %140, %141 : vector<2x16x128xf32>
    %143 = arith.addf %134, %142 : vector<2x16x128xf32>
    %144 = arith.addf %110, %143 : vector<2x16x128xf32>
    %c4_i32 = arith.constant 4 : i32
    %145 = arith.index_cast %c4_i32 : i32 to index
    %c0_57 = arith.constant 0 : index
    %c0_58 = arith.constant 0 : index
    %146 = vector.load %arg0[%145, %c0_57, %c0_58] : memref<16x2x128xf32, #tpu.memory_space<vmem>>, vector<1x2x128xf32>
    %147 = vector.shape_cast %146 : vector<1x2x128xf32> to vector<2x128xf32>
    %148 = vector.shape_cast %147 : vector<2x128xf32> to vector<2x1x128xf32>
    %149 = arith.index_cast %c4_i32 : i32 to index
    %c0_59 = arith.constant 0 : index
    %c0_60 = arith.constant 0 : index
    %150 = vector.load %arg1[%149, %c0_59, %c0_60] : memref<16x2x128xf32, #tpu.memory_space<vmem>>, vector<1x2x128xf32>
    %151 = vector.shape_cast %150 : vector<1x2x128xf32> to vector<2x128xf32>
    %152 = vector.shape_cast %151 : vector<2x128xf32> to vector<2x1x128xf32>
    %153 = arith.index_cast %c4_i32 : i32 to index
    %c0_61 = arith.constant 0 : index
    %c0_62 = arith.constant 0 : index
    %154 = vector.load %arg2[%153, %c0_61, %c0_62] : memref<16x16x128xf32, #tpu.memory_space<vmem>>, vector<1x16x128xf32>
    %155 = vector.shape_cast %154 : vector<1x16x128xf32> to vector<16x128xf32>
    %156 = vector.shape_cast %155 : vector<16x128xf32> to vector<1x16x128xf32>
    %157 = arith.index_cast %c4_i32 : i32 to index
    %c0_63 = arith.constant 0 : index
    %c0_64 = arith.constant 0 : index
    %158 = vector.load %arg6[%157, %c0_63, %c0_64] : memref<16x16x128xf32, #tpu.memory_space<vmem>>, vector<1x16x128xf32>
    %159 = vector.shape_cast %158 : vector<1x16x128xf32> to vector<16x128xf32>
    %160 = vector.shape_cast %159 : vector<16x128xf32> to vector<1x16x128xf32>
    %161 = arith.index_cast %c4_i32 : i32 to index
    %c0_65 = arith.constant 0 : index
    %c0_66 = arith.constant 0 : index
    %162 = vector.load %arg7[%161, %c0_65, %c0_66] : memref<16x16x128xf32, #tpu.memory_space<vmem>>, vector<1x16x128xf32>
    %163 = vector.shape_cast %162 : vector<1x16x128xf32> to vector<16x128xf32>
    %164 = vector.shape_cast %163 : vector<16x128xf32> to vector<1x16x128xf32>
    %165 = arith.addf %148, %152 : vector<2x1x128xf32>
    %166 = vector.broadcast %156 : vector<1x16x128xf32> to vector<2x16x128xf32>
    %167 = vector.broadcast %165 : vector<2x1x128xf32> to vector<2x16x128xf32>
    %168 = arith.mulf %166, %167 : vector<2x16x128xf32>
    %169 = vector.broadcast %152 : vector<2x1x128xf32> to vector<2x16x128xf32>
    %170 = vector.broadcast %160 : vector<1x16x128xf32> to vector<2x16x128xf32>
    %171 = arith.mulf %169, %170 : vector<2x16x128xf32>
    %172 = arith.subf %168, %171 : vector<2x16x128xf32>
    %173 = arith.addf %139, %172 : vector<2x16x128xf32>
    %174 = vector.broadcast %148 : vector<2x1x128xf32> to vector<2x16x128xf32>
    %175 = vector.broadcast %164 : vector<1x16x128xf32> to vector<2x16x128xf32>
    %176 = arith.mulf %174, %175 : vector<2x16x128xf32>
    %177 = arith.addf %168, %176 : vector<2x16x128xf32>
    %178 = arith.addf %144, %177 : vector<2x16x128xf32>
    %c5_i32 = arith.constant 5 : i32
    %179 = arith.index_cast %c5_i32 : i32 to index
    %c0_67 = arith.constant 0 : index
    %c0_68 = arith.constant 0 : index
    %180 = vector.load %arg0[%179, %c0_67, %c0_68] : memref<16x2x128xf32, #tpu.memory_space<vmem>>, vector<1x2x128xf32>
    %181 = vector.shape_cast %180 : vector<1x2x128xf32> to vector<2x128xf32>
    %182 = vector.shape_cast %181 : vector<2x128xf32> to vector<2x1x128xf32>
    %183 = arith.index_cast %c5_i32 : i32 to index
    %c0_69 = arith.constant 0 : index
    %c0_70 = arith.constant 0 : index
    %184 = vector.load %arg1[%183, %c0_69, %c0_70] : memref<16x2x128xf32, #tpu.memory_space<vmem>>, vector<1x2x128xf32>
    %185 = vector.shape_cast %184 : vector<1x2x128xf32> to vector<2x128xf32>
    %186 = vector.shape_cast %185 : vector<2x128xf32> to vector<2x1x128xf32>
    %187 = arith.index_cast %c5_i32 : i32 to index
    %c0_71 = arith.constant 0 : index
    %c0_72 = arith.constant 0 : index
    %188 = vector.load %arg2[%187, %c0_71, %c0_72] : memref<16x16x128xf32, #tpu.memory_space<vmem>>, vector<1x16x128xf32>
    %189 = vector.shape_cast %188 : vector<1x16x128xf32> to vector<16x128xf32>
    %190 = vector.shape_cast %189 : vector<16x128xf32> to vector<1x16x128xf32>
    %191 = arith.index_cast %c5_i32 : i32 to index
    %c0_73 = arith.constant 0 : index
    %c0_74 = arith.constant 0 : index
    %192 = vector.load %arg6[%191, %c0_73, %c0_74] : memref<16x16x128xf32, #tpu.memory_space<vmem>>, vector<1x16x128xf32>
    %193 = vector.shape_cast %192 : vector<1x16x128xf32> to vector<16x128xf32>
    %194 = vector.shape_cast %193 : vector<16x128xf32> to vector<1x16x128xf32>
    %195 = arith.index_cast %c5_i32 : i32 to index
    %c0_75 = arith.constant 0 : index
    %c0_76 = arith.constant 0 : index
    %196 = vector.load %arg7[%195, %c0_75, %c0_76] : memref<16x16x128xf32, #tpu.memory_space<vmem>>, vector<1x16x128xf32>
    %197 = vector.shape_cast %196 : vector<1x16x128xf32> to vector<16x128xf32>
    %198 = vector.shape_cast %197 : vector<16x128xf32> to vector<1x16x128xf32>
    %199 = arith.addf %182, %186 : vector<2x1x128xf32>
    %200 = vector.broadcast %190 : vector<1x16x128xf32> to vector<2x16x128xf32>
    %201 = vector.broadcast %199 : vector<2x1x128xf32> to vector<2x16x128xf32>
    %202 = arith.mulf %200, %201 : vector<2x16x128xf32>
    %203 = vector.broadcast %186 : vector<2x1x128xf32> to vector<2x16x128xf32>
    %204 = vector.broadcast %194 : vector<1x16x128xf32> to vector<2x16x128xf32>
    %205 = arith.mulf %203, %204 : vector<2x16x128xf32>
    %206 = arith.subf %202, %205 : vector<2x16x128xf32>
    %207 = arith.addf %173, %206 : vector<2x16x128xf32>
    %208 = vector.broadcast %182 : vector<2x1x128xf32> to vector<2x16x128xf32>
    %209 = vector.broadcast %198 : vector<1x16x128xf32> to vector<2x16x128xf32>
    %210 = arith.mulf %208, %209 : vector<2x16x128xf32>
    %211 = arith.addf %202, %210 : vector<2x16x128xf32>
    %212 = arith.addf %178, %211 : vector<2x16x128xf32>
    %c6_i32 = arith.constant 6 : i32
    %213 = arith.index_cast %c6_i32 : i32 to index
    %c0_77 = arith.constant 0 : index
    %c0_78 = arith.constant 0 : index
    %214 = vector.load %arg0[%213, %c0_77, %c0_78] : memref<16x2x128xf32, #tpu.memory_space<vmem>>, vector<1x2x128xf32>
    %215 = vector.shape_cast %214 : vector<1x2x128xf32> to vector<2x128xf32>
    %216 = vector.shape_cast %215 : vector<2x128xf32> to vector<2x1x128xf32>
    %217 = arith.index_cast %c6_i32 : i32 to index
    %c0_79 = arith.constant 0 : index
    %c0_80 = arith.constant 0 : index
    %218 = vector.load %arg1[%217, %c0_79, %c0_80] : memref<16x2x128xf32, #tpu.memory_space<vmem>>, vector<1x2x128xf32>
    %219 = vector.shape_cast %218 : vector<1x2x128xf32> to vector<2x128xf32>
    %220 = vector.shape_cast %219 : vector<2x128xf32> to vector<2x1x128xf32>
    %221 = arith.index_cast %c6_i32 : i32 to index
    %c0_81 = arith.constant 0 : index
    %c0_82 = arith.constant 0 : index
    %222 = vector.load %arg2[%221, %c0_81, %c0_82] : memref<16x16x128xf32, #tpu.memory_space<vmem>>, vector<1x16x128xf32>
    %223 = vector.shape_cast %222 : vector<1x16x128xf32> to vector<16x128xf32>
    %224 = vector.shape_cast %223 : vector<16x128xf32> to vector<1x16x128xf32>
    %225 = arith.index_cast %c6_i32 : i32 to index
    %c0_83 = arith.constant 0 : index
    %c0_84 = arith.constant 0 : index
    %226 = vector.load %arg6[%225, %c0_83, %c0_84] : memref<16x16x128xf32, #tpu.memory_space<vmem>>, vector<1x16x128xf32>
    %227 = vector.shape_cast %226 : vector<1x16x128xf32> to vector<16x128xf32>
    %228 = vector.shape_cast %227 : vector<16x128xf32> to vector<1x16x128xf32>
    %229 = arith.index_cast %c6_i32 : i32 to index
    %c0_85 = arith.constant 0 : index
    %c0_86 = arith.constant 0 : index
    %230 = vector.load %arg7[%229, %c0_85, %c0_86] : memref<16x16x128xf32, #tpu.memory_space<vmem>>, vector<1x16x128xf32>
    %231 = vector.shape_cast %230 : vector<1x16x128xf32> to vector<16x128xf32>
    %232 = vector.shape_cast %231 : vector<16x128xf32> to vector<1x16x128xf32>
    %233 = arith.addf %216, %220 : vector<2x1x128xf32>
    %234 = vector.broadcast %224 : vector<1x16x128xf32> to vector<2x16x128xf32>
    %235 = vector.broadcast %233 : vector<2x1x128xf32> to vector<2x16x128xf32>
    %236 = arith.mulf %234, %235 : vector<2x16x128xf32>
    %237 = vector.broadcast %220 : vector<2x1x128xf32> to vector<2x16x128xf32>
    %238 = vector.broadcast %228 : vector<1x16x128xf32> to vector<2x16x128xf32>
    %239 = arith.mulf %237, %238 : vector<2x16x128xf32>
    %240 = arith.subf %236, %239 : vector<2x16x128xf32>
    %241 = arith.addf %207, %240 : vector<2x16x128xf32>
    %242 = vector.broadcast %216 : vector<2x1x128xf32> to vector<2x16x128xf32>
    %243 = vector.broadcast %232 : vector<1x16x128xf32> to vector<2x16x128xf32>
    %244 = arith.mulf %242, %243 : vector<2x16x128xf32>
    %245 = arith.addf %236, %244 : vector<2x16x128xf32>
    %246 = arith.addf %212, %245 : vector<2x16x128xf32>
    %c7_i32 = arith.constant 7 : i32
    %247 = arith.index_cast %c7_i32 : i32 to index
    %c0_87 = arith.constant 0 : index
    %c0_88 = arith.constant 0 : index
    %248 = vector.load %arg0[%247, %c0_87, %c0_88] : memref<16x2x128xf32, #tpu.memory_space<vmem>>, vector<1x2x128xf32>
    %249 = vector.shape_cast %248 : vector<1x2x128xf32> to vector<2x128xf32>
    %250 = vector.shape_cast %249 : vector<2x128xf32> to vector<2x1x128xf32>
    %251 = arith.index_cast %c7_i32 : i32 to index
    %c0_89 = arith.constant 0 : index
    %c0_90 = arith.constant 0 : index
    %252 = vector.load %arg1[%251, %c0_89, %c0_90] : memref<16x2x128xf32, #tpu.memory_space<vmem>>, vector<1x2x128xf32>
    %253 = vector.shape_cast %252 : vector<1x2x128xf32> to vector<2x128xf32>
    %254 = vector.shape_cast %253 : vector<2x128xf32> to vector<2x1x128xf32>
    %255 = arith.index_cast %c7_i32 : i32 to index
    %c0_91 = arith.constant 0 : index
    %c0_92 = arith.constant 0 : index
    %256 = vector.load %arg2[%255, %c0_91, %c0_92] : memref<16x16x128xf32, #tpu.memory_space<vmem>>, vector<1x16x128xf32>
    %257 = vector.shape_cast %256 : vector<1x16x128xf32> to vector<16x128xf32>
    %258 = vector.shape_cast %257 : vector<16x128xf32> to vector<1x16x128xf32>
    %259 = arith.index_cast %c7_i32 : i32 to index
    %c0_93 = arith.constant 0 : index
    %c0_94 = arith.constant 0 : index
    %260 = vector.load %arg6[%259, %c0_93, %c0_94] : memref<16x16x128xf32, #tpu.memory_space<vmem>>, vector<1x16x128xf32>
    %261 = vector.shape_cast %260 : vector<1x16x128xf32> to vector<16x128xf32>
    %262 = vector.shape_cast %261 : vector<16x128xf32> to vector<1x16x128xf32>
    %263 = arith.index_cast %c7_i32 : i32 to index
    %c0_95 = arith.constant 0 : index
    %c0_96 = arith.constant 0 : index
    %264 = vector.load %arg7[%263, %c0_95, %c0_96] : memref<16x16x128xf32, #tpu.memory_space<vmem>>, vector<1x16x128xf32>
    %265 = vector.shape_cast %264 : vector<1x16x128xf32> to vector<16x128xf32>
    %266 = vector.shape_cast %265 : vector<16x128xf32> to vector<1x16x128xf32>
    %267 = arith.addf %250, %254 : vector<2x1x128xf32>
    %268 = vector.broadcast %258 : vector<1x16x128xf32> to vector<2x16x128xf32>
    %269 = vector.broadcast %267 : vector<2x1x128xf32> to vector<2x16x128xf32>
    %270 = arith.mulf %268, %269 : vector<2x16x128xf32>
    %271 = vector.broadcast %254 : vector<2x1x128xf32> to vector<2x16x128xf32>
    %272 = vector.broadcast %262 : vector<1x16x128xf32> to vector<2x16x128xf32>
    %273 = arith.mulf %271, %272 : vector<2x16x128xf32>
    %274 = arith.subf %270, %273 : vector<2x16x128xf32>
    %275 = arith.addf %241, %274 : vector<2x16x128xf32>
    %276 = vector.broadcast %250 : vector<2x1x128xf32> to vector<2x16x128xf32>
    %277 = vector.broadcast %266 : vector<1x16x128xf32> to vector<2x16x128xf32>
    %278 = arith.mulf %276, %277 : vector<2x16x128xf32>
    %279 = arith.addf %270, %278 : vector<2x16x128xf32>
    %280 = arith.addf %246, %279 : vector<2x16x128xf32>
    %c8_i32 = arith.constant 8 : i32
    %281 = arith.index_cast %c8_i32 : i32 to index
    %c0_97 = arith.constant 0 : index
    %c0_98 = arith.constant 0 : index
    %282 = vector.load %arg0[%281, %c0_97, %c0_98] : memref<16x2x128xf32, #tpu.memory_space<vmem>>, vector<1x2x128xf32>
    %283 = vector.shape_cast %282 : vector<1x2x128xf32> to vector<2x128xf32>
    %284 = vector.shape_cast %283 : vector<2x128xf32> to vector<2x1x128xf32>
    %285 = arith.index_cast %c8_i32 : i32 to index
    %c0_99 = arith.constant 0 : index
    %c0_100 = arith.constant 0 : index
    %286 = vector.load %arg1[%285, %c0_99, %c0_100] : memref<16x2x128xf32, #tpu.memory_space<vmem>>, vector<1x2x128xf32>
    %287 = vector.shape_cast %286 : vector<1x2x128xf32> to vector<2x128xf32>
    %288 = vector.shape_cast %287 : vector<2x128xf32> to vector<2x1x128xf32>
    %289 = arith.index_cast %c8_i32 : i32 to index
    %c0_101 = arith.constant 0 : index
    %c0_102 = arith.constant 0 : index
    %290 = vector.load %arg2[%289, %c0_101, %c0_102] : memref<16x16x128xf32, #tpu.memory_space<vmem>>, vector<1x16x128xf32>
    %291 = vector.shape_cast %290 : vector<1x16x128xf32> to vector<16x128xf32>
    %292 = vector.shape_cast %291 : vector<16x128xf32> to vector<1x16x128xf32>
    %293 = arith.index_cast %c8_i32 : i32 to index
    %c0_103 = arith.constant 0 : index
    %c0_104 = arith.constant 0 : index
    %294 = vector.load %arg6[%293, %c0_103, %c0_104] : memref<16x16x128xf32, #tpu.memory_space<vmem>>, vector<1x16x128xf32>
    %295 = vector.shape_cast %294 : vector<1x16x128xf32> to vector<16x128xf32>
    %296 = vector.shape_cast %295 : vector<16x128xf32> to vector<1x16x128xf32>
    %297 = arith.index_cast %c8_i32 : i32 to index
    %c0_105 = arith.constant 0 : index
    %c0_106 = arith.constant 0 : index
    %298 = vector.load %arg7[%297, %c0_105, %c0_106] : memref<16x16x128xf32, #tpu.memory_space<vmem>>, vector<1x16x128xf32>
    %299 = vector.shape_cast %298 : vector<1x16x128xf32> to vector<16x128xf32>
    %300 = vector.shape_cast %299 : vector<16x128xf32> to vector<1x16x128xf32>
    %301 = arith.addf %284, %288 : vector<2x1x128xf32>
    %302 = vector.broadcast %292 : vector<1x16x128xf32> to vector<2x16x128xf32>
    %303 = vector.broadcast %301 : vector<2x1x128xf32> to vector<2x16x128xf32>
    %304 = arith.mulf %302, %303 : vector<2x16x128xf32>
    %305 = vector.broadcast %288 : vector<2x1x128xf32> to vector<2x16x128xf32>
    %306 = vector.broadcast %296 : vector<1x16x128xf32> to vector<2x16x128xf32>
    %307 = arith.mulf %305, %306 : vector<2x16x128xf32>
    %308 = arith.subf %304, %307 : vector<2x16x128xf32>
    %309 = arith.addf %275, %308 : vector<2x16x128xf32>
    %310 = vector.broadcast %284 : vector<2x1x128xf32> to vector<2x16x128xf32>
    %311 = vector.broadcast %300 : vector<1x16x128xf32> to vector<2x16x128xf32>
    %312 = arith.mulf %310, %311 : vector<2x16x128xf32>
    %313 = arith.addf %304, %312 : vector<2x16x128xf32>
    %314 = arith.addf %280, %313 : vector<2x16x128xf32>
    %c9_i32 = arith.constant 9 : i32
    %315 = arith.index_cast %c9_i32 : i32 to index
    %c0_107 = arith.constant 0 : index
    %c0_108 = arith.constant 0 : index
    %316 = vector.load %arg0[%315, %c0_107, %c0_108] : memref<16x2x128xf32, #tpu.memory_space<vmem>>, vector<1x2x128xf32>
    %317 = vector.shape_cast %316 : vector<1x2x128xf32> to vector<2x128xf32>
    %318 = vector.shape_cast %317 : vector<2x128xf32> to vector<2x1x128xf32>
    %319 = arith.index_cast %c9_i32 : i32 to index
    %c0_109 = arith.constant 0 : index
    %c0_110 = arith.constant 0 : index
    %320 = vector.load %arg1[%319, %c0_109, %c0_110] : memref<16x2x128xf32, #tpu.memory_space<vmem>>, vector<1x2x128xf32>
    %321 = vector.shape_cast %320 : vector<1x2x128xf32> to vector<2x128xf32>
    %322 = vector.shape_cast %321 : vector<2x128xf32> to vector<2x1x128xf32>
    %323 = arith.index_cast %c9_i32 : i32 to index
    %c0_111 = arith.constant 0 : index
    %c0_112 = arith.constant 0 : index
    %324 = vector.load %arg2[%323, %c0_111, %c0_112] : memref<16x16x128xf32, #tpu.memory_space<vmem>>, vector<1x16x128xf32>
    %325 = vector.shape_cast %324 : vector<1x16x128xf32> to vector<16x128xf32>
    %326 = vector.shape_cast %325 : vector<16x128xf32> to vector<1x16x128xf32>
    %327 = arith.index_cast %c9_i32 : i32 to index
    %c0_113 = arith.constant 0 : index
    %c0_114 = arith.constant 0 : index
    %328 = vector.load %arg6[%327, %c0_113, %c0_114] : memref<16x16x128xf32, #tpu.memory_space<vmem>>, vector<1x16x128xf32>
    %329 = vector.shape_cast %328 : vector<1x16x128xf32> to vector<16x128xf32>
    %330 = vector.shape_cast %329 : vector<16x128xf32> to vector<1x16x128xf32>
    %331 = arith.index_cast %c9_i32 : i32 to index
    %c0_115 = arith.constant 0 : index
    %c0_116 = arith.constant 0 : index
    %332 = vector.load %arg7[%331, %c0_115, %c0_116] : memref<16x16x128xf32, #tpu.memory_space<vmem>>, vector<1x16x128xf32>
    %333 = vector.shape_cast %332 : vector<1x16x128xf32> to vector<16x128xf32>
    %334 = vector.shape_cast %333 : vector<16x128xf32> to vector<1x16x128xf32>
    %335 = arith.addf %318, %322 : vector<2x1x128xf32>
    %336 = vector.broadcast %326 : vector<1x16x128xf32> to vector<2x16x128xf32>
    %337 = vector.broadcast %335 : vector<2x1x128xf32> to vector<2x16x128xf32>
    %338 = arith.mulf %336, %337 : vector<2x16x128xf32>
    %339 = vector.broadcast %322 : vector<2x1x128xf32> to vector<2x16x128xf32>
    %340 = vector.broadcast %330 : vector<1x16x128xf32> to vector<2x16x128xf32>
    %341 = arith.mulf %339, %340 : vector<2x16x128xf32>
    %342 = arith.subf %338, %341 : vector<2x16x128xf32>
    %343 = arith.addf %309, %342 : vector<2x16x128xf32>
    %344 = vector.broadcast %318 : vector<2x1x128xf32> to vector<2x16x128xf32>
    %345 = vector.broadcast %334 : vector<1x16x128xf32> to vector<2x16x128xf32>
    %346 = arith.mulf %344, %345 : vector<2x16x128xf32>
    %347 = arith.addf %338, %346 : vector<2x16x128xf32>
    %348 = arith.addf %314, %347 : vector<2x16x128xf32>
    %c10_i32 = arith.constant 10 : i32
    %349 = arith.index_cast %c10_i32 : i32 to index
    %c0_117 = arith.constant 0 : index
    %c0_118 = arith.constant 0 : index
    %350 = vector.load %arg0[%349, %c0_117, %c0_118] : memref<16x2x128xf32, #tpu.memory_space<vmem>>, vector<1x2x128xf32>
    %351 = vector.shape_cast %350 : vector<1x2x128xf32> to vector<2x128xf32>
    %352 = vector.shape_cast %351 : vector<2x128xf32> to vector<2x1x128xf32>
    %353 = arith.index_cast %c10_i32 : i32 to index
    %c0_119 = arith.constant 0 : index
    %c0_120 = arith.constant 0 : index
    %354 = vector.load %arg1[%353, %c0_119, %c0_120] : memref<16x2x128xf32, #tpu.memory_space<vmem>>, vector<1x2x128xf32>
    %355 = vector.shape_cast %354 : vector<1x2x128xf32> to vector<2x128xf32>
    %356 = vector.shape_cast %355 : vector<2x128xf32> to vector<2x1x128xf32>
    %357 = arith.index_cast %c10_i32 : i32 to index
    %c0_121 = arith.constant 0 : index
    %c0_122 = arith.constant 0 : index
    %358 = vector.load %arg2[%357, %c0_121, %c0_122] : memref<16x16x128xf32, #tpu.memory_space<vmem>>, vector<1x16x128xf32>
    %359 = vector.shape_cast %358 : vector<1x16x128xf32> to vector<16x128xf32>
    %360 = vector.shape_cast %359 : vector<16x128xf32> to vector<1x16x128xf32>
    %361 = arith.index_cast %c10_i32 : i32 to index
    %c0_123 = arith.constant 0 : index
    %c0_124 = arith.constant 0 : index
    %362 = vector.load %arg6[%361, %c0_123, %c0_124] : memref<16x16x128xf32, #tpu.memory_space<vmem>>, vector<1x16x128xf32>
    %363 = vector.shape_cast %362 : vector<1x16x128xf32> to vector<16x128xf32>
    %364 = vector.shape_cast %363 : vector<16x128xf32> to vector<1x16x128xf32>
    %365 = arith.index_cast %c10_i32 : i32 to index
    %c0_125 = arith.constant 0 : index
    %c0_126 = arith.constant 0 : index
    %366 = vector.load %arg7[%365, %c0_125, %c0_126] : memref<16x16x128xf32, #tpu.memory_space<vmem>>, vector<1x16x128xf32>
    %367 = vector.shape_cast %366 : vector<1x16x128xf32> to vector<16x128xf32>
    %368 = vector.shape_cast %367 : vector<16x128xf32> to vector<1x16x128xf32>
    %369 = arith.addf %352, %356 : vector<2x1x128xf32>
    %370 = vector.broadcast %360 : vector<1x16x128xf32> to vector<2x16x128xf32>
    %371 = vector.broadcast %369 : vector<2x1x128xf32> to vector<2x16x128xf32>
    %372 = arith.mulf %370, %371 : vector<2x16x128xf32>
    %373 = vector.broadcast %356 : vector<2x1x128xf32> to vector<2x16x128xf32>
    %374 = vector.broadcast %364 : vector<1x16x128xf32> to vector<2x16x128xf32>
    %375 = arith.mulf %373, %374 : vector<2x16x128xf32>
    %376 = arith.subf %372, %375 : vector<2x16x128xf32>
    %377 = arith.addf %343, %376 : vector<2x16x128xf32>
    %378 = vector.broadcast %352 : vector<2x1x128xf32> to vector<2x16x128xf32>
    %379 = vector.broadcast %368 : vector<1x16x128xf32> to vector<2x16x128xf32>
    %380 = arith.mulf %378, %379 : vector<2x16x128xf32>
    %381 = arith.addf %372, %380 : vector<2x16x128xf32>
    %382 = arith.addf %348, %381 : vector<2x16x128xf32>
    %c11_i32 = arith.constant 11 : i32
    %383 = arith.index_cast %c11_i32 : i32 to index
    %c0_127 = arith.constant 0 : index
    %c0_128 = arith.constant 0 : index
    %384 = vector.load %arg0[%383, %c0_127, %c0_128] : memref<16x2x128xf32, #tpu.memory_space<vmem>>, vector<1x2x128xf32>
    %385 = vector.shape_cast %384 : vector<1x2x128xf32> to vector<2x128xf32>
    %386 = vector.shape_cast %385 : vector<2x128xf32> to vector<2x1x128xf32>
    %387 = arith.index_cast %c11_i32 : i32 to index
    %c0_129 = arith.constant 0 : index
    %c0_130 = arith.constant 0 : index
    %388 = vector.load %arg1[%387, %c0_129, %c0_130] : memref<16x2x128xf32, #tpu.memory_space<vmem>>, vector<1x2x128xf32>
    %389 = vector.shape_cast %388 : vector<1x2x128xf32> to vector<2x128xf32>
    %390 = vector.shape_cast %389 : vector<2x128xf32> to vector<2x1x128xf32>
    %391 = arith.index_cast %c11_i32 : i32 to index
    %c0_131 = arith.constant 0 : index
    %c0_132 = arith.constant 0 : index
    %392 = vector.load %arg2[%391, %c0_131, %c0_132] : memref<16x16x128xf32, #tpu.memory_space<vmem>>, vector<1x16x128xf32>
    %393 = vector.shape_cast %392 : vector<1x16x128xf32> to vector<16x128xf32>
    %394 = vector.shape_cast %393 : vector<16x128xf32> to vector<1x16x128xf32>
    %395 = arith.index_cast %c11_i32 : i32 to index
    %c0_133 = arith.constant 0 : index
    %c0_134 = arith.constant 0 : index
    %396 = vector.load %arg6[%395, %c0_133, %c0_134] : memref<16x16x128xf32, #tpu.memory_space<vmem>>, vector<1x16x128xf32>
    %397 = vector.shape_cast %396 : vector<1x16x128xf32> to vector<16x128xf32>
    %398 = vector.shape_cast %397 : vector<16x128xf32> to vector<1x16x128xf32>
    %399 = arith.index_cast %c11_i32 : i32 to index
    %c0_135 = arith.constant 0 : index
    %c0_136 = arith.constant 0 : index
    %400 = vector.load %arg7[%399, %c0_135, %c0_136] : memref<16x16x128xf32, #tpu.memory_space<vmem>>, vector<1x16x128xf32>
    %401 = vector.shape_cast %400 : vector<1x16x128xf32> to vector<16x128xf32>
    %402 = vector.shape_cast %401 : vector<16x128xf32> to vector<1x16x128xf32>
    %403 = arith.addf %386, %390 : vector<2x1x128xf32>
    %404 = vector.broadcast %394 : vector<1x16x128xf32> to vector<2x16x128xf32>
    %405 = vector.broadcast %403 : vector<2x1x128xf32> to vector<2x16x128xf32>
    %406 = arith.mulf %404, %405 : vector<2x16x128xf32>
    %407 = vector.broadcast %390 : vector<2x1x128xf32> to vector<2x16x128xf32>
    %408 = vector.broadcast %398 : vector<1x16x128xf32> to vector<2x16x128xf32>
    %409 = arith.mulf %407, %408 : vector<2x16x128xf32>
    %410 = arith.subf %406, %409 : vector<2x16x128xf32>
    %411 = arith.addf %377, %410 : vector<2x16x128xf32>
    %412 = vector.broadcast %386 : vector<2x1x128xf32> to vector<2x16x128xf32>
    %413 = vector.broadcast %402 : vector<1x16x128xf32> to vector<2x16x128xf32>
    %414 = arith.mulf %412, %413 : vector<2x16x128xf32>
    %415 = arith.addf %406, %414 : vector<2x16x128xf32>
    %416 = arith.addf %382, %415 : vector<2x16x128xf32>
    %c12_i32 = arith.constant 12 : i32
    %417 = arith.index_cast %c12_i32 : i32 to index
    %c0_137 = arith.constant 0 : index
    %c0_138 = arith.constant 0 : index
    %418 = vector.load %arg0[%417, %c0_137, %c0_138] : memref<16x2x128xf32, #tpu.memory_space<vmem>>, vector<1x2x128xf32>
    %419 = vector.shape_cast %418 : vector<1x2x128xf32> to vector<2x128xf32>
    %420 = vector.shape_cast %419 : vector<2x128xf32> to vector<2x1x128xf32>
    %421 = arith.index_cast %c12_i32 : i32 to index
    %c0_139 = arith.constant 0 : index
    %c0_140 = arith.constant 0 : index
    %422 = vector.load %arg1[%421, %c0_139, %c0_140] : memref<16x2x128xf32, #tpu.memory_space<vmem>>, vector<1x2x128xf32>
    %423 = vector.shape_cast %422 : vector<1x2x128xf32> to vector<2x128xf32>
    %424 = vector.shape_cast %423 : vector<2x128xf32> to vector<2x1x128xf32>
    %425 = arith.index_cast %c12_i32 : i32 to index
    %c0_141 = arith.constant 0 : index
    %c0_142 = arith.constant 0 : index
    %426 = vector.load %arg2[%425, %c0_141, %c0_142] : memref<16x16x128xf32, #tpu.memory_space<vmem>>, vector<1x16x128xf32>
    %427 = vector.shape_cast %426 : vector<1x16x128xf32> to vector<16x128xf32>
    %428 = vector.shape_cast %427 : vector<16x128xf32> to vector<1x16x128xf32>
    %429 = arith.index_cast %c12_i32 : i32 to index
    %c0_143 = arith.constant 0 : index
    %c0_144 = arith.constant 0 : index
    %430 = vector.load %arg6[%429, %c0_143, %c0_144] : memref<16x16x128xf32, #tpu.memory_space<vmem>>, vector<1x16x128xf32>
    %431 = vector.shape_cast %430 : vector<1x16x128xf32> to vector<16x128xf32>
    %432 = vector.shape_cast %431 : vector<16x128xf32> to vector<1x16x128xf32>
    %433 = arith.index_cast %c12_i32 : i32 to index
    %c0_145 = arith.constant 0 : index
    %c0_146 = arith.constant 0 : index
    %434 = vector.load %arg7[%433, %c0_145, %c0_146] : memref<16x16x128xf32, #tpu.memory_space<vmem>>, vector<1x16x128xf32>
    %435 = vector.shape_cast %434 : vector<1x16x128xf32> to vector<16x128xf32>
    %436 = vector.shape_cast %435 : vector<16x128xf32> to vector<1x16x128xf32>
    %437 = arith.addf %420, %424 : vector<2x1x128xf32>
    %438 = vector.broadcast %428 : vector<1x16x128xf32> to vector<2x16x128xf32>
    %439 = vector.broadcast %437 : vector<2x1x128xf32> to vector<2x16x128xf32>
    %440 = arith.mulf %438, %439 : vector<2x16x128xf32>
    %441 = vector.broadcast %424 : vector<2x1x128xf32> to vector<2x16x128xf32>
    %442 = vector.broadcast %432 : vector<1x16x128xf32> to vector<2x16x128xf32>
    %443 = arith.mulf %441, %442 : vector<2x16x128xf32>
    %444 = arith.subf %440, %443 : vector<2x16x128xf32>
    %445 = arith.addf %411, %444 : vector<2x16x128xf32>
    %446 = vector.broadcast %420 : vector<2x1x128xf32> to vector<2x16x128xf32>
    %447 = vector.broadcast %436 : vector<1x16x128xf32> to vector<2x16x128xf32>
    %448 = arith.mulf %446, %447 : vector<2x16x128xf32>
    %449 = arith.addf %440, %448 : vector<2x16x128xf32>
    %450 = arith.addf %416, %449 : vector<2x16x128xf32>
    %c13_i32 = arith.constant 13 : i32
    %451 = arith.index_cast %c13_i32 : i32 to index
    %c0_147 = arith.constant 0 : index
    %c0_148 = arith.constant 0 : index
    %452 = vector.load %arg0[%451, %c0_147, %c0_148] : memref<16x2x128xf32, #tpu.memory_space<vmem>>, vector<1x2x128xf32>
    %453 = vector.shape_cast %452 : vector<1x2x128xf32> to vector<2x128xf32>
    %454 = vector.shape_cast %453 : vector<2x128xf32> to vector<2x1x128xf32>
    %455 = arith.index_cast %c13_i32 : i32 to index
    %c0_149 = arith.constant 0 : index
    %c0_150 = arith.constant 0 : index
    %456 = vector.load %arg1[%455, %c0_149, %c0_150] : memref<16x2x128xf32, #tpu.memory_space<vmem>>, vector<1x2x128xf32>
    %457 = vector.shape_cast %456 : vector<1x2x128xf32> to vector<2x128xf32>
    %458 = vector.shape_cast %457 : vector<2x128xf32> to vector<2x1x128xf32>
    %459 = arith.index_cast %c13_i32 : i32 to index
    %c0_151 = arith.constant 0 : index
    %c0_152 = arith.constant 0 : index
    %460 = vector.load %arg2[%459, %c0_151, %c0_152] : memref<16x16x128xf32, #tpu.memory_space<vmem>>, vector<1x16x128xf32>
    %461 = vector.shape_cast %460 : vector<1x16x128xf32> to vector<16x128xf32>
    %462 = vector.shape_cast %461 : vector<16x128xf32> to vector<1x16x128xf32>
    %463 = arith.index_cast %c13_i32 : i32 to index
    %c0_153 = arith.constant 0 : index
    %c0_154 = arith.constant 0 : index
    %464 = vector.load %arg6[%463, %c0_153, %c0_154] : memref<16x16x128xf32, #tpu.memory_space<vmem>>, vector<1x16x128xf32>
    %465 = vector.shape_cast %464 : vector<1x16x128xf32> to vector<16x128xf32>
    %466 = vector.shape_cast %465 : vector<16x128xf32> to vector<1x16x128xf32>
    %467 = arith.index_cast %c13_i32 : i32 to index
    %c0_155 = arith.constant 0 : index
    %c0_156 = arith.constant 0 : index
    %468 = vector.load %arg7[%467, %c0_155, %c0_156] : memref<16x16x128xf32, #tpu.memory_space<vmem>>, vector<1x16x128xf32>
    %469 = vector.shape_cast %468 : vector<1x16x128xf32> to vector<16x128xf32>
    %470 = vector.shape_cast %469 : vector<16x128xf32> to vector<1x16x128xf32>
    %471 = arith.addf %454, %458 : vector<2x1x128xf32>
    %472 = vector.broadcast %462 : vector<1x16x128xf32> to vector<2x16x128xf32>
    %473 = vector.broadcast %471 : vector<2x1x128xf32> to vector<2x16x128xf32>
    %474 = arith.mulf %472, %473 : vector<2x16x128xf32>
    %475 = vector.broadcast %458 : vector<2x1x128xf32> to vector<2x16x128xf32>
    %476 = vector.broadcast %466 : vector<1x16x128xf32> to vector<2x16x128xf32>
    %477 = arith.mulf %475, %476 : vector<2x16x128xf32>
    %478 = arith.subf %474, %477 : vector<2x16x128xf32>
    %479 = arith.addf %445, %478 : vector<2x16x128xf32>
    %480 = vector.broadcast %454 : vector<2x1x128xf32> to vector<2x16x128xf32>
    %481 = vector.broadcast %470 : vector<1x16x128xf32> to vector<2x16x128xf32>
    %482 = arith.mulf %480, %481 : vector<2x16x128xf32>
    %483 = arith.addf %474, %482 : vector<2x16x128xf32>
    %484 = arith.addf %450, %483 : vector<2x16x128xf32>
    %c14_i32 = arith.constant 14 : i32
    %485 = arith.index_cast %c14_i32 : i32 to index
    %c0_157 = arith.constant 0 : index
    %c0_158 = arith.constant 0 : index
    %486 = vector.load %arg0[%485, %c0_157, %c0_158] : memref<16x2x128xf32, #tpu.memory_space<vmem>>, vector<1x2x128xf32>
    %487 = vector.shape_cast %486 : vector<1x2x128xf32> to vector<2x128xf32>
    %488 = vector.shape_cast %487 : vector<2x128xf32> to vector<2x1x128xf32>
    %489 = arith.index_cast %c14_i32 : i32 to index
    %c0_159 = arith.constant 0 : index
    %c0_160 = arith.constant 0 : index
    %490 = vector.load %arg1[%489, %c0_159, %c0_160] : memref<16x2x128xf32, #tpu.memory_space<vmem>>, vector<1x2x128xf32>
    %491 = vector.shape_cast %490 : vector<1x2x128xf32> to vector<2x128xf32>
    %492 = vector.shape_cast %491 : vector<2x128xf32> to vector<2x1x128xf32>
    %493 = arith.index_cast %c14_i32 : i32 to index
    %c0_161 = arith.constant 0 : index
    %c0_162 = arith.constant 0 : index
    %494 = vector.load %arg2[%493, %c0_161, %c0_162] : memref<16x16x128xf32, #tpu.memory_space<vmem>>, vector<1x16x128xf32>
    %495 = vector.shape_cast %494 : vector<1x16x128xf32> to vector<16x128xf32>
    %496 = vector.shape_cast %495 : vector<16x128xf32> to vector<1x16x128xf32>
    %497 = arith.index_cast %c14_i32 : i32 to index
    %c0_163 = arith.constant 0 : index
    %c0_164 = arith.constant 0 : index
    %498 = vector.load %arg6[%497, %c0_163, %c0_164] : memref<16x16x128xf32, #tpu.memory_space<vmem>>, vector<1x16x128xf32>
    %499 = vector.shape_cast %498 : vector<1x16x128xf32> to vector<16x128xf32>
    %500 = vector.shape_cast %499 : vector<16x128xf32> to vector<1x16x128xf32>
    %501 = arith.index_cast %c14_i32 : i32 to index
    %c0_165 = arith.constant 0 : index
    %c0_166 = arith.constant 0 : index
    %502 = vector.load %arg7[%501, %c0_165, %c0_166] : memref<16x16x128xf32, #tpu.memory_space<vmem>>, vector<1x16x128xf32>
    %503 = vector.shape_cast %502 : vector<1x16x128xf32> to vector<16x128xf32>
    %504 = vector.shape_cast %503 : vector<16x128xf32> to vector<1x16x128xf32>
    %505 = arith.addf %488, %492 : vector<2x1x128xf32>
    %506 = vector.broadcast %496 : vector<1x16x128xf32> to vector<2x16x128xf32>
    %507 = vector.broadcast %505 : vector<2x1x128xf32> to vector<2x16x128xf32>
    %508 = arith.mulf %506, %507 : vector<2x16x128xf32>
    %509 = vector.broadcast %492 : vector<2x1x128xf32> to vector<2x16x128xf32>
    %510 = vector.broadcast %500 : vector<1x16x128xf32> to vector<2x16x128xf32>
    %511 = arith.mulf %509, %510 : vector<2x16x128xf32>
    %512 = arith.subf %508, %511 : vector<2x16x128xf32>
    %513 = arith.addf %479, %512 : vector<2x16x128xf32>
    %514 = vector.broadcast %488 : vector<2x1x128xf32> to vector<2x16x128xf32>
    %515 = vector.broadcast %504 : vector<1x16x128xf32> to vector<2x16x128xf32>
    %516 = arith.mulf %514, %515 : vector<2x16x128xf32>
    %517 = arith.addf %508, %516 : vector<2x16x128xf32>
    %518 = arith.addf %484, %517 : vector<2x16x128xf32>
    %c15_i32 = arith.constant 15 : i32
    %519 = arith.index_cast %c15_i32 : i32 to index
    %c0_167 = arith.constant 0 : index
    %c0_168 = arith.constant 0 : index
    %520 = vector.load %arg0[%519, %c0_167, %c0_168] : memref<16x2x128xf32, #tpu.memory_space<vmem>>, vector<1x2x128xf32>
    %521 = vector.shape_cast %520 : vector<1x2x128xf32> to vector<2x128xf32>
    %522 = vector.shape_cast %521 : vector<2x128xf32> to vector<2x1x128xf32>
    %523 = arith.index_cast %c15_i32 : i32 to index
    %c0_169 = arith.constant 0 : index
    %c0_170 = arith.constant 0 : index
    %524 = vector.load %arg1[%523, %c0_169, %c0_170] : memref<16x2x128xf32, #tpu.memory_space<vmem>>, vector<1x2x128xf32>
    %525 = vector.shape_cast %524 : vector<1x2x128xf32> to vector<2x128xf32>
    %526 = vector.shape_cast %525 : vector<2x128xf32> to vector<2x1x128xf32>
    %527 = arith.index_cast %c15_i32 : i32 to index
    %c0_171 = arith.constant 0 : index
    %c0_172 = arith.constant 0 : index
    %528 = vector.load %arg2[%527, %c0_171, %c0_172] : memref<16x16x128xf32, #tpu.memory_space<vmem>>, vector<1x16x128xf32>
    %529 = vector.shape_cast %528 : vector<1x16x128xf32> to vector<16x128xf32>
    %530 = vector.shape_cast %529 : vector<16x128xf32> to vector<1x16x128xf32>
    %531 = arith.index_cast %c15_i32 : i32 to index
    %c0_173 = arith.constant 0 : index
    %c0_174 = arith.constant 0 : index
    %532 = vector.load %arg6[%531, %c0_173, %c0_174] : memref<16x16x128xf32, #tpu.memory_space<vmem>>, vector<1x16x128xf32>
    %533 = vector.shape_cast %532 : vector<1x16x128xf32> to vector<16x128xf32>
    %534 = vector.shape_cast %533 : vector<16x128xf32> to vector<1x16x128xf32>
    %535 = arith.index_cast %c15_i32 : i32 to index
    %c0_175 = arith.constant 0 : index
    %c0_176 = arith.constant 0 : index
    %536 = vector.load %arg7[%535, %c0_175, %c0_176] : memref<16x16x128xf32, #tpu.memory_space<vmem>>, vector<1x16x128xf32>
    %537 = vector.shape_cast %536 : vector<1x16x128xf32> to vector<16x128xf32>
    %538 = vector.shape_cast %537 : vector<16x128xf32> to vector<1x16x128xf32>
    %539 = arith.addf %522, %526 : vector<2x1x128xf32>
    %540 = vector.broadcast %530 : vector<1x16x128xf32> to vector<2x16x128xf32>
    %541 = vector.broadcast %539 : vector<2x1x128xf32> to vector<2x16x128xf32>
    %542 = arith.mulf %540, %541 : vector<2x16x128xf32>
    %543 = vector.broadcast %526 : vector<2x1x128xf32> to vector<2x16x128xf32>
    %544 = vector.broadcast %534 : vector<1x16x128xf32> to vector<2x16x128xf32>
    %545 = arith.mulf %543, %544 : vector<2x16x128xf32>
    %546 = arith.subf %542, %545 : vector<2x16x128xf32>
    %547 = arith.addf %513, %546 : vector<2x16x128xf32>
    %548 = vector.broadcast %522 : vector<2x1x128xf32> to vector<2x16x128xf32>
    %549 = vector.broadcast %538 : vector<1x16x128xf32> to vector<2x16x128xf32>
    %550 = arith.mulf %548, %549 : vector<2x16x128xf32>
    %551 = arith.addf %542, %550 : vector<2x16x128xf32>
    %552 = arith.addf %518, %551 : vector<2x16x128xf32>
    %c16_i32 = arith.constant 16 : i32
    %c0_177 = arith.constant 0 : index
    %c0_178 = arith.constant 0 : index
    %c0_179 = arith.constant 0 : index
    %553 = vector.load %arg4[%c0_177, %c0_178, %c0_179] : memref<2x16x128xf32, #tpu.memory_space<vmem>>, vector<2x16x128xf32>
    tpu.vector_store %arg4[%c0_177, %c0_178, %c0_179], %547 {strides = array<i32>} : memref<2x16x128xf32, #tpu.memory_space<vmem>>, vector<2x16x128xf32>,
    %c0_180 = arith.constant 0 : index
    %c0_181 = arith.constant 0 : index
    %c0_182 = arith.constant 0 : index
    %554 = vector.load %arg5[%c0_180, %c0_181, %c0_182] : memref<2x16x128xf32, #tpu.memory_space<vmem>>, vector<2x16x128xf32>
    tpu.vector_store %arg5[%c0_180, %c0_181, %c0_182], %552 {strides = array<i32>} : memref<2x16x128xf32, #tpu.memory_space<vmem>>, vector<2x16x128xf32>,
    return
  }
}

module attributes {stable_mosaic.version = 11 : i64} {
  func.func @_pointwise_gelu_kernel(%arg0: i32, %arg1: memref<16x16xf32, #tpu.memory_space<vmem>>, %arg2: memref<16x1xf32, #tpu.memory_space<vmem>>, %arg3: memref<16x768xf32, #tpu.memory_space<vmem>>, %arg4: memref<16x768xf32, #tpu.memory_space<vmem>>, %arg5: memref<16x768xf32, #tpu.memory_space<vmem>>) attributes {dimension_semantics = [#tpu.dimension_semantics<parallel>], iteration_bounds = array<i64: 2>, scalar_prefetch = 0 : i64, scratch_operands = 0 : i64, tpu.core_type = #tpu.core_type<tc>, window_params = [{pipeline_mode = #tpu.pipeline_mode<synchronous>, transform_indices = @transform_0, window_bounds = array<i64: 16, 16>}, {pipeline_mode = #tpu.pipeline_mode<synchronous>, transform_indices = @transform_1, window_bounds = array<i64: 16, 1>}, {transform_indices = @transform_2, window_bounds = array<i64: 16, 768>}, {transform_indices = @transform_3, window_bounds = array<i64: 16, 768>}, {transform_indices = @transform_4, window_bounds = array<i64: 16, 768>}]} {
    %c0 = arith.constant 0 : index
    %c0_0 = arith.constant 0 : index
    %0 = vector.load %arg1[%c0, %c0_0] : memref<16x16xf32, #tpu.memory_space<vmem>>, vector<16x16xf32>
    %c0_1 = arith.constant 0 : index
    %c0_2 = arith.constant 0 : index
    %1 = vector.load %arg3[%c0_1, %c0_2] : memref<16x768xf32, #tpu.memory_space<vmem>>, vector<16x768xf32>
    %cst = arith.constant dense<0.000000e+00> : vector<16x768xf32>
    %2 = tpu.matmul %0, %1, %cst {dimension_numbers = #tpu.dot_dimension_numbers<[1], [0], [0], [1], [0, 0, 1, 1], [], []>, precision = #tpu.contract_precision<fp32>} : vector<16x16xf32>, vector<16x768xf32>, vector<16x768xf32> -> vector<16x768xf32>
    %c0_3 = arith.constant 0 : index
    %c0_4 = arith.constant 0 : index
    %3 = vector.load %arg4[%c0_3, %c0_4] : memref<16x768xf32, #tpu.memory_space<vmem>>, vector<16x768xf32>
    %4 = arith.addf %2, %3 : vector<16x768xf32>
    %c0_5 = arith.constant 0 : index
    %c0_6 = arith.constant 0 : index
    %5 = vector.load %arg2[%c0_5, %c0_6] : memref<16x1xf32, #tpu.memory_space<vmem>>, vector<16x1xf32>
    %6 = vector.broadcast %5 : vector<16x1xf32> to vector<16x768xf32>
    %7 = arith.addf %4, %6 : vector<16x768xf32>
    %cst_7 = arith.constant 5.000000e-01 : f32
    %8 = vector.broadcast %cst_7 : f32 to vector<16x768xf32>
    %9 = arith.mulf %8, %7 : vector<16x768xf32>
    %cst_8 = arith.constant 0.707106769 : f32
    %10 = vector.broadcast %cst_8 : f32 to vector<16x768xf32>
    %11 = arith.mulf %7, %10 : vector<16x768xf32>
    %12 = math.absf %11 : vector<16x768xf32>
    %cst_9 = arith.constant 0.327591091 : f32
    %13 = vector.broadcast %cst_9 : f32 to vector<16x768xf32>
    %14 = arith.mulf %13, %12 : vector<16x768xf32>
    %cst_10 = arith.constant 1.000000e+00 : f32
    %15 = vector.broadcast %cst_10 : f32 to vector<16x768xf32>
    %16 = arith.addf %15, %14 : vector<16x768xf32>
    %cst_11 = arith.constant 1.000000e+00 : f32
    %17 = vector.broadcast %cst_11 : f32 to vector<16x768xf32>
    %18 = arith.divf %17, %16 : vector<16x768xf32>
    %cst_12 = arith.constant 1.06140542 : f32
    %19 = vector.broadcast %cst_12 : f32 to vector<16x768xf32>
    %20 = arith.mulf %19, %18 : vector<16x768xf32>
    %cst_13 = arith.constant -1.45315206 : f32
    %21 = vector.broadcast %cst_13 : f32 to vector<16x768xf32>
    %22 = arith.addf %20, %21 : vector<16x768xf32>
    %23 = arith.mulf %22, %18 : vector<16x768xf32>
    %cst_14 = arith.constant 1.42141378 : f32
    %24 = vector.broadcast %cst_14 : f32 to vector<16x768xf32>
    %25 = arith.addf %23, %24 : vector<16x768xf32>
    %26 = arith.mulf %25, %18 : vector<16x768xf32>
    %cst_15 = arith.constant -0.284496725 : f32
    %27 = vector.broadcast %cst_15 : f32 to vector<16x768xf32>
    %28 = arith.addf %26, %27 : vector<16x768xf32>
    %29 = arith.mulf %28, %18 : vector<16x768xf32>
    %cst_16 = arith.constant 0.254829586 : f32
    %30 = vector.broadcast %cst_16 : f32 to vector<16x768xf32>
    %31 = arith.addf %29, %30 : vector<16x768xf32>
    %32 = arith.mulf %31, %18 : vector<16x768xf32>
    %cst_17 = arith.constant 0.000000e+00 : f32
    %33 = vector.broadcast %cst_17 : f32 to vector<16x768xf32>
    %34 = arith.subf %33, %12 : vector<16x768xf32>
    %35 = arith.mulf %34, %12 : vector<16x768xf32>
    %36 = math.exp %35 : vector<16x768xf32>
    %37 = arith.mulf %32, %36 : vector<16x768xf32>
    %cst_18 = arith.constant 1.000000e+00 : f32
    %38 = vector.broadcast %cst_18 : f32 to vector<16x768xf32>
    %39 = arith.subf %38, %37 : vector<16x768xf32>
    %cst_19 = arith.constant 0.000000e+00 : f32
    %40 = vector.broadcast %cst_19 : f32 to vector<16x768xf32>
    %41 = arith.cmpf olt, %11, %40 : vector<16x768xf32>
    %cst_20 = arith.constant 0.000000e+00 : f32
    %42 = vector.broadcast %cst_20 : f32 to vector<16x768xf32>
    %43 = arith.subf %42, %39 : vector<16x768xf32>
    %44 = arith.select %41, %43, %39 : vector<16x768xi1>, vector<16x768xf32>
    %cst_21 = arith.constant 1.000000e+00 : f32
    %45 = vector.broadcast %cst_21 : f32 to vector<16x768xf32>
    %46 = arith.addf %45, %44 : vector<16x768xf32>
    %47 = arith.mulf %9, %46 : vector<16x768xf32>
    %c0_22 = arith.constant 0 : index
    %c0_23 = arith.constant 0 : index
    %48 = vector.load %arg5[%c0_22, %c0_23] : memref<16x768xf32, #tpu.memory_space<vmem>>, vector<16x768xf32>
    tpu.vector_store %arg5[%c0_22, %c0_23], %47 {strides = array<i32>} : memref<16x768xf32, #tpu.memory_space<vmem>>, vector<16x768xf32>,
    return
  }
  func.func @transform_0(%arg0: i32) -> (i32, i32) {
    %c0_i32 = arith.constant 0 : i32
    %c0_i32_0 = arith.constant 0 : i32
    %c0_i32_1 = arith.constant 0 : i32
    return %c0_i32, %c0_i32_0 : i32, i32
  }
  func.func @transform_1(%arg0: i32) -> (i32, i32) {
    %c0_i32 = arith.constant 0 : i32
    %c0_i32_0 = arith.constant 0 : i32
    %c0_i32_1 = arith.constant 0 : i32
    return %c0_i32, %c0_i32_0 : i32, i32
  }
  func.func @transform_2(%arg0: i32) -> (i32, i32) {
    %c0_i32 = arith.constant 0 : i32
    %c0_i32_0 = arith.constant 0 : i32
    return %c0_i32, %arg0 : i32, i32
  }
  func.func @transform_3(%arg0: i32) -> (i32, i32) {
    %c0_i32 = arith.constant 0 : i32
    %c0_i32_0 = arith.constant 0 : i32
    return %c0_i32, %arg0 : i32, i32
  }
  func.func @transform_4(%arg0: i32) -> (i32, i32) {
    %c0_i32 = arith.constant 0 : i32
    %c0_i32_0 = arith.constant 0 : i32
    return %c0_i32, %arg0 : i32, i32
  }
}

</mosaic_0001>

<llo_original>
// kernel: custom-call
$region0: #{custom-call}
  %s0 = inlined_call_operand.hbm [shape: c64[16,16,3,4,4], index: 0, kind: input, shape index: {}]
  %s1 = inlined_call_operand.vmem [shape: f32[16,16,3,4,4], index: 1, kind: output, shape index: {}]
  $region1: #{custom-call} parent=0
    #allocation0 [shape = 's32[1]{0}', space=sflag, size = 0x4, scoped, tag = 'scoped memory for custom-call']
    %2 = vsyncpa [#allocation0], 0
    %s3 = sshll.u32 %s1, 4
    %s4 = int_to_ptr.vmem [resolvable:$true] %s3
    %6 = dma.hbm_to_vmem [thread:$0]  %s0, 12288, %s4, [#allocation0]
    %7 = dma.done [#allocation0], 12288
    %8 = vsyncpa [#allocation0], 1

// kernel: custom-call.1
$region0: #{custom-call.1}
  %s0 = inlined_call_operand.hbm [shape: c64[16,16,3,4,4], index: 0, kind: input, shape index: {}]
  %s1 = inlined_call_operand.vmem [shape: f32[16,16,3,4,4], index: 1, kind: output, shape index: {}]
  %s2 = scalar_lea.hbm %s0, 12288
  $region1: #{custom-call.1} parent=0
    #allocation0 [shape = 's32[1]{0}', space=sflag, size = 0x4, scoped, tag = 'scoped memory for custom-call.1']
    %3 = vsyncpa [#allocation0], 0
    %s4 = sshll.u32 %s1, 4
    %s5 = int_to_ptr.vmem [resolvable:$true] %s4
    %7 = dma.hbm_to_vmem [thread:$0]  %s2, 12288, %s5, [#allocation0]
    %8 = dma.done [#allocation0], 12288
    %9 = vsyncpa [#allocation0], 1

// kernel: fno2d_forward.2
$region0: #{fno2d_forward.2}
  #allocation0 [shape = 'u32[]', space=smem, size = 0x4, offset = 0x4, fixed_abs, tag = 'smem constant byte address 0x4 - core index']
  #allocation1 [shape = 'u32[144,128]{1,0:T(1,128)}', space=vmem, size = 0x12000, scoped, tag = 'internal scratch']
  #allocation2 [shape = 'f32[16,16,128]{2,1,0:T(8,128)}', space=vmem, size = 0x20000, scoped, tag = 'scratch operand']
  #allocation3 [shape = 'f32[16,16,128]{2,1,0:T(8,128)}', space=vmem, size = 0x20000, scoped, tag = 'scratch operand']
  %s0 = inlined_call_operand.vmem [shape: f32[16,2,128], index: 0, kind: input, shape index: {}]
  %s1 = inlined_call_operand.vmem [shape: f32[16,2,128], index: 1, kind: input, shape index: {}]
  %s2 = inlined_call_operand.vmem [shape: f32[16,16,128], index: 2, kind: input, shape index: {}]
  %s3 = inlined_call_operand.vmem [shape: f32[16,16,128], index: 3, kind: input, shape index: {}]
  %s4 = inlined_call_operand.vmem [shape: f32[2,16,128], index: 4, kind: output, shape index: {0}]
  %s5 = inlined_call_operand.vmem [shape: f32[2,16,128], index: 5, kind: output, shape index: {1}]
  %6 = xla_tuple %s4, %s5
  %s7 = sld [smem:[#allocation0]]
  $region34: #{fno2d_forward.2} parent=0
    _
  %s9 = ssub.s32 1, %s7
  %s10 = scalar_select 0, %s9, %s7
  // Predicated region
  $region2: #{fno2d_forward.2} parent=0 // pred_check
    _
  $region3: #{fno2d_forward.2} parent=0 // pred_check_branch
    %12 = sbr.rel (0) target = $region5
  $region4: #{fno2d_forward.2} parent=0 // pred_region
    _
  $region5: #{fno2d_forward.2} parent=0 // pred_fallthru
    _
  // Predicated region
  $region6: #{fno2d_forward.2} parent=0 // pred_check
    _
  $region7: #{fno2d_forward.2} parent=0 // pred_check_branch
    %14 = sbr.rel (0) target = $region9
  $region8: #{fno2d_forward.2} parent=0 // pred_region
    _
  $region9: #{fno2d_forward.2} parent=0 // pred_fallthru
    _
  // Predicated region
  $region10: #{fno2d_forward.2} parent=0 // pred_check
    _
  $region11: #{fno2d_forward.2} parent=0 // pred_check_branch
    %16 = sbr.rel (0) target = $region13
  $region12: #{fno2d_forward.2} parent=0 // pred_region
    _
  $region13: #{fno2d_forward.2} parent=0 // pred_fallthru
    _
  // Predicated region
  $region14: #{fno2d_forward.2} parent=0 // pred_check
    _
  $region15: #{fno2d_forward.2} parent=0 // pred_check_branch
    %18 = sbr.rel (0) target = $region17
  $region16: #{fno2d_forward.2} parent=0 // pred_region
    _
  $region17: #{fno2d_forward.2} parent=0 // pred_fallthru
    _
  %v19 = vld [vmem:[%s2] sm:$0xff]
  %v20 = vld [vmem:[%s2 + $0x8] sm:$0xff]
  %v21 = vld [vmem:[%s2 + $0x10] sm:$0xff]
  %v22 = vld [vmem:[%s2 + $0x18] sm:$0xff]
  %v23 = vld [vmem:[%s2 + $0x20] sm:$0xff]
  %v24 = vld [vmem:[%s2 + $0x28] sm:$0xff]
  %v25 = vld [vmem:[%s2 + $0x30] sm:$0xff]
  %v26 = vld [vmem:[%s2 + $0x38] sm:$0xff]
  %v27 = vld [vmem:[%s2 + $0x40] sm:$0xff]
  %v28 = vld [vmem:[%s2 + $0x48] sm:$0xff]
  %v29 = vld [vmem:[%s2 + $0x50] sm:$0xff]
  %v30 = vld [vmem:[%s2 + $0x58] sm:$0xff]
  %v31 = vld [vmem:[%s2 + $0x60] sm:$0xff]
  %v32 = vld [vmem:[%s2 + $0x68] sm:$0xff]
  %v33 = vld [vmem:[%s2 + $0x70] sm:$0xff]
  %v34 = vld [vmem:[%s2 + $0x78] sm:$0xff]
  %v35 = vld [vmem:[%s2 + $0x80] sm:$0xff]
  %v36 = vld [vmem:[%s2 + $0x88] sm:$0xff]
  %v37 = vld [vmem:[%s2 + $0x90] sm:$0xff]
  %v38 = vld [vmem:[%s2 + $0x98] sm:$0xff]
  %v39 = vld [vmem:[%s2 + $0xa0] sm:$0xff]
  %v40 = vld [vmem:[%s2 + $0xa8] sm:$0xff]
  %v41 = vld [vmem:[%s2 + $0xb0] sm:$0xff]
  %v42 = vld [vmem:[%s2 + $0xb8] sm:$0xff]
  %v43 = vld [vmem:[%s2 + $0xc0] sm:$0xff]
  %v44 = vld [vmem:[%s2 + $0xc8] sm:$0xff]
  %v45 = vld [vmem:[%s2 + $0xd0] sm:$0xff]
  %v46 = vld [vmem:[%s2 + $0xd8] sm:$0xff]
  %v47 = vld [vmem:[%s2 + $0xe0] sm:$0xff]
  %v48 = vld [vmem:[%s2 + $0xe8] sm:$0xff]
  %v49 = vld [vmem:[%s2 + $0xf0] sm:$0xff]
  %v50 = vld [vmem:[%s2 + $0xf8] sm:$0xff]
  %v51 = vld [vmem:[%s3] sm:$0xff]
  %v52 = vld [vmem:[%s3 + $0x8] sm:$0xff]
  %v53 = vld [vmem:[%s3 + $0x10] sm:$0xff]
  %v54 = vld [vmem:[%s3 + $0x18] sm:$0xff]
  %v55 = vld [vmem:[%s3 + $0x20] sm:$0xff]
  %v56 = vld [vmem:[%s3 + $0x28] sm:$0xff]
  %v57 = vld [vmem:[%s3 + $0x30] sm:$0xff]
  %v58 = vld [vmem:[%s3 + $0x38] sm:$0xff]
  %v59 = vld [vmem:[%s3 + $0x40] sm:$0xff]
  %v60 = vld [vmem:[%s3 + $0x48] sm:$0xff]
  %v61 = vld [vmem:[%s3 + $0x50] sm:$0xff]
  %v62 = vld [vmem:[%s3 + $0x58] sm:$0xff]
  %v63 = vld [vmem:[%s3 + $0x60] sm:$0xff]
  %v64 = vld [vmem:[%s3 + $0x68] sm:$0xff]
  %v65 = vld [vmem:[%s3 + $0x70] sm:$0xff]
  %v66 = vld [vmem:[%s3 + $0x78] sm:$0xff]
  %v67 = vld [vmem:[%s3 + $0x80] sm:$0xff]
  %v68 = vld [vmem:[%s3 + $0x88] sm:$0xff]
  %v69 = vld [vmem:[%s3 + $0x90] sm:$0xff]
  %v70 = vld [vmem:[%s3 + $0x98] sm:$0xff]
  %v71 = vld [vmem:[%s3 + $0xa0] sm:$0xff]
  %v72 = vld [vmem:[%s3 + $0xa8] sm:$0xff]
  %v73 = vld [vmem:[%s3 + $0xb0] sm:$0xff]
  %v74 = vld [vmem:[%s3 + $0xb8] sm:$0xff]
  %v75 = vld [vmem:[%s3 + $0xc0] sm:$0xff]
  %v76 = vld [vmem:[%s3 + $0xc8] sm:$0xff]
  %v77 = vld [vmem:[%s3 + $0xd0] sm:$0xff]
  %v78 = vld [vmem:[%s3 + $0xd8] sm:$0xff]
  %v79 = vld [vmem:[%s3 + $0xe0] sm:$0xff]
  %v80 = vld [vmem:[%s3 + $0xe8] sm:$0xff]
  %v81 = vld [vmem:[%s3 + $0xf0] sm:$0xff]
  %v82 = vld [vmem:[%s3 + $0xf8] sm:$0xff]
  %v83 = vadd.f32 %v19, %v51
  %v84 = vadd.f32 %v20, %v52
  %v85 = vadd.f32 %v21, %v53
  %v86 = vadd.f32 %v22, %v54
  %v87 = vadd.f32 %v23, %v55
  %v88 = vadd.f32 %v24, %v56
  %v89 = vadd.f32 %v25, %v57
  %v90 = vadd.f32 %v26, %v58
  %v91 = vadd.f32 %v27, %v59
  %v92 = vadd.f32 %v28, %v60
  %v93 = vadd.f32 %v29, %v61
  %v94 = vadd.f32 %v30, %v62
  %v95 = vadd.f32 %v31, %v63
  %v96 = vadd.f32 %v32, %v64
  %v97 = vadd.f32 %v33, %v65
  %v98 = vadd.f32 %v34, %v66
  %v99 = vadd.f32 %v35, %v67
  %v100 = vadd.f32 %v36, %v68
  %v101 = vadd.f32 %v37, %v69
  %v102 = vadd.f32 %v38, %v70
  %v103 = vadd.f32 %v39, %v71
  %v104 = vadd.f32 %v40, %v72
  %v105 = vadd.f32 %v41, %v73
  %v106 = vadd.f32 %v42, %v74
  %v107 = vadd.f32 %v43, %v75
  %v108 = vadd.f32 %v44, %v76
  %v109 = vadd.f32 %v45, %v77
  %v110 = vadd.f32 %v46, %v78
  %v111 = vadd.f32 %v47, %v79
  %v112 = vadd.f32 %v48, %v80
  %v113 = vadd.f32 %v49, %v81
  %v114 = vadd.f32 %v50, %v82
  %115 = vst [vmem:[#allocation2] sm:$0xff] %v83
  %116 = vst [vmem:[#allocation2 + $0x8] sm:$0xff] %v84
  %117 = vst [vmem:[#allocation2 + $0x10] sm:$0xff] %v85
  %118 = vst [vmem:[#allocation2 + $0x18] sm:$0xff] %v86
  %119 = vst [vmem:[#allocation2 + $0x20] sm:$0xff] %v87
  %120 = vst [vmem:[#allocation2 + $0x28] sm:$0xff] %v88
  %121 = vst [vmem:[#allocation2 + $0x30] sm:$0xff] %v89
  %122 = vst [vmem:[#allocation2 + $0x38] sm:$0xff] %v90
  %123 = vst [vmem:[#allocation2 + $0x40] sm:$0xff] %v91
  %124 = vst [vmem:[#allocation2 + $0x48] sm:$0xff] %v92
  %125 = vst [vmem:[#allocation2 + $0x50] sm:$0xff] %v93
  %126 = vst [vmem:[#allocation2 + $0x58] sm:$0xff] %v94
  %127 = vst [vmem:[#allocation2 + $0x60] sm:$0xff] %v95
  %128 = vst [vmem:[#allocation2 + $0x68] sm:$0xff] %v96
  %129 = vst [vmem:[#allocation2 + $0x70] sm:$0xff] %v97
  %130 = vst [vmem:[#allocation2 + $0x78] sm:$0xff] %v98
  %131 = vst [vmem:[#allocation2 + $0x80] sm:$0xff] %v99
  %132 = vst [vmem:[#allocation2 + $0x88] sm:$0xff] %v100
  %133 = vst [vmem:[#allocation2 + $0x90] sm:$0xff] %v101
  %134 = vst [vmem:[#allocation2 + $0x98] sm:$0xff] %v102
  %135 = vst [vmem:[#allocation2 + $0xa0] sm:$0xff] %v103
  %136 = vst [vmem:[#allocation2 + $0xa8] sm:$0xff] %v104
  %137 = vst [vmem:[#allocation2 + $0xb0] sm:$0xff] %v105
  %138 = vst [vmem:[#allocation2 + $0xb8] sm:$0xff] %v106
  %139 = vst [vmem:[#allocation2 + $0xc0] sm:$0xff] %v107
  %140 = vst [vmem:[#allocation2 + $0xc8] sm:$0xff] %v108
  %141 = vst [vmem:[#allocation2 + $0xd0] sm:$0xff] %v109
  %142 = vst [vmem:[#allocation2 + $0xd8] sm:$0xff] %v110
  %143 = vst [vmem:[#allocation2 + $0xe0] sm:$0xff] %v111
  %144 = vst [vmem:[#allocation2 + $0xe8] sm:$0xff] %v112
  %145 = vst [vmem:[#allocation2 + $0xf0] sm:$0xff] %v113
  %146 = vst [vmem:[#allocation2 + $0xf8] sm:$0xff] %v114
  %v147 = vld [vmem:[%s3] sm:$0xff]
  %v148 = vld [vmem:[%s3 + $0x8] sm:$0xff]
  %v149 = vld [vmem:[%s3 + $0x10] sm:$0xff]
  %v150 = vld [vmem:[%s3 + $0x18] sm:$0xff]
  %v151 = vld [vmem:[%s3 + $0x20] sm:$0xff]
  %v152 = vld [vmem:[%s3 + $0x28] sm:$0xff]
  %v153 = vld [vmem:[%s3 + $0x30] sm:$0xff]
  %v154 = vld [vmem:[%s3 + $0x38] sm:$0xff]
  %v155 = vld [vmem:[%s3 + $0x40] sm:$0xff]
  %v156 = vld [vmem:[%s3 + $0x48] sm:$0xff]
  %v157 = vld [vmem:[%s3 + $0x50] sm:$0xff]
  %v158 = vld [vmem:[%s3 + $0x58] sm:$0xff]
  %v159 = vld [vmem:[%s3 + $0x60] sm:$0xff]
  %v160 = vld [vmem:[%s3 + $0x68] sm:$0xff]
  %v161 = vld [vmem:[%s3 + $0x70] sm:$0xff]
  %v162 = vld [vmem:[%s3 + $0x78] sm:$0xff]
  %v163 = vld [vmem:[%s3 + $0x80] sm:$0xff]
  %v164 = vld [vmem:[%s3 + $0x88] sm:$0xff]
  %v165 = vld [vmem:[%s3 + $0x90] sm:$0xff]
  %v166 = vld [vmem:[%s3 + $0x98] sm:$0xff]
  %v167 = vld [vmem:[%s3 + $0xa0] sm:$0xff]
  %v168 = vld [vmem:[%s3 + $0xa8] sm:$0xff]
  %v169 = vld [vmem:[%s3 + $0xb0] sm:$0xff]
  %v170 = vld [vmem:[%s3 + $0xb8] sm:$0xff]
  %v171 = vld [vmem:[%s3 + $0xc0] sm:$0xff]
  %v172 = vld [vmem:[%s3 + $0xc8] sm:$0xff]
  %v173 = vld [vmem:[%s3 + $0xd0] sm:$0xff]
  %v174 = vld [vmem:[%s3 + $0xd8] sm:$0xff]
  %v175 = vld [vmem:[%s3 + $0xe0] sm:$0xff]
  %v176 = vld [vmem:[%s3 + $0xe8] sm:$0xff]
  %v177 = vld [vmem:[%s3 + $0xf0] sm:$0xff]
  %v178 = vld [vmem:[%s3 + $0xf8] sm:$0xff]
  %v179 = vld [vmem:[%s2] sm:$0xff]
  %v180 = vld [vmem:[%s2 + $0x8] sm:$0xff]
  %v181 = vld [vmem:[%s2 + $0x10] sm:$0xff]
  %v182 = vld [vmem:[%s2 + $0x18] sm:$0xff]
  %v183 = vld [vmem:[%s2 + $0x20] sm:$0xff]
  %v184 = vld [vmem:[%s2 + $0x28] sm:$0xff]
  %v185 = vld [vmem:[%s2 + $0x30] sm:$0xff]
  %v186 = vld [vmem:[%s2 + $0x38] sm:$0xff]
  %v187 = vld [vmem:[%s2 + $0x40] sm:$0xff]
  %v188 = vld [vmem:[%s2 + $0x48] sm:$0xff]
  %v189 = vld [vmem:[%s2 + $0x50] sm:$0xff]
  %v190 = vld [vmem:[%s2 + $0x58] sm:$0xff]
  %v191 = vld [vmem:[%s2 + $0x60] sm:$0xff]
  %v192 = vld [vmem:[%s2 + $0x68] sm:$0xff]
  %v193 = vld [vmem:[%s2 + $0x70] sm:$0xff]
  %v194 = vld [vmem:[%s2 + $0x78] sm:$0xff]
  %v195 = vld [vmem:[%s2 + $0x80] sm:$0xff]
  %v196 = vld [vmem:[%s2 + $0x88] sm:$0xff]
  %v197 = vld [vmem:[%s2 + $0x90] sm:$0xff]
  %v198 = vld [vmem:[%s2 + $0x98] sm:$0xff]
  %v199 = vld [vmem:[%s2 + $0xa0] sm:$0xff]
  %v200 = vld [vmem:[%s2 + $0xa8] sm:$0xff]
  %v201 = vld [vmem:[%s2 + $0xb0] sm:$0xff]
  %v202 = vld [vmem:[%s2 + $0xb8] sm:$0xff]
  %v203 = vld [vmem:[%s2 + $0xc0] sm:$0xff]
  %v204 = vld [vmem:[%s2 + $0xc8] sm:$0xff]
  %v205 = vld [vmem:[%s2 + $0xd0] sm:$0xff]
  %v206 = vld [vmem:[%s2 + $0xd8] sm:$0xff]
  %v207 = vld [vmem:[%s2 + $0xe0] sm:$0xff]
  %v208 = vld [vmem:[%s2 + $0xe8] sm:$0xff]
  %v209 = vld [vmem:[%s2 + $0xf0] sm:$0xff]
  %v210 = vld [vmem:[%s2 + $0xf8] sm:$0xff]
  %v211 = vsub.f32 %v147, %v179
  %v212 = vsub.f32 %v148, %v180
  %v213 = vsub.f32 %v149, %v181
  %v214 = vsub.f32 %v150, %v182
  %v215 = vsub.f32 %v151, %v183
  %v216 = vsub.f32 %v152, %v184
  %v217 = vsub.f32 %v153, %v185
  %v218 = vsub.f32 %v154, %v186
  %v219 = vsub.f32 %v155, %v187
  %v220 = vsub.f32 %v156, %v188
  %v221 = vsub.f32 %v157, %v189
  %v222 = vsub.f32 %v158, %v190
  %v223 = vsub.f32 %v159, %v191
  %v224 = vsub.f32 %v160, %v192
  %v225 = vsub.f32 %v161, %v193
  %v226 = vsub.f32 %v162, %v194
  %v227 = vsub.f32 %v163, %v195
  %v228 = vsub.f32 %v164, %v196
  %v229 = vsub.f32 %v165, %v197
  %v230 = vsub.f32 %v166, %v198
  %v231 = vsub.f32 %v167, %v199
  %v232 = vsub.f32 %v168, %v200
  %v233 = vsub.f32 %v169, %v201
  %v234 = vsub.f32 %v170, %v202
  %v235 = vsub.f32 %v171, %v203
  %v236 = vsub.f32 %v172, %v204
  %v237 = vsub.f32 %v173, %v205
  %v238 = vsub.f32 %v174, %v206
  %v239 = vsub.f32 %v175, %v207
  %v240 = vsub.f32 %v176, %v208
  %v241 = vsub.f32 %v177, %v209
  %v242 = vsub.f32 %v178, %v210
  %243 = vst [vmem:[#allocation3] sm:$0xff] %v211
  %244 = vst [vmem:[#allocation3 + $0x8] sm:$0xff] %v212
  %245 = vst [vmem:[#allocation3 + $0x10] sm:$0xff] %v213
  %246 = vst [vmem:[#allocation3 + $0x18] sm:$0xff] %v214
  %247 = vst [vmem:[#allocation3 + $0x20] sm:$0xff] %v215
  %248 = vst [vmem:[#allocation3 + $0x28] sm:$0xff] %v216
  %249 = vst [vmem:[#allocation3 + $0x30] sm:$0xff] %v217
  %250 = vst [vmem:[#allocation3 + $0x38] sm:$0xff] %v218
  %251 = vst [vmem:[#allocation3 + $0x40] sm:$0xff] %v219
  %252 = vst [vmem:[#allocation3 + $0x48] sm:$0xff] %v220
  %253 = vst [vmem:[#allocation3 + $0x50] sm:$0xff] %v221
  %254 = vst [vmem:[#allocation3 + $0x58] sm:$0xff] %v222
  %255 = vst [vmem:[#allocation3 + $0x60] sm:$0xff] %v223
  %256 = vst [vmem:[#allocation3 + $0x68] sm:$0xff] %v224
  %257 = vst [vmem:[#allocation3 + $0x70] sm:$0xff] %v225
  %258 = vst [vmem:[#allocation3 + $0x78] sm:$0xff] %v226
  %259 = vst [vmem:[#allocation3 + $0x80] sm:$0xff] %v227
  %260 = vst [vmem:[#allocation3 + $0x88] sm:$0xff] %v228
  %261 = vst [vmem:[#allocation3 + $0x90] sm:$0xff] %v229
  %262 = vst [vmem:[#allocation3 + $0x98] sm:$0xff] %v230
  %263 = vst [vmem:[#allocation3 + $0xa0] sm:$0xff] %v231
  %264 = vst [vmem:[#allocation3 + $0xa8] sm:$0xff] %v232
  %265 = vst [vmem:[#allocation3 + $0xb0] sm:$0xff] %v233
  %266 = vst [vmem:[#allocation3 + $0xb8] sm:$0xff] %v234
  %267 = vst [vmem:[#allocation3 + $0xc0] sm:$0xff] %v235
  %268 = vst [vmem:[#allocation3 + $0xc8] sm:$0xff] %v236
  %269 = vst [vmem:[#allocation3 + $0xd0] sm:$0xff] %v237
  %270 = vst [vmem:[#allocation3 + $0xd8] sm:$0xff] %v238
  %271 = vst [vmem:[#allocation3 + $0xe0] sm:$0xff] %v239
  %272 = vst [vmem:[#allocation3 + $0xe8] sm:$0xff] %v240
  %273 = vst [vmem:[#allocation3 + $0xf0] sm:$0xff] %v241
  %274 = vst [vmem:[#allocation3 + $0xf8] sm:$0xff] %v242
  %v275 = vld [vmem:[%s0] sm:$0x3]
  %v278 = vunpack.c.l.s4 1966171168
  %v279 = vunpack.c.0.s8 %v278
  %v280 = vlaneseq
  %v281 = vshrl.u32 %v280, 7
  %v282 = vsub.s32 %v279, %v281
  %v283 = vrot.slane %v275, %v282
  %v284 = vcombine.high %v283, %v283
  %v286 = vunpack.c.l.s4 1966171168
  %v287 = vunpack.c.0.s8 %v286
  %v288 = vlaneseq
  %v289 = vshrl.u32 %v288, 7
  %v290 = vsub.s32 %v287, %v289
  %v291 = vrot.slane %v283, %v290
  %v293 = vunpack.c.l.s4 1966171168
  %v294 = vunpack.c.0.s8 %v293
  %v295 = vlaneseq
  %v296 = vshrl.u32 %v295, 7
  %v297 = vsub.s32 %v294, %v296
  %v298 = vrot.slane %v284, %v297
  %v301 = vld [vmem:[%s1] sm:$0x3]
  %v304 = vunpack.c.l.s4 1966171168
  %v305 = vunpack.c.0.s8 %v304
  %v306 = vlaneseq
  %v307 = vshrl.u32 %v306, 7
  %v308 = vsub.s32 %v305, %v307
  %v309 = vrot.slane %v301, %v308
  %v310 = vcombine.high %v309, %v309
  %v312 = vunpack.c.l.s4 1966171168
  %v313 = vunpack.c.0.s8 %v312
  %v314 = vlaneseq
  %v315 = vshrl.u32 %v314, 7
  %v316 = vsub.s32 %v313, %v315
  %v317 = vrot.slane %v309, %v316
  %v319 = vunpack.c.l.s4 1966171168
  %v320 = vunpack.c.0.s8 %v319
  %v321 = vlaneseq
  %v322 = vshrl.u32 %v321, 7
  %v323 = vsub.s32 %v320, %v322
  %v324 = vrot.slane %v310, %v323
  %v327 = vld [vmem:[%s2] sm:$0xff]
  %v328 = vld [vmem:[%s2 + $0x8] sm:$0xff]
  %v329 = vld [vmem:[#allocation2] sm:$0xff]
  %v330 = vld [vmem:[#allocation2 + $0x8] sm:$0xff]
  %v331 = vld [vmem:[#allocation3] sm:$0xff]
  %v332 = vld [vmem:[#allocation3 + $0x8] sm:$0xff]
  %v333 = vadd.f32 %v291, %v317
  %v334 = vadd.f32 %v298, %v324
  %v337 = vlaneseq
  %v338 = vshrl.u32 %v337, 7
  %v339 = vsub.s32 0, %v338
  %v340 = vrot.slane %v333, %v339
  %v341 = vlaneseq
  %v342 = vshrl.u32 %v341, 7
  %v343 = vsub.s32 0, %v342
  %v344 = vrot.slane %v334, %v343
  %v347 = vmul.f32 %v327, %v340
  %v348 = vmul.f32 %v328, %v340
  %v349 = vmul.f32 %v327, %v344
  %v350 = vmul.f32 %v328, %v344
  %v351 = vlaneseq
  %v352 = vshrl.u32 %v351, 7
  %v353 = vsub.s32 0, %v352
  %v354 = vrot.slane %v317, %v353
  %v355 = vlaneseq
  %v356 = vshrl.u32 %v355, 7
  %v357 = vsub.s32 0, %v356
  %v358 = vrot.slane %v324, %v357
  %v361 = vmul.f32 %v354, %v329
  %v362 = vmul.f32 %v354, %v330
  %v363 = vmul.f32 %v358, %v329
  %v364 = vmul.f32 %v358, %v330
  %v365 = vsub.f32 %v347, %v361
  %v366 = vsub.f32 %v348, %v362
  %v367 = vsub.f32 %v349, %v363
  %v368 = vsub.f32 %v350, %v364
  %v369 = vadd.f32 %v365, 0.0
  %v370 = vadd.f32 %v366, 0.0
  %v371 = vadd.f32 %v367, 0.0
  %v372 = vadd.f32 %v368, 0.0
  %v373 = vlaneseq
  %v374 = vshrl.u32 %v373, 7
  %v375 = vsub.s32 0, %v374
  %v376 = vrot.slane %v291, %v375
  %v377 = vlaneseq
  %v378 = vshrl.u32 %v377, 7
  %v379 = vsub.s32 0, %v378
  %v380 = vrot.slane %v298, %v379
  %v383 = vmul.f32 %v376, %v331
  %v384 = vmul.f32 %v376, %v332
  %v385 = vmul.f32 %v380, %v331
  %v386 = vmul.f32 %v380, %v332
  %v387 = vadd.f32 %v347, %v383
  %v388 = vadd.f32 %v348, %v384
  %v389 = vadd.f32 %v349, %v385
  %v390 = vadd.f32 %v350, %v386
  %v391 = vadd.f32 %v387, 0.0
  %v392 = vadd.f32 %v388, 0.0
  %v393 = vadd.f32 %v389, 0.0
  %v394 = vadd.f32 %v390, 0.0
  %s395 = scalar_lea.vmem %s0, 2
  %v396 = vld [vmem:[%s395] sm:$0x3]
  %v399 = vunpack.c.l.s4 1966171168
  %v400 = vunpack.c.0.s8 %v399
  %v401 = vlaneseq
  %v402 = vshrl.u32 %v401, 7
  %v403 = vsub.s32 %v400, %v402
  %v404 = vrot.slane %v396, %v403
  %v405 = vcombine.high %v404, %v404
  %v407 = vunpack.c.l.s4 1966171168
  %v408 = vunpack.c.0.s8 %v407
  %v409 = vlaneseq
  %v410 = vshrl.u32 %v409, 7
  %v411 = vsub.s32 %v408, %v410
  %v412 = vrot.slane %v404, %v411
  %v414 = vunpack.c.l.s4 1966171168
  %v415 = vunpack.c.0.s8 %v414
  %v416 = vlaneseq
  %v417 = vshrl.u32 %v416, 7
  %v418 = vsub.s32 %v415, %v417
  %v419 = vrot.slane %v405, %v418
  %s422 = scalar_lea.vmem %s1, 2
  %v423 = vld [vmem:[%s422] sm:$0x3]
  %v426 = vunpack.c.l.s4 1966171168
  %v427 = vunpack.c.0.s8 %v426
  %v428 = vlaneseq
  %v429 = vshrl.u32 %v428, 7
  %v430 = vsub.s32 %v427, %v429
  %v431 = vrot.slane %v423, %v430
  %v432 = vcombine.high %v431, %v431
  %v434 = vunpack.c.l.s4 1966171168
  %v435 = vunpack.c.0.s8 %v434
  %v436 = vlaneseq
  %v437 = vshrl.u32 %v436, 7
  %v438 = vsub.s32 %v435, %v437
  %v439 = vrot.slane %v431, %v438
  %v441 = vunpack.c.l.s4 1966171168
  %v442 = vunpack.c.0.s8 %v441
  %v443 = vlaneseq
  %v444 = vshrl.u32 %v443, 7
  %v445 = vsub.s32 %v442, %v444
  %v446 = vrot.slane %v432, %v445
  %s449 = scalar_lea.vmem %s2, 16
  %v450 = vld [vmem:[%s449] sm:$0xff]
  %v451 = vld [vmem:[%s449 + $0x8] sm:$0xff]
  %s452 = scalar_lea.vmem [#allocation2], 16
  %v453 = vld [vmem:[%s452] sm:$0xff]
  %v454 = vld [vmem:[%s452 + $0x8] sm:$0xff]
  %s455 = scalar_lea.vmem [#allocation3], 16
  %v456 = vld [vmem:[%s455] sm:$0xff]
  %v457 = vld [vmem:[%s455 + $0x8] sm:$0xff]
  %v458 = vadd.f32 %v412, %v439
  %v459 = vadd.f32 %v419, %v446
  %v462 = vlaneseq
  %v463 = vshrl.u32 %v462, 7
  %v464 = vsub.s32 0, %v463
  %v465 = vrot.slane %v458, %v464
  %v466 = vlaneseq
  %v467 = vshrl.u32 %v466, 7
  %v468 = vsub.s32 0, %v467
  %v469 = vrot.slane %v459, %v468
  %v472 = vmul.f32 %v450, %v465
  %v473 = vmul.f32 %v451, %v465
  %v474 = vmul.f32 %v450, %v469
  %v475 = vmul.f32 %v451, %v469
  %v476 = vlaneseq
  %v477 = vshrl.u32 %v476, 7
  %v478 = vsub.s32 0, %v477
  %v479 = vrot.slane %v439, %v478
  %v480 = vlaneseq
  %v481 = vshrl.u32 %v480, 7
  %v482 = vsub.s32 0, %v481
  %v483 = vrot.slane %v446, %v482
  %v486 = vmul.f32 %v479, %v453
  %v487 = vmul.f32 %v479, %v454
  %v488 = vmul.f32 %v483, %v453
  %v489 = vmul.f32 %v483, %v454
  %v490 = vsub.f32 %v472, %v486
  %v491 = vsub.f32 %v473, %v487
  %v492 = vsub.f32 %v474, %v488
  %v493 = vsub.f32 %v475, %v489
  %v494 = vadd.f32 %v369, %v490
  %v495 = vadd.f32 %v370, %v491
  %v496 = vadd.f32 %v371, %v492
  %v497 = vadd.f32 %v372, %v493
  %v498 = vlaneseq
  %v499 = vshrl.u32 %v498, 7
  %v500 = vsub.s32 0, %v499
  %v501 = vrot.slane %v412, %v500
  %v502 = vlaneseq
  %v503 = vshrl.u32 %v502, 7
  %v504 = vsub.s32 0, %v503
  %v505 = vrot.slane %v419, %v504
  %v508 = vmul.f32 %v501, %v456
  %v509 = vmul.f32 %v501, %v457
  %v510 = vmul.f32 %v505, %v456
  %v511 = vmul.f32 %v505, %v457
  %v512 = vadd.f32 %v472, %v508
  %v513 = vadd.f32 %v473, %v509
  %v514 = vadd.f32 %v474, %v510
  %v515 = vadd.f32 %v475, %v511
  %v516 = vadd.f32 %v391, %v512
  %v517 = vadd.f32 %v392, %v513
  %v518 = vadd.f32 %v393, %v514
  %v519 = vadd.f32 %v394, %v515
  %s520 = scalar_lea.vmem %s0, 4
  %v521 = vld [vmem:[%s520] sm:$0x3]
  %v524 = vunpack.c.l.s4 1966171168
  %v525 = vunpack.c.0.s8 %v524
  %v526 = vlaneseq
  %v527 = vshrl.u32 %v526, 7
  %v528 = vsub.s32 %v525, %v527
  %v529 = vrot.slane %v521, %v528
  %v530 = vcombine.high %v529, %v529
  %v532 = vunpack.c.l.s4 1966171168
  %v533 = vunpack.c.0.s8 %v532
  %v534 = vlaneseq
  %v535 = vshrl.u32 %v534, 7
  %v536 = vsub.s32 %v533, %v535
  %v537 = vrot.slane %v529, %v536
  %v539 = vunpack.c.l.s4 1966171168
  %v540 = vunpack.c.0.s8 %v539
  %v541 = vlaneseq
  %v542 = vshrl.u32 %v541, 7
  %v543 = vsub.s32 %v540, %v542
  %v544 = vrot.slane %v530, %v543
  %s547 = scalar_lea.vmem %s1, 4
  %v548 = vld [vmem:[%s547] sm:$0x3]
  %v551 = vunpack.c.l.s4 1966171168
  %v552 = vunpack.c.0.s8 %v551
  %v553 = vlaneseq
  %v554 = vshrl.u32 %v553, 7
  %v555 = vsub.s32 %v552, %v554
  %v556 = vrot.slane %v548, %v555
  %v557 = vcombine.high %v556, %v556
  %v559 = vunpack.c.l.s4 1966171168
  %v560 = vunpack.c.0.s8 %v559
  %v561 = vlaneseq
  %v562 = vshrl.u32 %v561, 7
  %v563 = vsub.s32 %v560, %v562
  %v564 = vrot.slane %v556, %v563
  %v566 = vunpack.c.l.s4 1966171168
  %v567 = vunpack.c.0.s8 %v566
  %v568 = vlaneseq
  %v569 = vshrl.u32 %v568, 7
  %v570 = vsub.s32 %v567, %v569
  %v571 = vrot.slane %v557, %v570
  %s574 = scalar_lea.vmem %s2, 32
  %v575 = vld [vmem:[%s574] sm:$0xff]
  %v576 = vld [vmem:[%s574 + $0x8] sm:$0xff]
  %s577 = scalar_lea.vmem [#allocation2], 32
  %v578 = vld [vmem:[%s577] sm:$0xff]
  %v579 = vld [vmem:[%s577 + $0x8] sm:$0xff]
  %s580 = scalar_lea.vmem [#allocation3], 32
  %v581 = vld [vmem:[%s580] sm:$0xff]
  %v582 = vld [vmem:[%s580 + $0x8] sm:$0xff]
  %v583 = vadd.f32 %v537, %v564
  %v584 = vadd.f32 %v544, %v571
  %v587 = vlaneseq
  %v588 = vshrl.u32 %v587, 7
  %v589 = vsub.s32 0, %v588
  %v590 = vrot.slane %v583, %v589
  %v591 = vlaneseq
  %v592 = vshrl.u32 %v591, 7
  %v593 = vsub.s32 0, %v592
  %v594 = vrot.slane %v584, %v593
  %v597 = vmul.f32 %v575, %v590
  %v598 = vmul.f32 %v576, %v590
  %v599 = vmul.f32 %v575, %v594
  %v600 = vmul.f32 %v576, %v594
  %v601 = vlaneseq
  %v602 = vshrl.u32 %v601, 7
  %v603 = vsub.s32 0, %v602
  %v604 = vrot.slane %v564, %v603
  %v605 = vlaneseq
  %v606 = vshrl.u32 %v605, 7
  %v607 = vsub.s32 0, %v606
  %v608 = vrot.slane %v571, %v607
  %v611 = vmul.f32 %v604, %v578
  %v612 = vmul.f32 %v604, %v579
  %v613 = vmul.f32 %v608, %v578
  %v614 = vmul.f32 %v608, %v579
  %v615 = vsub.f32 %v597, %v611
  %v616 = vsub.f32 %v598, %v612
  %v617 = vsub.f32 %v599, %v613
  %v618 = vsub.f32 %v600, %v614
  %v619 = vadd.f32 %v494, %v615
  %v620 = vadd.f32 %v495, %v616
  %v621 = vadd.f32 %v496, %v617
  %v622 = vadd.f32 %v497, %v618
  %v623 = vlaneseq
  %v624 = vshrl.u32 %v623, 7
  %v625 = vsub.s32 0, %v624
  %v626 = vrot.slane %v537, %v625
  %v627 = vlaneseq
  %v628 = vshrl.u32 %v627, 7
  %v629 = vsub.s32 0, %v628
  %v630 = vrot.slane %v544, %v629
  %v633 = vmul.f32 %v626, %v581
  %v634 = vmul.f32 %v626, %v582
  %v635 = vmul.f32 %v630, %v581
  %v636 = vmul.f32 %v630, %v582
  %v637 = vadd.f32 %v597, %v633
  %v638 = vadd.f32 %v598, %v634
  %v639 = vadd.f32 %v599, %v635
  %v640 = vadd.f32 %v600, %v636
  %v641 = vadd.f32 %v516, %v637
  %v642 = vadd.f32 %v517, %v638
  %v643 = vadd.f32 %v518, %v639
  %v644 = vadd.f32 %v519, %v640
  %s645 = scalar_lea.vmem %s0, 6
  %v646 = vld [vmem:[%s645] sm:$0x3]
  %v649 = vunpack.c.l.s4 1966171168
  %v650 = vunpack.c.0.s8 %v649
  %v651 = vlaneseq
  %v652 = vshrl.u32 %v651, 7
  %v653 = vsub.s32 %v650, %v652
  %v654 = vrot.slane %v646, %v653
  %v655 = vcombine.high %v654, %v654
  %v657 = vunpack.c.l.s4 1966171168
  %v658 = vunpack.c.0.s8 %v657
  %v659 = vlaneseq
  %v660 = vshrl.u32 %v659, 7
  %v661 = vsub.s32 %v658, %v660
  %v662 = vrot.slane %v654, %v661
  %v664 = vunpack.c.l.s4 1966171168
  %v665 = vunpack.c.0.s8 %v664
  %v666 = vlaneseq
  %v667 = vshrl.u32 %v666, 7
  %v668 = vsub.s32 %v665, %v667
  %v669 = vrot.slane %v655, %v668
  %s672 = scalar_lea.vmem %s1, 6
  %v673 = vld [vmem:[%s672] sm:$0x3]
  %v676 = vunpack.c.l.s4 1966171168
  %v677 = vunpack.c.0.s8 %v676
  %v678 = vlaneseq
  %v679 = vshrl.u32 %v678, 7
  %v680 = vsub.s32 %v677, %v679
  %v681 = vrot.slane %v673, %v680
  %v682 = vcombine.high %v681, %v681
  %v684 = vunpack.c.l.s4 1966171168
  %v685 = vunpack.c.0.s8 %v684
  %v686 = vlaneseq
  %v687 = vshrl.u32 %v686, 7
  %v688 = vsub.s32 %v685, %v687
  %v689 = vrot.slane %v681, %v688
  %v691 = vunpack.c.l.s4 1966171168
  %v692 = vunpack.c.0.s8 %v691
  %v693 = vlaneseq
  %v694 = vshrl.u32 %v693, 7
  %v695 = vsub.s32 %v692, %v694
  %v696 = vrot.slane %v682, %v695
  %s699 = scalar_lea.vmem %s2, 48
  %v700 = vld [vmem:[%s699] sm:$0xff]
  %v701 = vld [vmem:[%s699 + $0x8] sm:$0xff]
  %s702 = scalar_lea.vmem [#allocation2], 48
  %v703 = vld [vmem:[%s702] sm:$0xff]
  %v704 = vld [vmem:[%s702 + $0x8] sm:$0xff]
  %s705 = scalar_lea.vmem [#allocation3], 48
  %v706 = vld [vmem:[%s705] sm:$0xff]
  %v707 = vld [vmem:[%s705 + $0x8] sm:$0xff]
  %v708 = vadd.f32 %v662, %v689
  %v709 = vadd.f32 %v669, %v696
  %v712 = vlaneseq
  %v713 = vshrl.u32 %v712, 7
  %v714 = vsub.s32 0, %v713
  %v715 = vrot.slane %v708, %v714
  %v716 = vlaneseq
  %v717 = vshrl.u32 %v716, 7
  %v718 = vsub.s32 0, %v717
  %v719 = vrot.slane %v709, %v718
  %v722 = vmul.f32 %v700, %v715
  %v723 = vmul.f32 %v701, %v715
  %v724 = vmul.f32 %v700, %v719
  %v725 = vmul.f32 %v701, %v719
  %v726 = vlaneseq
  %v727 = vshrl.u32 %v726, 7
  %v728 = vsub.s32 0, %v727
  %v729 = vrot.slane %v689, %v728
  %v730 = vlaneseq
  %v731 = vshrl.u32 %v730, 7
  %v732 = vsub.s32 0, %v731
  %v733 = vrot.slane %v696, %v732
  %v736 = vmul.f32 %v729, %v703
  %v737 = vmul.f32 %v729, %v704
  %v738 = vmul.f32 %v733, %v703
  %v739 = vmul.f32 %v733, %v704
  %v740 = vsub.f32 %v722, %v736
  %v741 = vsub.f32 %v723, %v737
  %v742 = vsub.f32 %v724, %v738
  %v743 = vsub.f32 %v725, %v739
  %v744 = vadd.f32 %v619, %v740
  %v745 = vadd.f32 %v620, %v741
  %v746 = vadd.f32 %v621, %v742
  %v747 = vadd.f32 %v622, %v743
  %v748 = vlaneseq
  %v749 = vshrl.u32 %v748, 7
  %v750 = vsub.s32 0, %v749
  %v751 = vrot.slane %v662, %v750
  %v752 = vlaneseq
  %v753 = vshrl.u32 %v752, 7
  %v754 = vsub.s32 0, %v753
  %v755 = vrot.slane %v669, %v754
  %v758 = vmul.f32 %v751, %v706
  %v759 = vmul.f32 %v751, %v707
  %v760 = vmul.f32 %v755, %v706
  %v761 = vmul.f32 %v755, %v707
  %v762 = vadd.f32 %v722, %v758
  %v763 = vadd.f32 %v723, %v759
  %v764 = vadd.f32 %v724, %v760
  %v765 = vadd.f32 %v725, %v761
  %v766 = vadd.f32 %v641, %v762
  %v767 = vadd.f32 %v642, %v763
  %v768 = vadd.f32 %v643, %v764
  %v769 = vadd.f32 %v644, %v765
  %s770 = scalar_lea.vmem %s0, 8
  %v771 = vld [vmem:[%s770] sm:$0x3]
  %v774 = vunpack.c.l.s4 1966171168
  %v775 = vunpack.c.0.s8 %v774
  %v776 = vlaneseq
  %v777 = vshrl.u32 %v776, 7
  %v778 = vsub.s32 %v775, %v777
  %v779 = vrot.slane %v771, %v778
  %v780 = vcombine.high %v779, %v779
  %v782 = vunpack.c.l.s4 1966171168
  %v783 = vunpack.c.0.s8 %v782
  %v784 = vlaneseq
  %v785 = vshrl.u32 %v784, 7
  %v786 = vsub.s32 %v783, %v785
  %v787 = vrot.slane %v779, %v786
  %v789 = vunpack.c.l.s4 1966171168
  %v790 = vunpack.c.0.s8 %v789
  %v791 = vlaneseq
  %v792 = vshrl.u32 %v791, 7
  %v793 = vsub.s32 %v790, %v792
  %v794 = vrot.slane %v780, %v793
  %s797 = scalar_lea.vmem %s1, 8
  %v798 = vld [vmem:[%s797] sm:$0x3]
  %v801 = vunpack.c.l.s4 1966171168
  %v802 = vunpack.c.0.s8 %v801
  %v803 = vlaneseq
  %v804 = vshrl.u32 %v803, 7
  %v805 = vsub.s32 %v802, %v804
  %v806 = vrot.slane %v798, %v805
  %v807 = vcombine.high %v806, %v806
  %v809 = vunpack.c.l.s4 1966171168
  %v810 = vunpack.c.0.s8 %v809
  %v811 = vlaneseq
  %v812 = vshrl.u32 %v811, 7
  %v813 = vsub.s32 %v810, %v812
  %v814 = vrot.slane %v806, %v813
  %v816 = vunpack.c.l.s4 1966171168
  %v817 = vunpack.c.0.s8 %v816
  %v818 = vlaneseq
  %v819 = vshrl.u32 %v818, 7
  %v820 = vsub.s32 %v817, %v819
  %v821 = vrot.slane %v807, %v820
  %s824 = scalar_lea.vmem %s2, 64
  %v825 = vld [vmem:[%s824] sm:$0xff]
  %v826 = vld [vmem:[%s824 + $0x8] sm:$0xff]
  %s827 = scalar_lea.vmem [#allocation2], 64
  %v828 = vld [vmem:[%s827] sm:$0xff]
  %v829 = vld [vmem:[%s827 + $0x8] sm:$0xff]
  %s830 = scalar_lea.vmem [#allocation3], 64
  %v831 = vld [vmem:[%s830] sm:$0xff]
  %v832 = vld [vmem:[%s830 + $0x8] sm:$0xff]
  %v833 = vadd.f32 %v787, %v814
  %v834 = vadd.f32 %v794, %v821
  %v837 = vlaneseq
  %v838 = vshrl.u32 %v837, 7
  %v839 = vsub.s32 0, %v838
  %v840 = vrot.slane %v833, %v839
  %v841 = vlaneseq
  %v842 = vshrl.u32 %v841, 7
  %v843 = vsub.s32 0, %v842
  %v844 = vrot.slane %v834, %v843
  %v847 = vmul.f32 %v825, %v840
  %v848 = vmul.f32 %v826, %v840
  %v849 = vmul.f32 %v825, %v844
  %v850 = vmul.f32 %v826, %v844
  %v851 = vlaneseq
  %v852 = vshrl.u32 %v851, 7
  %v853 = vsub.s32 0, %v852
  %v854 = vrot.slane %v814, %v853
  %v855 = vlaneseq
  %v856 = vshrl.u32 %v855, 7
  %v857 = vsub.s32 0, %v856
  %v858 = vrot.slane %v821, %v857
  %v861 = vmul.f32 %v854, %v828
  %v862 = vmul.f32 %v854, %v829
  %v863 = vmul.f32 %v858, %v828
  %v864 = vmul.f32 %v858, %v829
  %v865 = vsub.f32 %v847, %v861
  %v866 = vsub.f32 %v848, %v862
  %v867 = vsub.f32 %v849, %v863
  %v868 = vsub.f32 %v850, %v864
  %v869 = vadd.f32 %v744, %v865
  %v870 = vadd.f32 %v745, %v866
  %v871 = vadd.f32 %v746, %v867
  %v872 = vadd.f32 %v747, %v868
  %v873 = vlaneseq
  %v874 = vshrl.u32 %v873, 7
  %v875 = vsub.s32 0, %v874
  %v876 = vrot.slane %v787, %v875
  %v877 = vlaneseq
  %v878 = vshrl.u32 %v877, 7
  %v879 = vsub.s32 0, %v878
  %v880 = vrot.slane %v794, %v879
  %v883 = vmul.f32 %v876, %v831
  %v884 = vmul.f32 %v876, %v832
  %v885 = vmul.f32 %v880, %v831
  %v886 = vmul.f32 %v880, %v832
  %v887 = vadd.f32 %v847, %v883
  %v888 = vadd.f32 %v848, %v884
  %v889 = vadd.f32 %v849, %v885
  %v890 = vadd.f32 %v850, %v886
  %v891 = vadd.f32 %v766, %v887
  %v892 = vadd.f32 %v767, %v888
  %v893 = vadd.f32 %v768, %v889
  %v894 = vadd.f32 %v769, %v890
  %s895 = scalar_lea.vmem %s0, 10
  %v896 = vld [vmem:[%s895] sm:$0x3]
  %v899 = vunpack.c.l.s4 1966171168
  %v900 = vunpack.c.0.s8 %v899
  %v901 = vlaneseq
  %v902 = vshrl.u32 %v901, 7
  %v903 = vsub.s32 %v900, %v902
  %v904 = vrot.slane %v896, %v903
  %v905 = vcombine.high %v904, %v904
  %v907 = vunpack.c.l.s4 1966171168
  %v908 = vunpack.c.0.s8 %v907
  %v909 = vlaneseq
  %v910 = vshrl.u32 %v909, 7
  %v911 = vsub.s32 %v908, %v910
  %v912 = vrot.slane %v904, %v911
  %v914 = vunpack.c.l.s4 1966171168
  %v915 = vunpack.c.0.s8 %v914
  %v916 = vlaneseq
  %v917 = vshrl.u32 %v916, 7
  %v918 = vsub.s32 %v915, %v917
  %v919 = vrot.slane %v905, %v918
  %s922 = scalar_lea.vmem %s1, 10
  %v923 = vld [vmem:[%s922] sm:$0x3]
  %v926 = vunpack.c.l.s4 1966171168
  %v927 = vunpack.c.0.s8 %v926
  %v928 = vlaneseq
  %v929 = vshrl.u32 %v928, 7
  %v930 = vsub.s32 %v927, %v929
  %v931 = vrot.slane %v923, %v930
  %v932 = vcombine.high %v931, %v931
  %v934 = vunpack.c.l.s4 1966171168
  %v935 = vunpack.c.0.s8 %v934
  %v936 = vlaneseq
  %v937 = vshrl.u32 %v936, 7
  %v938 = vsub.s32 %v935, %v937
  %v939 = vrot.slane %v931, %v938
  %v941 = vunpack.c.l.s4 1966171168
  %v942 = vunpack.c.0.s8 %v941
  %v943 = vlaneseq
  %v944 = vshrl.u32 %v943, 7
  %v945 = vsub.s32 %v942, %v944
  %v946 = vrot.slane %v932, %v945
  %s949 = scalar_lea.vmem %s2, 80
  %v950 = vld [vmem:[%s949] sm:$0xff]
  %v951 = vld [vmem:[%s949 + $0x8] sm:$0xff]
  %s952 = scalar_lea.vmem [#allocation2], 80
  %v953 = vld [vmem:[%s952] sm:$0xff]
  %v954 = vld [vmem:[%s952 + $0x8] sm:$0xff]
  %s955 = scalar_lea.vmem [#allocation3], 80
  %v956 = vld [vmem:[%s955] sm:$0xff]
  %v957 = vld [vmem:[%s955 + $0x8] sm:$0xff]
  %v958 = vadd.f32 %v912, %v939
  %v959 = vadd.f32 %v919, %v946
  %v962 = vlaneseq
  %v963 = vshrl.u32 %v962, 7
  %v964 = vsub.s32 0, %v963
  %v965 = vrot.slane %v958, %v964
  %v966 = vlaneseq
  %v967 = vshrl.u32 %v966, 7
  %v968 = vsub.s32 0, %v967
  %v969 = vrot.slane %v959, %v968
  %v972 = vmul.f32 %v950, %v965
  %v973 = vmul.f32 %v951, %v965
  %v974 = vmul.f32 %v950, %v969
  %v975 = vmul.f32 %v951, %v969
  %v976 = vlaneseq
  %v977 = vshrl.u32 %v976, 7
  %v978 = vsub.s32 0, %v977
  %v979 = vrot.slane %v939, %v978
  %v980 = vlaneseq
  %v981 = vshrl.u32 %v980, 7
  %v982 = vsub.s32 0, %v981
  %v983 = vrot.slane %v946, %v982
  %v986 = vmul.f32 %v979, %v953
  %v987 = vmul.f32 %v979, %v954
  %v988 = vmul.f32 %v983, %v953
  %v989 = vmul.f32 %v983, %v954
  %v990 = vsub.f32 %v972, %v986
  %v991 = vsub.f32 %v973, %v987
  %v992 = vsub.f32 %v974, %v988
  %v993 = vsub.f32 %v975, %v989
  %v994 = vadd.f32 %v869, %v990
  %v995 = vadd.f32 %v870, %v991
  %v996 = vadd.f32 %v871, %v992
  %v997 = vadd.f32 %v872, %v993
  %v998 = vlaneseq
  %v999 = vshrl.u32 %v998, 7
  %v1000 = vsub.s32 0, %v999
  %v1001 = vrot.slane %v912, %v1000
  %v1002 = vlaneseq
  %v1003 = vshrl.u32 %v1002, 7
  %v1004 = vsub.s32 0, %v1003
  %v1005 = vrot.slane %v919, %v1004
  %v1008 = vmul.f32 %v1001, %v956
  %v1009 = vmul.f32 %v1001, %v957
  %v1010 = vmul.f32 %v1005, %v956
  %v1011 = vmul.f32 %v1005, %v957
  %v1012 = vadd.f32 %v972, %v1008
  %v1013 = vadd.f32 %v973, %v1009
  %v1014 = vadd.f32 %v974, %v1010
  %v1015 = vadd.f32 %v975, %v1011
  %v1016 = vadd.f32 %v891, %v1012
  %v1017 = vadd.f32 %v892, %v1013
  %v1018 = vadd.f32 %v893, %v1014
  %v1019 = vadd.f32 %v894, %v1015
  %s1020 = scalar_lea.vmem %s0, 12
  %v1021 = vld [vmem:[%s1020] sm:$0x3]
  %v1024 = vunpack.c.l.s4 1966171168
  %v1025 = vunpack.c.0.s8 %v1024
  %v1026 = vlaneseq
  %v1027 = vshrl.u32 %v1026, 7
  %v1028 = vsub.s32 %v1025, %v1027
  %v1029 = vrot.slane %v1021, %v1028
  %v1030 = vcombine.high %v1029, %v1029
  %v1032 = vunpack.c.l.s4 1966171168
  %v1033 = vunpack.c.0.s8 %v1032
  %v1034 = vlaneseq
  %v1035 = vshrl.u32 %v1034, 7
  %v1036 = vsub.s32 %v1033, %v1035
  %v1037 = vrot.slane %v1029, %v1036
  %v1039 = vunpack.c.l.s4 1966171168
  %v1040 = vunpack.c.0.s8 %v1039
  %v1041 = vlaneseq
  %v1042 = vshrl.u32 %v1041, 7
  %v1043 = vsub.s32 %v1040, %v1042
  %v1044 = vrot.slane %v1030, %v1043
  %s1047 = scalar_lea.vmem %s1, 12
  %v1048 = vld [vmem:[%s1047] sm:$0x3]
  %v1051 = vunpack.c.l.s4 1966171168
  %v1052 = vunpack.c.0.s8 %v1051
  %v1053 = vlaneseq
  %v1054 = vshrl.u32 %v1053, 7
  %v1055 = vsub.s32 %v1052, %v1054
  %v1056 = vrot.slane %v1048, %v1055
  %v1057 = vcombine.high %v1056, %v1056
  %v1059 = vunpack.c.l.s4 1966171168
  %v1060 = vunpack.c.0.s8 %v1059
  %v1061 = vlaneseq
  %v1062 = vshrl.u32 %v1061, 7
  %v1063 = vsub.s32 %v1060, %v1062
  %v1064 = vrot.slane %v1056, %v1063
  %v1066 = vunpack.c.l.s4 1966171168
  %v1067 = vunpack.c.0.s8 %v1066
  %v1068 = vlaneseq
  %v1069 = vshrl.u32 %v1068, 7
  %v1070 = vsub.s32 %v1067, %v1069
  %v1071 = vrot.slane %v1057, %v1070
  %s1074 = scalar_lea.vmem %s2, 96
  %v1075 = vld [vmem:[%s1074] sm:$0xff]
  %v1076 = vld [vmem:[%s1074 + $0x8] sm:$0xff]
  %s1077 = scalar_lea.vmem [#allocation2], 96
  %v1078 = vld [vmem:[%s1077] sm:$0xff]
  %v1079 = vld [vmem:[%s1077 + $0x8] sm:$0xff]
  %s1080 = scalar_lea.vmem [#allocation3], 96
  %v1081 = vld [vmem:[%s1080] sm:$0xff]
  %v1082 = vld [vmem:[%s1080 + $0x8] sm:$0xff]
  %v1083 = vadd.f32 %v1037, %v1064
  %v1084 = vadd.f32 %v1044, %v1071
  %v1087 = vlaneseq
  %v1088 = vshrl.u32 %v1087, 7
  %v1089 = vsub.s32 0, %v1088
  %v1090 = vrot.slane %v1083, %v1089
  %v1091 = vlaneseq
  %v1092 = vshrl.u32 %v1091, 7
  %v1093 = vsub.s32 0, %v1092
  %v1094 = vrot.slane %v1084, %v1093
  %v1097 = vmul.f32 %v1075, %v1090
  %v1098 = vmul.f32 %v1076, %v1090
  %v1099 = vmul.f32 %v1075, %v1094
  %v1100 = vmul.f32 %v1076, %v1094
  %v1101 = vlaneseq
  %v1102 = vshrl.u32 %v1101, 7
  %v1103 = vsub.s32 0, %v1102
  %v1104 = vrot.slane %v1064, %v1103
  %v1105 = vlaneseq
  %v1106 = vshrl.u32 %v1105, 7
  %v1107 = vsub.s32 0, %v1106
  %v1108 = vrot.slane %v1071, %v1107
  %v1111 = vmul.f32 %v1104, %v1078
  %v1112 = vmul.f32 %v1104, %v1079
  %v1113 = vmul.f32 %v1108, %v1078
  %v1114 = vmul.f32 %v1108, %v1079
  %v1115 = vsub.f32 %v1097, %v1111
  %v1116 = vsub.f32 %v1098, %v1112
  %v1117 = vsub.f32 %v1099, %v1113
  %v1118 = vsub.f32 %v1100, %v1114
  %v1119 = vadd.f32 %v994, %v1115
  %v1120 = vadd.f32 %v995, %v1116
  %v1121 = vadd.f32 %v996, %v1117
  %v1122 = vadd.f32 %v997, %v1118
  %v1123 = vlaneseq
  %v1124 = vshrl.u32 %v1123, 7
  %v1125 = vsub.s32 0, %v1124
  %v1126 = vrot.slane %v1037, %v1125
  %v1127 = vlaneseq
  %v1128 = vshrl.u32 %v1127, 7
  %v1129 = vsub.s32 0, %v1128
  %v1130 = vrot.slane %v1044, %v1129
  %v1133 = vmul.f32 %v1126, %v1081
  %v1134 = vmul.f32 %v1126, %v1082
  %v1135 = vmul.f32 %v1130, %v1081
  %v1136 = vmul.f32 %v1130, %v1082
  %v1137 = vadd.f32 %v1097, %v1133
  %v1138 = vadd.f32 %v1098, %v1134
  %v1139 = vadd.f32 %v1099, %v1135
  %v1140 = vadd.f32 %v1100, %v1136
  %v1141 = vadd.f32 %v1016, %v1137
  %v1142 = vadd.f32 %v1017, %v1138
  %v1143 = vadd.f32 %v1018, %v1139
  %v1144 = vadd.f32 %v1019, %v1140
  %s1145 = scalar_lea.vmem %s0, 14
  %v1146 = vld [vmem:[%s1145] sm:$0x3]
  %v1149 = vunpack.c.l.s4 1966171168
  %v1150 = vunpack.c.0.s8 %v1149
  %v1151 = vlaneseq
  %v1152 = vshrl.u32 %v1151, 7
  %v1153 = vsub.s32 %v1150, %v1152
  %v1154 = vrot.slane %v1146, %v1153
  %v1155 = vcombine.high %v1154, %v1154
  %v1157 = vunpack.c.l.s4 1966171168
  %v1158 = vunpack.c.0.s8 %v1157
  %v1159 = vlaneseq
  %v1160 = vshrl.u32 %v1159, 7
  %v1161 = vsub.s32 %v1158, %v1160
  %v1162 = vrot.slane %v1154, %v1161
  %v1164 = vunpack.c.l.s4 1966171168
  %v1165 = vunpack.c.0.s8 %v1164
  %v1166 = vlaneseq
  %v1167 = vshrl.u32 %v1166, 7
  %v1168 = vsub.s32 %v1165, %v1167
  %v1169 = vrot.slane %v1155, %v1168
  %s1172 = scalar_lea.vmem %s1, 14
  %v1173 = vld [vmem:[%s1172] sm:$0x3]
  %v1176 = vunpack.c.l.s4 1966171168
  %v1177 = vunpack.c.0.s8 %v1176
  %v1178 = vlaneseq
  %v1179 = vshrl.u32 %v1178, 7
  %v1180 = vsub.s32 %v1177, %v1179
  %v1181 = vrot.slane %v1173, %v1180
  %v1182 = vcombine.high %v1181, %v1181
  %v1184 = vunpack.c.l.s4 1966171168
  %v1185 = vunpack.c.0.s8 %v1184
  %v1186 = vlaneseq
  %v1187 = vshrl.u32 %v1186, 7
  %v1188 = vsub.s32 %v1185, %v1187
  %v1189 = vrot.slane %v1181, %v1188
  %v1191 = vunpack.c.l.s4 1966171168
  %v1192 = vunpack.c.0.s8 %v1191
  %v1193 = vlaneseq
  %v1194 = vshrl.u32 %v1193, 7
  %v1195 = vsub.s32 %v1192, %v1194
  %v1196 = vrot.slane %v1182, %v1195
  %s1199 = scalar_lea.vmem %s2, 112
  %v1200 = vld [vmem:[%s1199] sm:$0xff]
  %v1201 = vld [vmem:[%s1199 + $0x8] sm:$0xff]
  %s1202 = scalar_lea.vmem [#allocation2], 112
  %v1203 = vld [vmem:[%s1202] sm:$0xff]
  %v1204 = vld [vmem:[%s1202 + $0x8] sm:$0xff]
  %s1205 = scalar_lea.vmem [#allocation3], 112
  %v1206 = vld [vmem:[%s1205] sm:$0xff]
  %v1207 = vld [vmem:[%s1205 + $0x8] sm:$0xff]
  %v1208 = vadd.f32 %v1162, %v1189
  %v1209 = vadd.f32 %v1169, %v1196
  %v1212 = vlaneseq
  %v1213 = vshrl.u32 %v1212, 7
  %v1214 = vsub.s32 0, %v1213
  %v1215 = vrot.slane %v1208, %v1214
  %v1216 = vlaneseq
  %v1217 = vshrl.u32 %v1216, 7
  %v1218 = vsub.s32 0, %v1217
  %v1219 = vrot.slane %v1209, %v1218
  %v1222 = vmul.f32 %v1200, %v1215
  %v1223 = vmul.f32 %v1201, %v1215
  %v1224 = vmul.f32 %v1200, %v1219
  %v1225 = vmul.f32 %v1201, %v1219
  %v1226 = vlaneseq
  %v1227 = vshrl.u32 %v1226, 7
  %v1228 = vsub.s32 0, %v1227
  %v1229 = vrot.slane %v1189, %v1228
  %v1230 = vlaneseq
  %v1231 = vshrl.u32 %v1230, 7
  %v1232 = vsub.s32 0, %v1231
  %v1233 = vrot.slane %v1196, %v1232
  %v1236 = vmul.f32 %v1229, %v1203
  %v1237 = vmul.f32 %v1229, %v1204
  %v1238 = vmul.f32 %v1233, %v1203
  %v1239 = vmul.f32 %v1233, %v1204
  %v1240 = vsub.f32 %v1222, %v1236
  %v1241 = vsub.f32 %v1223, %v1237
  %v1242 = vsub.f32 %v1224, %v1238
  %v1243 = vsub.f32 %v1225, %v1239
  %v1244 = vadd.f32 %v1119, %v1240
  %v1245 = vadd.f32 %v1120, %v1241
  %v1246 = vadd.f32 %v1121, %v1242
  %v1247 = vadd.f32 %v1122, %v1243
  %v1248 = vlaneseq
  %v1249 = vshrl.u32 %v1248, 7
  %v1250 = vsub.s32 0, %v1249
  %v1251 = vrot.slane %v1162, %v1250
  %v1252 = vlaneseq
  %v1253 = vshrl.u32 %v1252, 7
  %v1254 = vsub.s32 0, %v1253
  %v1255 = vrot.slane %v1169, %v1254
  %v1258 = vmul.f32 %v1251, %v1206
  %v1259 = vmul.f32 %v1251, %v1207
  %v1260 = vmul.f32 %v1255, %v1206
  %v1261 = vmul.f32 %v1255, %v1207
  %v1262 = vadd.f32 %v1222, %v1258
  %v1263 = vadd.f32 %v1223, %v1259
  %v1264 = vadd.f32 %v1224, %v1260
  %v1265 = vadd.f32 %v1225, %v1261
  %v1266 = vadd.f32 %v1141, %v1262
  %v1267 = vadd.f32 %v1142, %v1263
  %v1268 = vadd.f32 %v1143, %v1264
  %v1269 = vadd.f32 %v1144, %v1265
  %s1270 = scalar_lea.vmem %s0, 16
  %v1271 = vld [vmem:[%s1270] sm:$0x3]
  %v1274 = vunpack.c.l.s4 1966171168
  %v1275 = vunpack.c.0.s8 %v1274
  %v1276 = vlaneseq
  %v1277 = vshrl.u32 %v1276, 7
  %v1278 = vsub.s32 %v1275, %v1277
  %v1279 = vrot.slane %v1271, %v1278
  %v1280 = vcombine.high %v1279, %v1279
  %v1282 = vunpack.c.l.s4 1966171168
  %v1283 = vunpack.c.0.s8 %v1282
  %v1284 = vlaneseq
  %v1285 = vshrl.u32 %v1284, 7
  %v1286 = vsub.s32 %v1283, %v1285
  %v1287 = vrot.slane %v1279, %v1286
  %v1289 = vunpack.c.l.s4 1966171168
  %v1290 = vunpack.c.0.s8 %v1289
  %v1291 = vlaneseq
  %v1292 = vshrl.u32 %v1291, 7
  %v1293 = vsub.s32 %v1290, %v1292
  %v1294 = vrot.slane %v1280, %v1293
  %s1297 = scalar_lea.vmem %s1, 16
  %v1298 = vld [vmem:[%s1297] sm:$0x3]
  %v1301 = vunpack.c.l.s4 1966171168
  %v1302 = vunpack.c.0.s8 %v1301
  %v1303 = vlaneseq
  %v1304 = vshrl.u32 %v1303, 7
  %v1305 = vsub.s32 %v1302, %v1304
  %v1306 = vrot.slane %v1298, %v1305
  %v1307 = vcombine.high %v1306, %v1306
  %v1309 = vunpack.c.l.s4 1966171168
  %v1310 = vunpack.c.0.s8 %v1309
  %v1311 = vlaneseq
  %v1312 = vshrl.u32 %v1311, 7
  %v1313 = vsub.s32 %v1310, %v1312
  %v1314 = vrot.slane %v1306, %v1313
  %v1316 = vunpack.c.l.s4 1966171168
  %v1317 = vunpack.c.0.s8 %v1316
  %v1318 = vlaneseq
  %v1319 = vshrl.u32 %v1318, 7
  %v1320 = vsub.s32 %v1317, %v1319
  %v1321 = vrot.slane %v1307, %v1320
  %s1324 = scalar_lea.vmem %s2, 128
  %v1325 = vld [vmem:[%s1324] sm:$0xff]
  %v1326 = vld [vmem:[%s1324 + $0x8] sm:$0xff]
  %s1327 = scalar_lea.vmem [#allocation2], 128
  %v1328 = vld [vmem:[%s1327] sm:$0xff]
  %v1329 = vld [vmem:[%s1327 + $0x8] sm:$0xff]
  %s1330 = scalar_lea.vmem [#allocation3], 128
  %v1331 = vld [vmem:[%s1330] sm:$0xff]
  %v1332 = vld [vmem:[%s1330 + $0x8] sm:$0xff]
  %v1333 = vadd.f32 %v1287, %v1314
  %v1334 = vadd.f32 %v1294, %v1321
  %v1337 = vlaneseq
  %v1338 = vshrl.u32 %v1337, 7
  %v1339 = vsub.s32 0, %v1338
  %v1340 = vrot.slane %v1333, %v1339
  %v1341 = vlaneseq
  %v1342 = vshrl.u32 %v1341, 7
  %v1343 = vsub.s32 0, %v1342
  %v1344 = vrot.slane %v1334, %v1343
  %v1347 = vmul.f32 %v1325, %v1340
  %v1348 = vmul.f32 %v1326, %v1340
  %v1349 = vmul.f32 %v1325, %v1344
  %v1350 = vmul.f32 %v1326, %v1344
  %v1351 = vlaneseq
  %v1352 = vshrl.u32 %v1351, 7
  %v1353 = vsub.s32 0, %v1352
  %v1354 = vrot.slane %v1314, %v1353
  %v1355 = vlaneseq
  %v1356 = vshrl.u32 %v1355, 7
  %v1357 = vsub.s32 0, %v1356
  %v1358 = vrot.slane %v1321, %v1357
  %v1361 = vmul.f32 %v1354, %v1328
  %v1362 = vmul.f32 %v1354, %v1329
  %v1363 = vmul.f32 %v1358, %v1328
  %v1364 = vmul.f32 %v1358, %v1329
  %v1365 = vsub.f32 %v1347, %v1361
  %v1366 = vsub.f32 %v1348, %v1362
  %v1367 = vsub.f32 %v1349, %v1363
  %v1368 = vsub.f32 %v1350, %v1364
  %v1369 = vadd.f32 %v1244, %v1365
  %v1370 = vadd.f32 %v1245, %v1366
  %v1371 = vadd.f32 %v1246, %v1367
  %v1372 = vadd.f32 %v1247, %v1368
  %v1373 = vlaneseq
  %v1374 = vshrl.u32 %v1373, 7
  %v1375 = vsub.s32 0, %v1374
  %v1376 = vrot.slane %v1287, %v1375
  %v1377 = vlaneseq
  %v1378 = vshrl.u32 %v1377, 7
  %v1379 = vsub.s32 0, %v1378
  %v1380 = vrot.slane %v1294, %v1379
  %v1383 = vmul.f32 %v1376, %v1331
  %v1384 = vmul.f32 %v1376, %v1332
  %v1385 = vmul.f32 %v1380, %v1331
  %v1386 = vmul.f32 %v1380, %v1332
  %v1387 = vadd.f32 %v1347, %v1383
  %v1388 = vadd.f32 %v1348, %v1384
  %v1389 = vadd.f32 %v1349, %v1385
  %v1390 = vadd.f32 %v1350, %v1386
  %v1391 = vadd.f32 %v1266, %v1387
  %v1392 = vadd.f32 %v1267, %v1388
  %v1393 = vadd.f32 %v1268, %v1389
  %v1394 = vadd.f32 %v1269, %v1390
  %s1395 = scalar_lea.vmem %s0, 18
  %v1396 = vld [vmem:[%s1395] sm:$0x3]
  %v1399 = vunpack.c.l.s4 1966171168
  %v1400 = vunpack.c.0.s8 %v1399
  %v1401 = vlaneseq
  %v1402 = vshrl.u32 %v1401, 7
  %v1403 = vsub.s32 %v1400, %v1402
  %v1404 = vrot.slane %v1396, %v1403
  %v1405 = vcombine.high %v1404, %v1404
  %v1407 = vunpack.c.l.s4 1966171168
  %v1408 = vunpack.c.0.s8 %v1407
  %v1409 = vlaneseq
  %v1410 = vshrl.u32 %v1409, 7
  %v1411 = vsub.s32 %v1408, %v1410
  %v1412 = vrot.slane %v1404, %v1411
  %v1414 = vunpack.c.l.s4 1966171168
  %v1415 = vunpack.c.0.s8 %v1414
  %v1416 = vlaneseq
  %v1417 = vshrl.u32 %v1416, 7
  %v1418 = vsub.s32 %v1415, %v1417
  %v1419 = vrot.slane %v1405, %v1418
  %s1422 = scalar_lea.vmem %s1, 18
  %v1423 = vld [vmem:[%s1422] sm:$0x3]
  %v1426 = vunpack.c.l.s4 1966171168
  %v1427 = vunpack.c.0.s8 %v1426
  %v1428 = vlaneseq
  %v1429 = vshrl.u32 %v1428, 7
  %v1430 = vsub.s32 %v1427, %v1429
  %v1431 = vrot.slane %v1423, %v1430
  %v1432 = vcombine.high %v1431, %v1431
  %v1434 = vunpack.c.l.s4 1966171168
  %v1435 = vunpack.c.0.s8 %v1434
  %v1436 = vlaneseq
  %v1437 = vshrl.u32 %v1436, 7
  %v1438 = vsub.s32 %v1435, %v1437
  %v1439 = vrot.slane %v1431, %v1438
  %v1441 = vunpack.c.l.s4 1966171168
  %v1442 = vunpack.c.0.s8 %v1441
  %v1443 = vlaneseq
  %v1444 = vshrl.u32 %v1443, 7
  %v1445 = vsub.s32 %v1442, %v1444
  %v1446 = vrot.slane %v1432, %v1445
  %s1449 = scalar_lea.vmem %s2, 144
  %v1450 = vld [vmem:[%s1449] sm:$0xff]
  %v1451 = vld [vmem:[%s1449 + $0x8] sm:$0xff]
  %s1452 = scalar_lea.vmem [#allocation2], 144
  %v1453 = vld [vmem:[%s1452] sm:$0xff]
  %v1454 = vld [vmem:[%s1452 + $0x8] sm:$0xff]
  %s1455 = scalar_lea.vmem [#allocation3], 144
  %v1456 = vld [vmem:[%s1455] sm:$0xff]
  %v1457 = vld [vmem:[%s1455 + $0x8] sm:$0xff]
  %v1458 = vadd.f32 %v1412, %v1439
  %v1459 = vadd.f32 %v1419, %v1446
  %v1462 = vlaneseq
  %v1463 = vshrl.u32 %v1462, 7
  %v1464 = vsub.s32 0, %v1463
  %v1465 = vrot.slane %v1458, %v1464
  %v1466 = vlaneseq
  %v1467 = vshrl.u32 %v1466, 7
  %v1468 = vsub.s32 0, %v1467
  %v1469 = vrot.slane %v1459, %v1468
  %v1472 = vmul.f32 %v1450, %v1465
  %v1473 = vmul.f32 %v1451, %v1465
  %v1474 = vmul.f32 %v1450, %v1469
  %v1475 = vmul.f32 %v1451, %v1469
  %v1476 = vlaneseq
  %v1477 = vshrl.u32 %v1476, 7
  %v1478 = vsub.s32 0, %v1477
  %v1479 = vrot.slane %v1439, %v1478
  %v1480 = vlaneseq
  %v1481 = vshrl.u32 %v1480, 7
  %v1482 = vsub.s32 0, %v1481
  %v1483 = vrot.slane %v1446, %v1482
  %v1486 = vmul.f32 %v1479, %v1453
  %v1487 = vmul.f32 %v1479, %v1454
  %v1488 = vmul.f32 %v1483, %v1453
  %v1489 = vmul.f32 %v1483, %v1454
  %v1490 = vsub.f32 %v1472, %v1486
  %v1491 = vsub.f32 %v1473, %v1487
  %v1492 = vsub.f32 %v1474, %v1488
  %v1493 = vsub.f32 %v1475, %v1489
  %v1494 = vadd.f32 %v1369, %v1490
  %v1495 = vadd.f32 %v1370, %v1491
  %v1496 = vadd.f32 %v1371, %v1492
  %v1497 = vadd.f32 %v1372, %v1493
  %v1498 = vlaneseq
  %v1499 = vshrl.u32 %v1498, 7
  %v1500 = vsub.s32 0, %v1499
  %v1501 = vrot.slane %v1412, %v1500
  %v1502 = vlaneseq
  %v1503 = vshrl.u32 %v1502, 7
  %v1504 = vsub.s32 0, %v1503
  %v1505 = vrot.slane %v1419, %v1504
  %v1508 = vmul.f32 %v1501, %v1456
  %v1509 = vmul.f32 %v1501, %v1457
  %v1510 = vmul.f32 %v1505, %v1456
  %v1511 = vmul.f32 %v1505, %v1457
  %v1512 = vadd.f32 %v1472, %v1508
  %v1513 = vadd.f32 %v1473, %v1509
  %v1514 = vadd.f32 %v1474, %v1510
  %v1515 = vadd.f32 %v1475, %v1511
  %v1516 = vadd.f32 %v1391, %v1512
  %v1517 = vadd.f32 %v1392, %v1513
  %v1518 = vadd.f32 %v1393, %v1514
  %v1519 = vadd.f32 %v1394, %v1515
  %s1520 = scalar_lea.vmem %s0, 20
  %v1521 = vld [vmem:[%s1520] sm:$0x3]
  %v1524 = vunpack.c.l.s4 1966171168
  %v1525 = vunpack.c.0.s8 %v1524
  %v1526 = vlaneseq
  %v1527 = vshrl.u32 %v1526, 7
  %v1528 = vsub.s32 %v1525, %v1527
  %v1529 = vrot.slane %v1521, %v1528
  %v1530 = vcombine.high %v1529, %v1529
  %v1532 = vunpack.c.l.s4 1966171168
  %v1533 = vunpack.c.0.s8 %v1532
  %v1534 = vlaneseq
  %v1535 = vshrl.u32 %v1534, 7
  %v1536 = vsub.s32 %v1533, %v1535
  %v1537 = vrot.slane %v1529, %v1536
  %v1539 = vunpack.c.l.s4 1966171168
  %v1540 = vunpack.c.0.s8 %v1539
  %v1541 = vlaneseq
  %v1542 = vshrl.u32 %v1541, 7
  %v1543 = vsub.s32 %v1540, %v1542
  %v1544 = vrot.slane %v1530, %v1543
  %s1547 = scalar_lea.vmem %s1, 20
  %v1548 = vld [vmem:[%s1547] sm:$0x3]
  %v1551 = vunpack.c.l.s4 1966171168
  %v1552 = vunpack.c.0.s8 %v1551
  %v1553 = vlaneseq
  %v1554 = vshrl.u32 %v1553, 7
  %v1555 = vsub.s32 %v1552, %v1554
  %v1556 = vrot.slane %v1548, %v1555
  %v1557 = vcombine.high %v1556, %v1556
  %v1559 = vunpack.c.l.s4 1966171168
  %v1560 = vunpack.c.0.s8 %v1559
  %v1561 = vlaneseq
  %v1562 = vshrl.u32 %v1561, 7
  %v1563 = vsub.s32 %v1560, %v1562
  %v1564 = vrot.slane %v1556, %v1563
  %v1566 = vunpack.c.l.s4 1966171168
  %v1567 = vunpack.c.0.s8 %v1566
  %v1568 = vlaneseq
  %v1569 = vshrl.u32 %v1568, 7
  %v1570 = vsub.s32 %v1567, %v1569
  %v1571 = vrot.slane %v1557, %v1570
  %s1574 = scalar_lea.vmem %s2, 160
  %v1575 = vld [vmem:[%s1574] sm:$0xff]
  %v1576 = vld [vmem:[%s1574 + $0x8] sm:$0xff]
  %s1577 = scalar_lea.vmem [#allocation2], 160
  %v1578 = vld [vmem:[%s1577] sm:$0xff]
  %v1579 = vld [vmem:[%s1577 + $0x8] sm:$0xff]
  %s1580 = scalar_lea.vmem [#allocation3], 160
  %v1581 = vld [vmem:[%s1580] sm:$0xff]
  %v1582 = vld [vmem:[%s1580 + $0x8] sm:$0xff]
  %v1583 = vadd.f32 %v1537, %v1564
  %v1584 = vadd.f32 %v1544, %v1571
  %v1587 = vlaneseq
  %v1588 = vshrl.u32 %v1587, 7
  %v1589 = vsub.s32 0, %v1588
  %v1590 = vrot.slane %v1583, %v1589
  %v1591 = vlaneseq
  %v1592 = vshrl.u32 %v1591, 7
  %v1593 = vsub.s32 0, %v1592
  %v1594 = vrot.slane %v1584, %v1593
  %v1597 = vmul.f32 %v1575, %v1590
  %v1598 = vmul.f32 %v1576, %v1590
  %v1599 = vmul.f32 %v1575, %v1594
  %v1600 = vmul.f32 %v1576, %v1594
  %v1601 = vlaneseq
  %v1602 = vshrl.u32 %v1601, 7
  %v1603 = vsub.s32 0, %v1602
  %v1604 = vrot.slane %v1564, %v1603
  %v1605 = vlaneseq
  %v1606 = vshrl.u32 %v1605, 7
  %v1607 = vsub.s32 0, %v1606
  %v1608 = vrot.slane %v1571, %v1607
  %v1611 = vmul.f32 %v1604, %v1578
  %v1612 = vmul.f32 %v1604, %v1579
  %v1613 = vmul.f32 %v1608, %v1578
  %v1614 = vmul.f32 %v1608, %v1579
  %v1615 = vsub.f32 %v1597, %v1611
  %v1616 = vsub.f32 %v1598, %v1612
  %v1617 = vsub.f32 %v1599, %v1613
  %v1618 = vsub.f32 %v1600, %v1614
  %v1619 = vadd.f32 %v1494, %v1615
  %v1620 = vadd.f32 %v1495, %v1616
  %v1621 = vadd.f32 %v1496, %v1617
  %v1622 = vadd.f32 %v1497, %v1618
  %v1623 = vlaneseq
  %v1624 = vshrl.u32 %v1623, 7
  %v1625 = vsub.s32 0, %v1624
  %v1626 = vrot.slane %v1537, %v1625
  %v1627 = vlaneseq
  %v1628 = vshrl.u32 %v1627, 7
  %v1629 = vsub.s32 0, %v1628
  %v1630 = vrot.slane %v1544, %v1629
  %v1633 = vmul.f32 %v1626, %v1581
  %v1634 = vmul.f32 %v1626, %v1582
  %v1635 = vmul.f32 %v1630, %v1581
  %v1636 = vmul.f32 %v1630, %v1582
  %v1637 = vadd.f32 %v1597, %v1633
  %v1638 = vadd.f32 %v1598, %v1634
  %v1639 = vadd.f32 %v1599, %v1635
  %v1640 = vadd.f32 %v1600, %v1636
  %v1641 = vadd.f32 %v1516, %v1637
  %v1642 = vadd.f32 %v1517, %v1638
  %v1643 = vadd.f32 %v1518, %v1639
  %v1644 = vadd.f32 %v1519, %v1640
  %s1645 = scalar_lea.vmem %s0, 22
  %v1646 = vld [vmem:[%s1645] sm:$0x3]
  %v1649 = vunpack.c.l.s4 1966171168
  %v1650 = vunpack.c.0.s8 %v1649
  %v1651 = vlaneseq
  %v1652 = vshrl.u32 %v1651, 7
  %v1653 = vsub.s32 %v1650, %v1652
  %v1654 = vrot.slane %v1646, %v1653
  %v1655 = vcombine.high %v1654, %v1654
  %v1657 = vunpack.c.l.s4 1966171168
  %v1658 = vunpack.c.0.s8 %v1657
  %v1659 = vlaneseq
  %v1660 = vshrl.u32 %v1659, 7
  %v1661 = vsub.s32 %v1658, %v1660
  %v1662 = vrot.slane %v1654, %v1661
  %v1664 = vunpack.c.l.s4 1966171168
  %v1665 = vunpack.c.0.s8 %v1664
  %v1666 = vlaneseq
  %v1667 = vshrl.u32 %v1666, 7
  %v1668 = vsub.s32 %v1665, %v1667
  %v1669 = vrot.slane %v1655, %v1668
  %s1672 = scalar_lea.vmem %s1, 22
  %v1673 = vld [vmem:[%s1672] sm:$0x3]
  %v1676 = vunpack.c.l.s4 1966171168
  %v1677 = vunpack.c.0.s8 %v1676
  %v1678 = vlaneseq
  %v1679 = vshrl.u32 %v1678, 7
  %v1680 = vsub.s32 %v1677, %v1679
  %v1681 = vrot.slane %v1673, %v1680
  %v1682 = vcombine.high %v1681, %v1681
  %v1684 = vunpack.c.l.s4 1966171168
  %v1685 = vunpack.c.0.s8 %v1684
  %v1686 = vlaneseq
  %v1687 = vshrl.u32 %v1686, 7
  %v1688 = vsub.s32 %v1685, %v1687
  %v1689 = vrot.slane %v1681, %v1688
  %v1691 = vunpack.c.l.s4 1966171168
  %v1692 = vunpack.c.0.s8 %v1691
  %v1693 = vlaneseq
  %v1694 = vshrl.u32 %v1693, 7
  %v1695 = vsub.s32 %v1692, %v1694
  %v1696 = vrot.slane %v1682, %v1695
  %s1699 = scalar_lea.vmem %s2, 176
  %v1700 = vld [vmem:[%s1699] sm:$0xff]
  %v1701 = vld [vmem:[%s1699 + $0x8] sm:$0xff]
  %s1702 = scalar_lea.vmem [#allocation2], 176
  %v1703 = vld [vmem:[%s1702] sm:$0xff]
  %v1704 = vld [vmem:[%s1702 + $0x8] sm:$0xff]
  %s1705 = scalar_lea.vmem [#allocation3], 176
  %v1706 = vld [vmem:[%s1705] sm:$0xff]
  %v1707 = vld [vmem:[%s1705 + $0x8] sm:$0xff]
  %v1708 = vadd.f32 %v1662, %v1689
  %v1709 = vadd.f32 %v1669, %v1696
  %v1712 = vlaneseq
  %v1713 = vshrl.u32 %v1712, 7
  %v1714 = vsub.s32 0, %v1713
  %v1715 = vrot.slane %v1708, %v1714
  %v1716 = vlaneseq
  %v1717 = vshrl.u32 %v1716, 7
  %v1718 = vsub.s32 0, %v1717
  %v1719 = vrot.slane %v1709, %v1718
  %v1722 = vmul.f32 %v1700, %v1715
  %v1723 = vmul.f32 %v1701, %v1715
  %v1724 = vmul.f32 %v1700, %v1719
  %v1725 = vmul.f32 %v1701, %v1719
  %v1726 = vlaneseq
  %v1727 = vshrl.u32 %v1726, 7
  %v1728 = vsub.s32 0, %v1727
  %v1729 = vrot.slane %v1689, %v1728
  %v1730 = vlaneseq
  %v1731 = vshrl.u32 %v1730, 7
  %v1732 = vsub.s32 0, %v1731
  %v1733 = vrot.slane %v1696, %v1732
  %v1736 = vmul.f32 %v1729, %v1703
  %v1737 = vmul.f32 %v1729, %v1704
  %v1738 = vmul.f32 %v1733, %v1703
  %v1739 = vmul.f32 %v1733, %v1704
  %v1740 = vsub.f32 %v1722, %v1736
  %v1741 = vsub.f32 %v1723, %v1737
  %v1742 = vsub.f32 %v1724, %v1738
  %v1743 = vsub.f32 %v1725, %v1739
  %v1744 = vadd.f32 %v1619, %v1740
  %v1745 = vadd.f32 %v1620, %v1741
  %v1746 = vadd.f32 %v1621, %v1742
  %v1747 = vadd.f32 %v1622, %v1743
  %v1748 = vlaneseq
  %v1749 = vshrl.u32 %v1748, 7
  %v1750 = vsub.s32 0, %v1749
  %v1751 = vrot.slane %v1662, %v1750
  %v1752 = vlaneseq
  %v1753 = vshrl.u32 %v1752, 7
  %v1754 = vsub.s32 0, %v1753
  %v1755 = vrot.slane %v1669, %v1754
  %v1758 = vmul.f32 %v1751, %v1706
  %v1759 = vmul.f32 %v1751, %v1707
  %v1760 = vmul.f32 %v1755, %v1706
  %v1761 = vmul.f32 %v1755, %v1707
  %v1762 = vadd.f32 %v1722, %v1758
  %v1763 = vadd.f32 %v1723, %v1759
  %v1764 = vadd.f32 %v1724, %v1760
  %v1765 = vadd.f32 %v1725, %v1761
  %v1766 = vadd.f32 %v1641, %v1762
  %v1767 = vadd.f32 %v1642, %v1763
  %v1768 = vadd.f32 %v1643, %v1764
  %v1769 = vadd.f32 %v1644, %v1765
  %s1770 = scalar_lea.vmem %s0, 24
  %v1771 = vld [vmem:[%s1770] sm:$0x3]
  %v1774 = vunpack.c.l.s4 1966171168
  %v1775 = vunpack.c.0.s8 %v1774
  %v1776 = vlaneseq
  %v1777 = vshrl.u32 %v1776, 7
  %v1778 = vsub.s32 %v1775, %v1777
  %v1779 = vrot.slane %v1771, %v1778
  %v1780 = vcombine.high %v1779, %v1779
  %v1782 = vunpack.c.l.s4 1966171168
  %v1783 = vunpack.c.0.s8 %v1782
  %v1784 = vlaneseq
  %v1785 = vshrl.u32 %v1784, 7
  %v1786 = vsub.s32 %v1783, %v1785
  %v1787 = vrot.slane %v1779, %v1786
  %v1789 = vunpack.c.l.s4 1966171168
  %v1790 = vunpack.c.0.s8 %v1789
  %v1791 = vlaneseq
  %v1792 = vshrl.u32 %v1791, 7
  %v1793 = vsub.s32 %v1790, %v1792
  %v1794 = vrot.slane %v1780, %v1793
  %s1797 = scalar_lea.vmem %s1, 24
  %v1798 = vld [vmem:[%s1797] sm:$0x3]
  %v1801 = vunpack.c.l.s4 1966171168
  %v1802 = vunpack.c.0.s8 %v1801
  %v1803 = vlaneseq
  %v1804 = vshrl.u32 %v1803, 7
  %v1805 = vsub.s32 %v1802, %v1804
  %v1806 = vrot.slane %v1798, %v1805
  %v1807 = vcombine.high %v1806, %v1806
  %v1809 = vunpack.c.l.s4 1966171168
  %v1810 = vunpack.c.0.s8 %v1809
  %v1811 = vlaneseq
  %v1812 = vshrl.u32 %v1811, 7
  %v1813 = vsub.s32 %v1810, %v1812
  %v1814 = vrot.slane %v1806, %v1813
  %v1816 = vunpack.c.l.s4 1966171168
  %v1817 = vunpack.c.0.s8 %v1816
  %v1818 = vlaneseq
  %v1819 = vshrl.u32 %v1818, 7
  %v1820 = vsub.s32 %v1817, %v1819
  %v1821 = vrot.slane %v1807, %v1820
  %s1824 = scalar_lea.vmem %s2, 192
  %v1825 = vld [vmem:[%s1824] sm:$0xff]
  %v1826 = vld [vmem:[%s1824 + $0x8] sm:$0xff]
  %s1827 = scalar_lea.vmem [#allocation2], 192
  %v1828 = vld [vmem:[%s1827] sm:$0xff]
  %v1829 = vld [vmem:[%s1827 + $0x8] sm:$0xff]
  %s1830 = scalar_lea.vmem [#allocation3], 192
  %v1831 = vld [vmem:[%s1830] sm:$0xff]
  %v1832 = vld [vmem:[%s1830 + $0x8] sm:$0xff]
  %v1833 = vadd.f32 %v1787, %v1814
  %v1834 = vadd.f32 %v1794, %v1821
  %v1837 = vlaneseq
  %v1838 = vshrl.u32 %v1837, 7
  %v1839 = vsub.s32 0, %v1838
  %v1840 = vrot.slane %v1833, %v1839
  %v1841 = vlaneseq
  %v1842 = vshrl.u32 %v1841, 7
  %v1843 = vsub.s32 0, %v1842
  %v1844 = vrot.slane %v1834, %v1843
  %v1847 = vmul.f32 %v1825, %v1840
  %v1848 = vmul.f32 %v1826, %v1840
  %v1849 = vmul.f32 %v1825, %v1844
  %v1850 = vmul.f32 %v1826, %v1844
  %v1851 = vlaneseq
  %v1852 = vshrl.u32 %v1851, 7
  %v1853 = vsub.s32 0, %v1852
  %v1854 = vrot.slane %v1814, %v1853
  %v1855 = vlaneseq
  %v1856 = vshrl.u32 %v1855, 7
  %v1857 = vsub.s32 0, %v1856
  %v1858 = vrot.slane %v1821, %v1857
  %v1861 = vmul.f32 %v1854, %v1828
  %v1862 = vmul.f32 %v1854, %v1829
  %v1863 = vmul.f32 %v1858, %v1828
  %v1864 = vmul.f32 %v1858, %v1829
  %v1865 = vsub.f32 %v1847, %v1861
  %v1866 = vsub.f32 %v1848, %v1862
  %v1867 = vsub.f32 %v1849, %v1863
  %v1868 = vsub.f32 %v1850, %v1864
  %v1869 = vadd.f32 %v1744, %v1865
  %v1870 = vadd.f32 %v1745, %v1866
  %v1871 = vadd.f32 %v1746, %v1867
  %v1872 = vadd.f32 %v1747, %v1868
  %v1873 = vlaneseq
  %v1874 = vshrl.u32 %v1873, 7
  %v1875 = vsub.s32 0, %v1874
  %v1876 = vrot.slane %v1787, %v1875
  %v1877 = vlaneseq
  %v1878 = vshrl.u32 %v1877, 7
  %v1879 = vsub.s32 0, %v1878
  %v1880 = vrot.slane %v1794, %v1879
  %v1883 = vmul.f32 %v1876, %v1831
  %v1884 = vmul.f32 %v1876, %v1832
  %v1885 = vmul.f32 %v1880, %v1831
  %v1886 = vmul.f32 %v1880, %v1832
  %v1887 = vadd.f32 %v1847, %v1883
  %v1888 = vadd.f32 %v1848, %v1884
  %v1889 = vadd.f32 %v1849, %v1885
  %v1890 = vadd.f32 %v1850, %v1886
  %v1891 = vadd.f32 %v1766, %v1887
  %v1892 = vadd.f32 %v1767, %v1888
  %v1893 = vadd.f32 %v1768, %v1889
  %v1894 = vadd.f32 %v1769, %v1890
  %s1895 = scalar_lea.vmem %s0, 26
  %v1896 = vld [vmem:[%s1895] sm:$0x3]
  %v1899 = vunpack.c.l.s4 1966171168
  %v1900 = vunpack.c.0.s8 %v1899
  %v1901 = vlaneseq
  %v1902 = vshrl.u32 %v1901, 7
  %v1903 = vsub.s32 %v1900, %v1902
  %v1904 = vrot.slane %v1896, %v1903
  %v1905 = vcombine.high %v1904, %v1904
  %v1907 = vunpack.c.l.s4 1966171168
  %v1908 = vunpack.c.0.s8 %v1907
  %v1909 = vlaneseq
  %v1910 = vshrl.u32 %v1909, 7
  %v1911 = vsub.s32 %v1908, %v1910
  %v1912 = vrot.slane %v1904, %v1911
  %v1914 = vunpack.c.l.s4 1966171168
  %v1915 = vunpack.c.0.s8 %v1914
  %v1916 = vlaneseq
  %v1917 = vshrl.u32 %v1916, 7
  %v1918 = vsub.s32 %v1915, %v1917
  %v1919 = vrot.slane %v1905, %v1918
  %s1922 = scalar_lea.vmem %s1, 26
  %v1923 = vld [vmem:[%s1922] sm:$0x3]
  %v1926 = vunpack.c.l.s4 1966171168
  %v1927 = vunpack.c.0.s8 %v1926
  %v1928 = vlaneseq
  %v1929 = vshrl.u32 %v1928, 7
  %v1930 = vsub.s32 %v1927, %v1929
  %v1931 = vrot.slane %v1923, %v1930
  %v1932 = vcombine.high %v1931, %v1931
  %v1934 = vunpack.c.l.s4 1966171168
  %v1935 = vunpack.c.0.s8 %v1934
  %v1936 = vlaneseq
  %v1937 = vshrl.u32 %v1936, 7
  %v1938 = vsub.s32 %v1935, %v1937
  %v1939 = vrot.slane %v1931, %v1938
  %v1941 = vunpack.c.l.s4 1966171168
  %v1942 = vunpack.c.0.s8 %v1941
  %v1943 = vlaneseq
  %v1944 = vshrl.u32 %v1943, 7
  %v1945 = vsub.s32 %v1942, %v1944
  %v1946 = vrot.slane %v1932, %v1945
  %s1949 = scalar_lea.vmem %s2, 208
  %v1950 = vld [vmem:[%s1949] sm:$0xff]
  %v1951 = vld [vmem:[%s1949 + $0x8] sm:$0xff]
  %s1952 = scalar_lea.vmem [#allocation2], 208
  %v1953 = vld [vmem:[%s1952] sm:$0xff]
  %v1954 = vld [vmem:[%s1952 + $0x8] sm:$0xff]
  %s1955 = scalar_lea.vmem [#allocation3], 208
  %v1956 = vld [vmem:[%s1955] sm:$0xff]
  %v1957 = vld [vmem:[%s1955 + $0x8] sm:$0xff]
  %v1958 = vadd.f32 %v1912, %v1939
  %v1959 = vadd.f32 %v1919, %v1946
  %v1962 = vlaneseq
  %v1963 = vshrl.u32 %v1962, 7
  %v1964 = vsub.s32 0, %v1963
  %v1965 = vrot.slane %v1958, %v1964
  %v1966 = vlaneseq
  %v1967 = vshrl.u32 %v1966, 7
  %v1968 = vsub.s32 0, %v1967
  %v1969 = vrot.slane %v1959, %v1968
  %v1972 = vmul.f32 %v1950, %v1965
  %v1973 = vmul.f32 %v1951, %v1965
  %v1974 = vmul.f32 %v1950, %v1969
  %v1975 = vmul.f32 %v1951, %v1969
  %v1976 = vlaneseq
  %v1977 = vshrl.u32 %v1976, 7
  %v1978 = vsub.s32 0, %v1977
  %v1979 = vrot.slane %v1939, %v1978
  %v1980 = vlaneseq
  %v1981 = vshrl.u32 %v1980, 7
  %v1982 = vsub.s32 0, %v1981
  %v1983 = vrot.slane %v1946, %v1982
  %v1986 = vmul.f32 %v1979, %v1953
  %v1987 = vmul.f32 %v1979, %v1954
  %v1988 = vmul.f32 %v1983, %v1953
  %v1989 = vmul.f32 %v1983, %v1954
  %v1990 = vsub.f32 %v1972, %v1986
  %v1991 = vsub.f32 %v1973, %v1987
  %v1992 = vsub.f32 %v1974, %v1988
  %v1993 = vsub.f32 %v1975, %v1989
  %v1994 = vadd.f32 %v1869, %v1990
  %v1995 = vadd.f32 %v1870, %v1991
  %v1996 = vadd.f32 %v1871, %v1992
  %v1997 = vadd.f32 %v1872, %v1993
  %v1998 = vlaneseq
  %v1999 = vshrl.u32 %v1998, 7
  %v2000 = vsub.s32 0, %v1999
  %v2001 = vrot.slane %v1912, %v2000
  %v2002 = vlaneseq
  %v2003 = vshrl.u32 %v2002, 7
  %v2004 = vsub.s32 0, %v2003
  %v2005 = vrot.slane %v1919, %v2004
  %v2008 = vmul.f32 %v2001, %v1956
  %v2009 = vmul.f32 %v2001, %v1957
  %v2010 = vmul.f32 %v2005, %v1956
  %v2011 = vmul.f32 %v2005, %v1957
  %v2012 = vadd.f32 %v1972, %v2008
  %v2013 = vadd.f32 %v1973, %v2009
  %v2014 = vadd.f32 %v1974, %v2010
  %v2015 = vadd.f32 %v1975, %v2011
  %v2016 = vadd.f32 %v1891, %v2012
  %v2017 = vadd.f32 %v1892, %v2013
  %v2018 = vadd.f32 %v1893, %v2014
  %v2019 = vadd.f32 %v1894, %v2015
  %s2020 = scalar_lea.vmem %s0, 28
  %v2021 = vld [vmem:[%s2020] sm:$0x3]
  %v2024 = vunpack.c.l.s4 1966171168
  %v2025 = vunpack.c.0.s8 %v2024
  %v2026 = vlaneseq
  %v2027 = vshrl.u32 %v2026, 7
  %v2028 = vsub.s32 %v2025, %v2027
  %v2029 = vrot.slane %v2021, %v2028
  %v2030 = vcombine.high %v2029, %v2029
  %v2032 = vunpack.c.l.s4 1966171168
  %v2033 = vunpack.c.0.s8 %v2032
  %v2034 = vlaneseq
  %v2035 = vshrl.u32 %v2034, 7
  %v2036 = vsub.s32 %v2033, %v2035
  %v2037 = vrot.slane %v2029, %v2036
  %v2039 = vunpack.c.l.s4 1966171168
  %v2040 = vunpack.c.0.s8 %v2039
  %v2041 = vlaneseq
  %v2042 = vshrl.u32 %v2041, 7
  %v2043 = vsub.s32 %v2040, %v2042
  %v2044 = vrot.slane %v2030, %v2043
  %s2047 = scalar_lea.vmem %s1, 28
  %v2048 = vld [vmem:[%s2047] sm:$0x3]
  %v2051 = vunpack.c.l.s4 1966171168
  %v2052 = vunpack.c.0.s8 %v2051
  %v2053 = vlaneseq
  %v2054 = vshrl.u32 %v2053, 7
  %v2055 = vsub.s32 %v2052, %v2054
  %v2056 = vrot.slane %v2048, %v2055
  %v2057 = vcombine.high %v2056, %v2056
  %v2059 = vunpack.c.l.s4 1966171168
  %v2060 = vunpack.c.0.s8 %v2059
  %v2061 = vlaneseq
  %v2062 = vshrl.u32 %v2061, 7
  %v2063 = vsub.s32 %v2060, %v2062
  %v2064 = vrot.slane %v2056, %v2063
  %v2066 = vunpack.c.l.s4 1966171168
  %v2067 = vunpack.c.0.s8 %v2066
  %v2068 = vlaneseq
  %v2069 = vshrl.u32 %v2068, 7
  %v2070 = vsub.s32 %v2067, %v2069
  %v2071 = vrot.slane %v2057, %v2070
  %s2074 = scalar_lea.vmem %s2, 224
  %v2075 = vld [vmem:[%s2074] sm:$0xff]
  %v2076 = vld [vmem:[%s2074 + $0x8] sm:$0xff]
  %s2077 = scalar_lea.vmem [#allocation2], 224
  %v2078 = vld [vmem:[%s2077] sm:$0xff]
  %v2079 = vld [vmem:[%s2077 + $0x8] sm:$0xff]
  %s2080 = scalar_lea.vmem [#allocation3], 224
  %v2081 = vld [vmem:[%s2080] sm:$0xff]
  %v2082 = vld [vmem:[%s2080 + $0x8] sm:$0xff]
  %v2083 = vadd.f32 %v2037, %v2064
  %v2084 = vadd.f32 %v2044, %v2071
  %v2087 = vlaneseq
  %v2088 = vshrl.u32 %v2087, 7
  %v2089 = vsub.s32 0, %v2088
  %v2090 = vrot.slane %v2083, %v2089
  %v2091 = vlaneseq
  %v2092 = vshrl.u32 %v2091, 7
  %v2093 = vsub.s32 0, %v2092
  %v2094 = vrot.slane %v2084, %v2093
  %v2097 = vmul.f32 %v2075, %v2090
  %v2098 = vmul.f32 %v2076, %v2090
  %v2099 = vmul.f32 %v2075, %v2094
  %v2100 = vmul.f32 %v2076, %v2094
  %v2101 = vlaneseq
  %v2102 = vshrl.u32 %v2101, 7
  %v2103 = vsub.s32 0, %v2102
  %v2104 = vrot.slane %v2064, %v2103
  %v2105 = vlaneseq
  %v2106 = vshrl.u32 %v2105, 7
  %v2107 = vsub.s32 0, %v2106
  %v2108 = vrot.slane %v2071, %v2107
  %v2111 = vmul.f32 %v2104, %v2078
  %v2112 = vmul.f32 %v2104, %v2079
  %v2113 = vmul.f32 %v2108, %v2078
  %v2114 = vmul.f32 %v2108, %v2079
  %v2115 = vsub.f32 %v2097, %v2111
  %v2116 = vsub.f32 %v2098, %v2112
  %v2117 = vsub.f32 %v2099, %v2113
  %v2118 = vsub.f32 %v2100, %v2114
  %v2119 = vadd.f32 %v1994, %v2115
  %v2120 = vadd.f32 %v1995, %v2116
  %v2121 = vadd.f32 %v1996, %v2117
  %v2122 = vadd.f32 %v1997, %v2118
  %v2123 = vlaneseq
  %v2124 = vshrl.u32 %v2123, 7
  %v2125 = vsub.s32 0, %v2124
  %v2126 = vrot.slane %v2037, %v2125
  %v2127 = vlaneseq
  %v2128 = vshrl.u32 %v2127, 7
  %v2129 = vsub.s32 0, %v2128
  %v2130 = vrot.slane %v2044, %v2129
  %v2133 = vmul.f32 %v2126, %v2081
  %v2134 = vmul.f32 %v2126, %v2082
  %v2135 = vmul.f32 %v2130, %v2081
  %v2136 = vmul.f32 %v2130, %v2082
  %v2137 = vadd.f32 %v2097, %v2133
  %v2138 = vadd.f32 %v2098, %v2134
  %v2139 = vadd.f32 %v2099, %v2135
  %v2140 = vadd.f32 %v2100, %v2136
  %v2141 = vadd.f32 %v2016, %v2137
  %v2142 = vadd.f32 %v2017, %v2138
  %v2143 = vadd.f32 %v2018, %v2139
  %v2144 = vadd.f32 %v2019, %v2140
  %s2145 = scalar_lea.vmem %s0, 30
  %v2146 = vld [vmem:[%s2145] sm:$0x3]
  %v2149 = vunpack.c.l.s4 1966171168
  %v2150 = vunpack.c.0.s8 %v2149
  %v2151 = vlaneseq
  %v2152 = vshrl.u32 %v2151, 7
  %v2153 = vsub.s32 %v2150, %v2152
  %v2154 = vrot.slane %v2146, %v2153
  %v2155 = vcombine.high %v2154, %v2154
  %v2157 = vunpack.c.l.s4 1966171168
  %v2158 = vunpack.c.0.s8 %v2157
  %v2159 = vlaneseq
  %v2160 = vshrl.u32 %v2159, 7
  %v2161 = vsub.s32 %v2158, %v2160
  %v2162 = vrot.slane %v2154, %v2161
  %v2164 = vunpack.c.l.s4 1966171168
  %v2165 = vunpack.c.0.s8 %v2164
  %v2166 = vlaneseq
  %v2167 = vshrl.u32 %v2166, 7
  %v2168 = vsub.s32 %v2165, %v2167
  %v2169 = vrot.slane %v2155, %v2168
  %s2172 = scalar_lea.vmem %s1, 30
  %v2173 = vld [vmem:[%s2172] sm:$0x3]
  %v2176 = vunpack.c.l.s4 1966171168
  %v2177 = vunpack.c.0.s8 %v2176
  %v2178 = vlaneseq
  %v2179 = vshrl.u32 %v2178, 7
  %v2180 = vsub.s32 %v2177, %v2179
  %v2181 = vrot.slane %v2173, %v2180
  %v2182 = vcombine.high %v2181, %v2181
  %v2184 = vunpack.c.l.s4 1966171168
  %v2185 = vunpack.c.0.s8 %v2184
  %v2186 = vlaneseq
  %v2187 = vshrl.u32 %v2186, 7
  %v2188 = vsub.s32 %v2185, %v2187
  %v2189 = vrot.slane %v2181, %v2188
  %v2191 = vunpack.c.l.s4 1966171168
  %v2192 = vunpack.c.0.s8 %v2191
  %v2193 = vlaneseq
  %v2194 = vshrl.u32 %v2193, 7
  %v2195 = vsub.s32 %v2192, %v2194
  %v2196 = vrot.slane %v2182, %v2195
  %s2199 = scalar_lea.vmem %s2, 240
  %v2200 = vld [vmem:[%s2199] sm:$0xff]
  %v2201 = vld [vmem:[%s2199 + $0x8] sm:$0xff]
  %s2202 = scalar_lea.vmem [#allocation2], 240
  %v2203 = vld [vmem:[%s2202] sm:$0xff]
  %v2204 = vld [vmem:[%s2202 + $0x8] sm:$0xff]
  %s2205 = scalar_lea.vmem [#allocation3], 240
  %v2206 = vld [vmem:[%s2205] sm:$0xff]
  %v2207 = vld [vmem:[%s2205 + $0x8] sm:$0xff]
  %v2208 = vadd.f32 %v2162, %v2189
  %v2209 = vadd.f32 %v2169, %v2196
  %v2212 = vlaneseq
  %v2213 = vshrl.u32 %v2212, 7
  %v2214 = vsub.s32 0, %v2213
  %v2215 = vrot.slane %v2208, %v2214
  %v2216 = vlaneseq
  %v2217 = vshrl.u32 %v2216, 7
  %v2218 = vsub.s32 0, %v2217
  %v2219 = vrot.slane %v2209, %v2218
  %v2222 = vmul.f32 %v2200, %v2215
  %v2223 = vmul.f32 %v2201, %v2215
  %v2224 = vmul.f32 %v2200, %v2219
  %v2225 = vmul.f32 %v2201, %v2219
  %v2226 = vlaneseq
  %v2227 = vshrl.u32 %v2226, 7
  %v2228 = vsub.s32 0, %v2227
  %v2229 = vrot.slane %v2189, %v2228
  %v2230 = vlaneseq
  %v2231 = vshrl.u32 %v2230, 7
  %v2232 = vsub.s32 0, %v2231
  %v2233 = vrot.slane %v2196, %v2232
  %v2236 = vmul.f32 %v2229, %v2203
  %v2237 = vmul.f32 %v2229, %v2204
  %v2238 = vmul.f32 %v2233, %v2203
  %v2239 = vmul.f32 %v2233, %v2204
  %v2240 = vsub.f32 %v2222, %v2236
  %v2241 = vsub.f32 %v2223, %v2237
  %v2242 = vsub.f32 %v2224, %v2238
  %v2243 = vsub.f32 %v2225, %v2239
  %v2244 = vadd.f32 %v2119, %v2240
  %v2245 = vadd.f32 %v2120, %v2241
  %v2246 = vadd.f32 %v2121, %v2242
  %v2247 = vadd.f32 %v2122, %v2243
  %v2248 = vlaneseq
  %v2249 = vshrl.u32 %v2248, 7
  %v2250 = vsub.s32 0, %v2249
  %v2251 = vrot.slane %v2162, %v2250
  %v2252 = vlaneseq
  %v2253 = vshrl.u32 %v2252, 7
  %v2254 = vsub.s32 0, %v2253
  %v2255 = vrot.slane %v2169, %v2254
  %v2258 = vmul.f32 %v2251, %v2206
  %v2259 = vmul.f32 %v2251, %v2207
  %v2260 = vmul.f32 %v2255, %v2206
  %v2261 = vmul.f32 %v2255, %v2207
  %v2262 = vadd.f32 %v2222, %v2258
  %v2263 = vadd.f32 %v2223, %v2259
  %v2264 = vadd.f32 %v2224, %v2260
  %v2265 = vadd.f32 %v2225, %v2261
  %v2266 = vadd.f32 %v2141, %v2262
  %v2267 = vadd.f32 %v2142, %v2263
  %v2268 = vadd.f32 %v2143, %v2264
  %v2269 = vadd.f32 %v2144, %v2265
  %2270 = vst [vmem:[%s4] sm:$0xff] %v2244
  %2271 = vst [vmem:[%s4 + $0x8] sm:$0xff] %v2245
  %2272 = vst [vmem:[%s4 + $0x10] sm:$0xff] %v2246
  %2273 = vst [vmem:[%s4 + $0x18] sm:$0xff] %v2247
  %2274 = vst [vmem:[%s5] sm:$0xff] %v2266
  %2275 = vst [vmem:[%s5 + $0x8] sm:$0xff] %v2267
  %2276 = vst [vmem:[%s5 + $0x10] sm:$0xff] %v2268
  %2277 = vst [vmem:[%s5 + $0x18] sm:$0xff] %v2269
  // Predicated region
  $region18: #{fno2d_forward.2} parent=0 // pred_check
    _
  $region19: #{fno2d_forward.2} parent=0 // pred_check_branch
    %2279 = sbr.rel (0) target = $region21
  $region20: #{fno2d_forward.2} parent=0 // pred_region
    _
  $region21: #{fno2d_forward.2} parent=0 // pred_fallthru
    _
  // Predicated region
  $region22: #{fno2d_forward.2} parent=0 // pred_check
    _
  $region23: #{fno2d_forward.2} parent=0 // pred_check_branch
    %2281 = sbr.rel (0) target = $region25
  $region24: #{fno2d_forward.2} parent=0 // pred_region
    _
  $region25: #{fno2d_forward.2} parent=0 // pred_fallthru
    _
  // Predicated region
  $region26: #{fno2d_forward.2} parent=0 // pred_check
    _
  $region27: #{fno2d_forward.2} parent=0 // pred_check_branch
    %2283 = sbr.rel (0) target = $region29
  $region28: #{fno2d_forward.2} parent=0 // pred_region
    _
  $region29: #{fno2d_forward.2} parent=0 // pred_fallthru
    _
  // Predicated region
  $region30: #{fno2d_forward.2} parent=0 // pred_check
    _
  $region31: #{fno2d_forward.2} parent=0 // pred_check_branch
    %2285 = sbr.rel (0) target = $region33
  $region32: #{fno2d_forward.2} parent=0 // pred_region
    _
  $region33: #{fno2d_forward.2} parent=0 // pred_fallthru
    _

// kernel: reverse.1
$region0: #{reverse.1}
  #allocation0 [shape = 's32[1]{0}', space=sflag, size = 0x4, scoped, tag = 'scoped memory for reverse.1']
  %s0 = inlined_call_operand.vmem [shape: f32[2,16,3,16,7], index: 0, kind: input, shape index: {}]
  %s1 = inlined_call_operand.vmem [shape: f32[2,16,3,16,7], index: 1, kind: output, shape index: {}]
  %s2 = scalar_lea.vmem %s0, 96
  %v3 = vld [vmem:[%s2] sm:$0xff]
  %4 = vst [vmem:[%s1] sm:$0xff] %v3
  %s5 = scalar_lea.vmem %s0, 432
  %v6 = vld [vmem:[%s5] sm:$0xff]
  %s7 = scalar_lea.vmem %s1, 336
  %8 = vst [vmem:[%s7] sm:$0xff] %v6
  %s9 = scalar_lea.vmem %s0, 208
  %v10 = vld [vmem:[%s9] sm:$0xff]
  %s11 = scalar_lea.vmem %s1, 112
  %12 = vst [vmem:[%s11] sm:$0xff] %v10
  %s13 = scalar_lea.vmem %s0, 544
  %v14 = vld [vmem:[%s13] sm:$0xff]
  %s15 = scalar_lea.vmem %s1, 448
  %16 = vst [vmem:[%s15] sm:$0xff] %v14
  %s17 = scalar_lea.vmem %s0, 320
  %v18 = vld [vmem:[%s17] sm:$0xff]
  %s19 = scalar_lea.vmem %s1, 224
  %20 = vst [vmem:[%s19] sm:$0xff] %v18
  %s21 = scalar_lea.vmem %s0, 656
  %v22 = vld [vmem:[%s21] sm:$0xff]
  %s23 = scalar_lea.vmem %s1, 560
  %24 = vst [vmem:[%s23] sm:$0xff] %v22
  %s25 = scalar_lea.vmem %s0, 80
  %v26 = vld [vmem:[%s25] sm:$0xff]
  %s27 = scalar_lea.vmem %s1, 16
  %28 = vst [vmem:[%s27] sm:$0xff] %v26
  %s29 = scalar_lea.vmem %s0, 416
  %v30 = vld [vmem:[%s29] sm:$0xff]
  %s31 = scalar_lea.vmem %s1, 352
  %32 = vst [vmem:[%s31] sm:$0xff] %v30
  %s33 = scalar_lea.vmem %s0, 192
  %v34 = vld [vmem:[%s33] sm:$0xff]
  %s35 = scalar_lea.vmem %s1, 128
  %36 = vst [vmem:[%s35] sm:$0xff] %v34
  %s37 = scalar_lea.vmem %s0, 528
  %v38 = vld [vmem:[%s37] sm:$0xff]
  %s39 = scalar_lea.vmem %s1, 464
  %40 = vst [vmem:[%s39] sm:$0xff] %v38
  %s41 = scalar_lea.vmem %s0, 304
  %v42 = vld [vmem:[%s41] sm:$0xff]
  %s43 = scalar_lea.vmem %s1, 240
  %44 = vst [vmem:[%s43] sm:$0xff] %v42
  %s45 = scalar_lea.vmem %s0, 640
  %v46 = vld [vmem:[%s45] sm:$0xff]
  %s47 = scalar_lea.vmem %s1, 576
  %48 = vst [vmem:[%s47] sm:$0xff] %v46
  %s49 = scalar_lea.vmem %s0, 64
  %v50 = vld [vmem:[%s49] sm:$0xff]
  %s51 = scalar_lea.vmem %s1, 32
  %52 = vst [vmem:[%s51] sm:$0xff] %v50
  %s53 = scalar_lea.vmem %s0, 400
  %v54 = vld [vmem:[%s53] sm:$0xff]
  %s55 = scalar_lea.vmem %s1, 368
  %56 = vst [vmem:[%s55] sm:$0xff] %v54
  %s57 = scalar_lea.vmem %s0, 176
  %v58 = vld [vmem:[%s57] sm:$0xff]
  %s59 = scalar_lea.vmem %s1, 144
  %60 = vst [vmem:[%s59] sm:$0xff] %v58
  %s61 = scalar_lea.vmem %s0, 512
  %v62 = vld [vmem:[%s61] sm:$0xff]
  %s63 = scalar_lea.vmem %s1, 480
  %64 = vst [vmem:[%s63] sm:$0xff] %v62
  %s65 = scalar_lea.vmem %s0, 288
  %v66 = vld [vmem:[%s65] sm:$0xff]
  %s67 = scalar_lea.vmem %s1, 256
  %68 = vst [vmem:[%s67] sm:$0xff] %v66
  %s69 = scalar_lea.vmem %s0, 624
  %v70 = vld [vmem:[%s69] sm:$0xff]
  %s71 = scalar_lea.vmem %s1, 592
  %72 = vst [vmem:[%s71] sm:$0xff] %v70
  %s73 = scalar_lea.vmem %s0, 48
  %v74 = vld [vmem:[%s73] sm:$0xff]
  %s75 = scalar_lea.vmem %s1, 48
  %76 = vst [vmem:[%s75] sm:$0xff] %v74
  %s77 = scalar_lea.vmem %s0, 384
  %v78 = vld [vmem:[%s77] sm:$0xff]
  %s79 = scalar_lea.vmem %s1, 384
  %80 = vst [vmem:[%s79] sm:$0xff] %v78
  %s81 = scalar_lea.vmem %s0, 160
  %v82 = vld [vmem:[%s81] sm:$0xff]
  %s83 = scalar_lea.vmem %s1, 160
  %84 = vst [vmem:[%s83] sm:$0xff] %v82
  %s85 = scalar_lea.vmem %s0, 496
  %v86 = vld [vmem:[%s85] sm:$0xff]
  %s87 = scalar_lea.vmem %s1, 496
  %88 = vst [vmem:[%s87] sm:$0xff] %v86
  %s89 = scalar_lea.vmem %s0, 272
  %v90 = vld [vmem:[%s89] sm:$0xff]
  %s91 = scalar_lea.vmem %s1, 272
  %92 = vst [vmem:[%s91] sm:$0xff] %v90
  %s93 = scalar_lea.vmem %s0, 608
  %v94 = vld [vmem:[%s93] sm:$0xff]
  %s95 = scalar_lea.vmem %s1, 608
  %96 = vst [vmem:[%s95] sm:$0xff] %v94
  %s97 = scalar_lea.vmem %s0, 32
  %v98 = vld [vmem:[%s97] sm:$0xff]
  %s99 = scalar_lea.vmem %s1, 64
  %100 = vst [vmem:[%s99] sm:$0xff] %v98
  %s101 = scalar_lea.vmem %s0, 368
  %v102 = vld [vmem:[%s101] sm:$0xff]
  %s103 = scalar_lea.vmem %s1, 400
  %104 = vst [vmem:[%s103] sm:$0xff] %v102
  %s105 = scalar_lea.vmem %s0, 144
  %v106 = vld [vmem:[%s105] sm:$0xff]
  %s107 = scalar_lea.vmem %s1, 176
  %108 = vst [vmem:[%s107] sm:$0xff] %v106
  %s109 = scalar_lea.vmem %s0, 480
  %v110 = vld [vmem:[%s109] sm:$0xff]
  %s111 = scalar_lea.vmem %s1, 512
  %112 = vst [vmem:[%s111] sm:$0xff] %v110
  %s113 = scalar_lea.vmem %s0, 256
  %v114 = vld [vmem:[%s113] sm:$0xff]
  %s115 = scalar_lea.vmem %s1, 288
  %116 = vst [vmem:[%s115] sm:$0xff] %v114
  %s117 = scalar_lea.vmem %s0, 592
  %v118 = vld [vmem:[%s117] sm:$0xff]
  %s119 = scalar_lea.vmem %s1, 624
  %120 = vst [vmem:[%s119] sm:$0xff] %v118
  %s121 = scalar_lea.vmem %s0, 16
  %v122 = vld [vmem:[%s121] sm:$0xff]
  %s123 = scalar_lea.vmem %s1, 80
  %124 = vst [vmem:[%s123] sm:$0xff] %v122
  %s125 = scalar_lea.vmem %s0, 352
  %v126 = vld [vmem:[%s125] sm:$0xff]
  %s127 = scalar_lea.vmem %s1, 416
  %128 = vst [vmem:[%s127] sm:$0xff] %v126
  %s129 = scalar_lea.vmem %s0, 128
  %v130 = vld [vmem:[%s129] sm:$0xff]
  %s131 = scalar_lea.vmem %s1, 192
  %132 = vst [vmem:[%s131] sm:$0xff] %v130
  %s133 = scalar_lea.vmem %s0, 464
  %v134 = vld [vmem:[%s133] sm:$0xff]
  %s135 = scalar_lea.vmem %s1, 528
  %136 = vst [vmem:[%s135] sm:$0xff] %v134
  %s137 = scalar_lea.vmem %s0, 240
  %v138 = vld [vmem:[%s137] sm:$0xff]
  %s139 = scalar_lea.vmem %s1, 304
  %140 = vst [vmem:[%s139] sm:$0xff] %v138
  %s141 = scalar_lea.vmem %s0, 576
  %v142 = vld [vmem:[%s141] sm:$0xff]
  %s143 = scalar_lea.vmem %s1, 640
  %144 = vst [vmem:[%s143] sm:$0xff] %v142
  %v145 = vld [vmem:[%s0] sm:$0xff]
  %s146 = scalar_lea.vmem %s1, 96
  %147 = vst [vmem:[%s146] sm:$0xff] %v145
  %s148 = scalar_lea.vmem %s0, 336
  %v149 = vld [vmem:[%s148] sm:$0xff]
  %s150 = scalar_lea.vmem %s1, 432
  %151 = vst [vmem:[%s150] sm:$0xff] %v149
  %s152 = scalar_lea.vmem %s0, 112
  %v153 = vld [vmem:[%s152] sm:$0xff]
  %s154 = scalar_lea.vmem %s1, 208
  %155 = vst [vmem:[%s154] sm:$0xff] %v153
  %s156 = scalar_lea.vmem %s0, 448
  %v157 = vld [vmem:[%s156] sm:$0xff]
  %s158 = scalar_lea.vmem %s1, 544
  %159 = vst [vmem:[%s158] sm:$0xff] %v157
  %s160 = scalar_lea.vmem %s0, 224
  %v161 = vld [vmem:[%s160] sm:$0xff]
  %s162 = scalar_lea.vmem %s1, 320
  %163 = vst [vmem:[%s162] sm:$0xff] %v161
  %s164 = scalar_lea.vmem %s0, 560
  %v165 = vld [vmem:[%s164] sm:$0xff]
  %s166 = scalar_lea.vmem %s1, 656
  %167 = vst [vmem:[%s166] sm:$0xff] %v165
  %s168 = scalar_lea.vmem %s0, 104
  %v169 = vld [vmem:[%s168] sm:$0xff]
  %s170 = scalar_lea.vmem %s1, 8
  %171 = vst [vmem:[%s170] sm:$0xff] %v169
  %s172 = scalar_lea.vmem %s0, 440
  %v173 = vld [vmem:[%s172] sm:$0xff]
  %s174 = scalar_lea.vmem %s1, 344
  %175 = vst [vmem:[%s174] sm:$0xff] %v173
  %s176 = scalar_lea.vmem %s0, 216
  %v177 = vld [vmem:[%s176] sm:$0xff]
  %s178 = scalar_lea.vmem %s1, 120
  %179 = vst [vmem:[%s178] sm:$0xff] %v177
  %s180 = scalar_lea.vmem %s0, 552
  %v181 = vld [vmem:[%s180] sm:$0xff]
  %s182 = scalar_lea.vmem %s1, 456
  %183 = vst [vmem:[%s182] sm:$0xff] %v181
  %s184 = scalar_lea.vmem %s0, 328
  %v185 = vld [vmem:[%s184] sm:$0xff]
  %s186 = scalar_lea.vmem %s1, 232
  %187 = vst [vmem:[%s186] sm:$0xff] %v185
  %s188 = scalar_lea.vmem %s0, 664
  %v189 = vld [vmem:[%s188] sm:$0xff]
  %s190 = scalar_lea.vmem %s1, 568
  %191 = vst [vmem:[%s190] sm:$0xff] %v189
  %s192 = scalar_lea.vmem %s0, 88
  %v193 = vld [vmem:[%s192] sm:$0xff]
  %s194 = scalar_lea.vmem %s1, 24
  %195 = vst [vmem:[%s194] sm:$0xff] %v193
  %s196 = scalar_lea.vmem %s0, 424
  %v197 = vld [vmem:[%s196] sm:$0xff]
  %s198 = scalar_lea.vmem %s1, 360
  %199 = vst [vmem:[%s198] sm:$0xff] %v197
  %s200 = scalar_lea.vmem %s0, 200
  %v201 = vld [vmem:[%s200] sm:$0xff]
  %s202 = scalar_lea.vmem %s1, 136
  %203 = vst [vmem:[%s202] sm:$0xff] %v201
  %s204 = scalar_lea.vmem %s0, 536
  %v205 = vld [vmem:[%s204] sm:$0xff]
  %s206 = scalar_lea.vmem %s1, 472
  %207 = vst [vmem:[%s206] sm:$0xff] %v205
  %s208 = scalar_lea.vmem %s0, 312
  %v209 = vld [vmem:[%s208] sm:$0xff]
  %s210 = scalar_lea.vmem %s1, 248
  %211 = vst [vmem:[%s210] sm:$0xff] %v209
  %s212 = scalar_lea.vmem %s0, 648
  %v213 = vld [vmem:[%s212] sm:$0xff]
  %s214 = scalar_lea.vmem %s1, 584
  %215 = vst [vmem:[%s214] sm:$0xff] %v213
  %s216 = scalar_lea.vmem %s0, 72
  %v217 = vld [vmem:[%s216] sm:$0xff]
  %s218 = scalar_lea.vmem %s1, 40
  %219 = vst [vmem:[%s218] sm:$0xff] %v217
  %s220 = scalar_lea.vmem %s0, 408
  %v221 = vld [vmem:[%s220] sm:$0xff]
  %s222 = scalar_lea.vmem %s1, 376
  %223 = vst [vmem:[%s222] sm:$0xff] %v221
  %s224 = scalar_lea.vmem %s0, 184
  %v225 = vld [vmem:[%s224] sm:$0xff]
  %s226 = scalar_lea.vmem %s1, 152
  %227 = vst [vmem:[%s226] sm:$0xff] %v225
  %s228 = scalar_lea.vmem %s0, 520
  %v229 = vld [vmem:[%s228] sm:$0xff]
  %s230 = scalar_lea.vmem %s1, 488
  %231 = vst [vmem:[%s230] sm:$0xff] %v229
  %s232 = scalar_lea.vmem %s0, 296
  %v233 = vld [vmem:[%s232] sm:$0xff]
  %s234 = scalar_lea.vmem %s1, 264
  %235 = vst [vmem:[%s234] sm:$0xff] %v233
  %s236 = scalar_lea.vmem %s0, 632
  %v237 = vld [vmem:[%s236] sm:$0xff]
  %s238 = scalar_lea.vmem %s1, 600
  %239 = vst [vmem:[%s238] sm:$0xff] %v237
  %s240 = scalar_lea.vmem %s0, 56
  %v241 = vld [vmem:[%s240] sm:$0xff]
  %s242 = scalar_lea.vmem %s1, 56
  %243 = vst [vmem:[%s242] sm:$0xff] %v241
  %s244 = scalar_lea.vmem %s0, 392
  %v245 = vld [vmem:[%s244] sm:$0xff]
  %s246 = scalar_lea.vmem %s1, 392
  %247 = vst [vmem:[%s246] sm:$0xff] %v245
  %s248 = scalar_lea.vmem %s0, 168
  %v249 = vld [vmem:[%s248] sm:$0xff]
  %s250 = scalar_lea.vmem %s1, 168
  %251 = vst [vmem:[%s250] sm:$0xff] %v249
  %s252 = scalar_lea.vmem %s0, 504
  %v253 = vld [vmem:[%s252] sm:$0xff]
  %s254 = scalar_lea.vmem %s1, 504
  %255 = vst [vmem:[%s254] sm:$0xff] %v253
  %s256 = scalar_lea.vmem %s0, 280
  %v257 = vld [vmem:[%s256] sm:$0xff]
  %s258 = scalar_lea.vmem %s1, 280
  %259 = vst [vmem:[%s258] sm:$0xff] %v257
  %s260 = scalar_lea.vmem %s0, 616
  %v261 = vld [vmem:[%s260] sm:$0xff]
  %s262 = scalar_lea.vmem %s1, 616
  %263 = vst [vmem:[%s262] sm:$0xff] %v261
  %s264 = scalar_lea.vmem %s0, 40
  %v265 = vld [vmem:[%s264] sm:$0xff]
  %s266 = scalar_lea.vmem %s1, 72
  %267 = vst [vmem:[%s266] sm:$0xff] %v265
  %s268 = scalar_lea.vmem %s0, 376
  %v269 = vld [vmem:[%s268] sm:$0xff]
  %s270 = scalar_lea.vmem %s1, 408
  %271 = vst [vmem:[%s270] sm:$0xff] %v269
  %s272 = scalar_lea.vmem %s0, 152
  %v273 = vld [vmem:[%s272] sm:$0xff]
  %s274 = scalar_lea.vmem %s1, 184
  %275 = vst [vmem:[%s274] sm:$0xff] %v273
  %s276 = scalar_lea.vmem %s0, 488
  %v277 = vld [vmem:[%s276] sm:$0xff]
  %s278 = scalar_lea.vmem %s1, 520
  %279 = vst [vmem:[%s278] sm:$0xff] %v277
  %s280 = scalar_lea.vmem %s0, 264
  %v281 = vld [vmem:[%s280] sm:$0xff]
  %s282 = scalar_lea.vmem %s1, 296
  %283 = vst [vmem:[%s282] sm:$0xff] %v281
  %s284 = scalar_lea.vmem %s0, 600
  %v285 = vld [vmem:[%s284] sm:$0xff]
  %s286 = scalar_lea.vmem %s1, 632
  %287 = vst [vmem:[%s286] sm:$0xff] %v285
  %s288 = scalar_lea.vmem %s0, 24
  %v289 = vld [vmem:[%s288] sm:$0xff]
  %s290 = scalar_lea.vmem %s1, 88
  %291 = vst [vmem:[%s290] sm:$0xff] %v289
  %s292 = scalar_lea.vmem %s0, 360
  %v293 = vld [vmem:[%s292] sm:$0xff]
  %s294 = scalar_lea.vmem %s1, 424
  %295 = vst [vmem:[%s294] sm:$0xff] %v293
  %s296 = scalar_lea.vmem %s0, 136
  %v297 = vld [vmem:[%s296] sm:$0xff]
  %s298 = scalar_lea.vmem %s1, 200
  %299 = vst [vmem:[%s298] sm:$0xff] %v297
  %s300 = scalar_lea.vmem %s0, 472
  %v301 = vld [vmem:[%s300] sm:$0xff]
  %s302 = scalar_lea.vmem %s1, 536
  %303 = vst [vmem:[%s302] sm:$0xff] %v301
  %s304 = scalar_lea.vmem %s0, 248
  %v305 = vld [vmem:[%s304] sm:$0xff]
  %s306 = scalar_lea.vmem %s1, 312
  %307 = vst [vmem:[%s306] sm:$0xff] %v305
  %s308 = scalar_lea.vmem %s0, 584
  %v309 = vld [vmem:[%s308] sm:$0xff]
  %s310 = scalar_lea.vmem %s1, 648
  %311 = vst [vmem:[%s310] sm:$0xff] %v309
  %s312 = scalar_lea.vmem %s0, 8
  %v313 = vld [vmem:[%s312] sm:$0xff]
  %s314 = scalar_lea.vmem %s1, 104
  %315 = vst [vmem:[%s314] sm:$0xff] %v313
  %s316 = scalar_lea.vmem %s0, 344
  %v317 = vld [vmem:[%s316] sm:$0xff]
  %s318 = scalar_lea.vmem %s1, 440
  %319 = vst [vmem:[%s318] sm:$0xff] %v317
  %s320 = scalar_lea.vmem %s0, 120
  %v321 = vld [vmem:[%s320] sm:$0xff]
  %s322 = scalar_lea.vmem %s1, 216
  %323 = vst [vmem:[%s322] sm:$0xff] %v321
  %s324 = scalar_lea.vmem %s0, 456
  %v325 = vld [vmem:[%s324] sm:$0xff]
  %s326 = scalar_lea.vmem %s1, 552
  %327 = vst [vmem:[%s326] sm:$0xff] %v325
  %s328 = scalar_lea.vmem %s0, 232
  %v329 = vld [vmem:[%s328] sm:$0xff]
  %s330 = scalar_lea.vmem %s1, 328
  %331 = vst [vmem:[%s330] sm:$0xff] %v329
  %s332 = scalar_lea.vmem %s0, 568
  %v333 = vld [vmem:[%s332] sm:$0xff]
  %s334 = scalar_lea.vmem %s1, 664
  %335 = vst [vmem:[%s334] sm:$0xff] %v333

// kernel: fno2d_forward.3
$region0: #{fno2d_forward.3}
  #allocation0 [shape = 'u32[]', space=smem, size = 0x4, offset = 0x4, fixed_abs, tag = 'smem constant byte address 0x4 - core index']
  #allocation1 [shape = 'u32[144,128]{1,0:T(1,128)}', space=vmem, size = 0x12000, scoped, tag = 'internal scratch']
  %s0 = inlined_call_operand.vmem [shape: f32[16,16], index: 0, kind: input, shape index: {}]
  %s1 = inlined_call_operand.vmem [shape: f32[16,1], index: 1, kind: input, shape index: {}]
  %s2 = inlined_call_operand.vmem [shape: f32[16,1536], index: 2, kind: input, shape index: {}]
  %s3 = inlined_call_operand.vmem [shape: f32[16,1536], index: 3, kind: input, shape index: {}]
  %s4 = inlined_call_operand.vmem [shape: f32[16,1536], index: 4, kind: output, shape index: {}]
  %s5 = sld [smem:[#allocation0]]
  $region114: #{fno2d_forward.3} parent=0
    _
  %s7 = ssub.s32 1, %s5
  %s8 = scalar_select 0, %s7, %s5
  $region1: #{fno2d_forward.3} parent=0
    #allocation2 [shape = 'u8[98304]{0}', space=vmem, size = 0x18000, scoped, tag = 'input window, operand 2']
    #allocation3 [shape = 'u8[98304]{0}', space=vmem, size = 0x18000, scoped, tag = 'input window, operand 3']
    #allocation4 [shape = 'u8[98304]{0}', space=vmem, size = 0x18000, scoped, tag = 'output window, operand 0']
    loop: start=0, step=1, limit=4
    $region2: #{fno2d_forward.3} parent=1 // loop_pre_header
      _
    $region3: #{fno2d_forward.3} parent=1 // loop_header
      %s10 = sphi 0, %s14
      %p11 = scmp.ge.s32.totalorder %s10, 4
      %s18 = sphi 0, %s18
      %s20 = sphi 0, %s18
      %s21 = sphi 0, %s20
      %s35 = sphi 0, %s21
      %s39 = sphi 0, %s39
      %s41 = sphi 0, %s39
      %s42 = sphi 0, %s41
      %s56 = sphi 0, %s42
      %s62 = sphi 0, %s64
      %s65 = sphi 0, %s62
      %s66 = sphi 0, %s65
      %s82 = sphi 0, %s66
      %s88 = sphi 0, %s90
      %s91 = sphi 0, %s88
      %s92 = sphi 0, %s91
      %s108 = sphi 0, %s92
      %s114 = sphi 0, %s116
      %s117 = sphi 0, %s114
      %s118 = sphi 0, %s117
      %s134 = sphi 0, %s118
    $region4: #{fno2d_forward.3} parent=1 // loop_header_branch
      %13 = sbr.rel (%p11) target = $region8
    $region5: #{fno2d_forward.3} parent=1 // loop_body
      %s15 = ssub.s32 %s10, 1
      %s16 = ssub.s32 %s10, 2
      %s17 = sadd.s32 %s10, 1
      %s19 = sadd.s32 %s18, 1
      %p22 = scmp.eq.s32.totalorder %s10, 1
      %p23 = scmp.ne.s32.totalorder %s18, %s20
      %p24 = scmp.eq.s32.totalorder %s10, 0
      %p25 = por %p23, %p24
      %p26 = scmp.ne.s32.totalorder %s18, %s20
      %p27 = scmp.eq.s32.totalorder %s15, 1
      %p28 = por %p26, %p27
      %p29 = scmp.ne.s32.totalorder %s20, %s21
      %p30 = scmp.eq.s32.totalorder %s15, 0
      %p31 = por %p29, %p30
      %p32 = scmp.ne.s32.totalorder %s20, %s21
      %p33 = scmp.eq.s32.totalorder %s16, 1
      %p34 = por %p32, %p33
      %p36 = scmp.ne.s32.totalorder %s21, %s35
      %p37 = scmp.eq.s32.totalorder %s16, 0
      %p38 = por %p36, %p37
      %s40 = sadd.s32 %s39, 1
      %p43 = scmp.eq.s32.totalorder %s10, 1
      %p44 = scmp.ne.s32.totalorder %s39, %s41
      %p45 = scmp.eq.s32.totalorder %s10, 0
      %p46 = por %p44, %p45
      %p47 = scmp.ne.s32.totalorder %s39, %s41
      %p48 = scmp.eq.s32.totalorder %s15, 1
      %p49 = por %p47, %p48
      %p50 = scmp.ne.s32.totalorder %s41, %s42
      %p51 = scmp.eq.s32.totalorder %s15, 0
      %p52 = por %p50, %p51
      %p53 = scmp.ne.s32.totalorder %s41, %s42
      %p54 = scmp.eq.s32.totalorder %s16, 1
      %p55 = por %p53, %p54
      %p57 = scmp.ne.s32.totalorder %s42, %s56
      %p58 = scmp.eq.s32.totalorder %s16, 0
      %p59 = por %p57, %p58
      %s60 = ssub.s32 %s10, %s17
      %p61 = scmp.eq.s32.totalorder %s60, 0
      %s63 = sadd.s32 %s62, 1
      %s64 = scalar_select %p61, %s62, %s63
      %p67 = pneg %p61
      %p68 = scmp.eq.s32.totalorder %s10, 1
      %p69 = por %p67, %p68
      %p70 = scmp.ne.s32.totalorder %s62, %s65
      %p71 = scmp.eq.s32.totalorder %s10, 0
      %p72 = por %p70, %p71
      %p73 = scmp.ne.s32.totalorder %s62, %s65
      %p74 = scmp.eq.s32.totalorder %s15, 1
      %p75 = por %p73, %p74
      %p76 = scmp.ne.s32.totalorder %s65, %s66
      %p77 = scmp.eq.s32.totalorder %s15, 0
      %p78 = por %p76, %p77
      %p79 = scmp.ne.s32.totalorder %s65, %s66
      %p80 = scmp.eq.s32.totalorder %s16, 1
      %p81 = por %p79, %p80
      %p83 = scmp.ne.s32.totalorder %s66, %s82
      %p84 = scmp.eq.s32.totalorder %s16, 0
      %p85 = por %p83, %p84
      %s86 = ssub.s32 %s10, %s17
      %p87 = scmp.eq.s32.totalorder %s86, 0
      %s89 = sadd.s32 %s88, 1
      %s90 = scalar_select %p87, %s88, %s89
      %p93 = pneg %p87
      %p94 = scmp.eq.s32.totalorder %s10, 1
      %p95 = por %p93, %p94
      %p96 = scmp.ne.s32.totalorder %s88, %s91
      %p97 = scmp.eq.s32.totalorder %s10, 0
      %p98 = por %p96, %p97
      %p99 = scmp.ne.s32.totalorder %s88, %s91
      %p100 = scmp.eq.s32.totalorder %s15, 1
      %p101 = por %p99, %p100
      %p102 = scmp.ne.s32.totalorder %s91, %s92
      %p103 = scmp.eq.s32.totalorder %s15, 0
      %p104 = por %p102, %p103
      %p105 = scmp.ne.s32.totalorder %s91, %s92
      %p106 = scmp.eq.s32.totalorder %s16, 1
      %p107 = por %p105, %p106
      %p109 = scmp.ne.s32.totalorder %s92, %s108
      %p110 = scmp.eq.s32.totalorder %s16, 0
      %p111 = por %p109, %p110
      %s112 = ssub.s32 %s10, %s17
      %p113 = scmp.eq.s32.totalorder %s112, 0
      %s115 = sadd.s32 %s114, 1
      %s116 = scalar_select %p113, %s114, %s115
      %p119 = pneg %p113
      %p120 = scmp.eq.s32.totalorder %s10, 1
      %p121 = por %p119, %p120
      %p122 = scmp.ne.s32.totalorder %s114, %s117
      %p123 = scmp.eq.s32.totalorder %s10, 0
      %p124 = por %p122, %p123
      %p125 = scmp.ne.s32.totalorder %s114, %s117
      %p126 = scmp.eq.s32.totalorder %s15, 1
      %p127 = por %p125, %p126
      %p128 = scmp.ne.s32.totalorder %s117, %s118
      %p129 = scmp.eq.s32.totalorder %s15, 0
      %p130 = por %p128, %p129
      %p131 = scmp.ne.s32.totalorder %s117, %s118
      %p132 = scmp.eq.s32.totalorder %s16, 1
      %p133 = por %p131, %p132
      %p135 = scmp.ne.s32.totalorder %s118, %s134
      %p136 = scmp.eq.s32.totalorder %s16, 0
      %p137 = por %p135, %p136
      %p138 = scmp.le.s32.totalorder 1, %s10
      %p139 = scmp.lt.s32.totalorder %s10, 3
      %p140 = pnand %p138, %p139
      %p141 = pneg %p140
      // Predicated region
      $region9: #{fno2d_forward.3} parent=5 // pred_check
        _
      $region10: #{fno2d_forward.3} parent=5 // pred_check_branch
        %143 = sbr.rel (%p140) target = $region12
      $region11: #{fno2d_forward.3} parent=5 // pred_region
        %s144 = ssub.s32 %s10, 1
        // Predicated region
        $region13: #{fno2d_forward.3} parent=11 // pred_check
          %p145 = pneg %p31
        $region14: #{fno2d_forward.3} parent=11 // pred_check_branch
          %147 = sbr.rel (%p145) target = $region16
        $region15: #{fno2d_forward.3} parent=11 // pred_region
          _
        $region16: #{fno2d_forward.3} parent=11 // pred_fallthru
          _
        // Predicated region
        $region17: #{fno2d_forward.3} parent=11 // pred_check
          %p148 = pneg %p52
        $region18: #{fno2d_forward.3} parent=11 // pred_check_branch
          %150 = sbr.rel (%p148) target = $region20
        $region19: #{fno2d_forward.3} parent=11 // pred_region
          _
        $region20: #{fno2d_forward.3} parent=11 // pred_fallthru
          _
      $region12: #{fno2d_forward.3} parent=5 // pred_fallthru
        _
      %p151 = scmp.lt.s32.totalorder %s10, 2
      // Predicated region
      $region21: #{fno2d_forward.3} parent=5 // pred_check
        %p152 = pneg %p151
      $region22: #{fno2d_forward.3} parent=5 // pred_check_branch
        %154 = sbr.rel (%p152) target = $region24
      $region23: #{fno2d_forward.3} parent=5 // pred_region
        // Predicated region
        $region25: #{fno2d_forward.3} parent=23 // pred_check
          %p155 = pneg %p72
        $region26: #{fno2d_forward.3} parent=23 // pred_check_branch
          %157 = sbr.rel (%p155) target = $region28
        $region27: #{fno2d_forward.3} parent=23 // pred_region
          %s158 = sand.u32 %s62, 1
          %s159 = sand.u32 %s62, 1
          %s160 = smul.addr %s159, 96
          %s161 = scalar_lea.vmem [#allocation2], %s160
          %s162 = smul.u32 6, %s10
          %s163 = smul.addr %s162, 8
          %s164 = scalar_lea.vmem %s2, %s163
          // Predicated region
          $region29: #{fno2d_forward.3} parent=27 // pred_check
            _
          $region30: #{fno2d_forward.3} parent=27 // pred_check_branch
            %166 = sbr.rel (0) target = $region32
          $region31: #{fno2d_forward.3} parent=27 // pred_region
            // Predicated region
            $region33: #{fno2d_forward.3} parent=31 // pred_check
              _
            $region34: #{fno2d_forward.3} parent=31 // pred_check_branch
              %168 = sbr.rel (0) target = $region36
            $region35: #{fno2d_forward.3} parent=31 // pred_region
              loop: start=0, step=1, limit=1
              $region37: #{fno2d_forward.3} parent=35 // loop_pre_header
                _
              $region38: #{fno2d_forward.3} parent=35 // loop_header
                %s170 = sphi 0, %s174
                %p171 = scmp.ge.s32.totalorder %s170, 1
                %s175 = sphi %s164, %s164
                %s176 = sphi %s161, %s161
              $region39: #{fno2d_forward.3} parent=35 // loop_header_branch
                %173 = sbr.rel (%p171) target = $region43
              $region40: #{fno2d_forward.3} parent=35 // loop_body
                %v177 = vld [vmem:[%s175] sm:$0xff]
                %178 = vst [vmem:[%s176] sm:$0xff] %v177
                %v179 = vld [vmem:[%s175 + $0x8] sm:$0xff]
                %180 = vst [vmem:[%s176 + $0x8] sm:$0xff] %v179
                %v181 = vld [vmem:[%s175 + $0x10] sm:$0xff]
                %182 = vst [vmem:[%s176 + $0x10] sm:$0xff] %v181
                %v183 = vld [vmem:[%s175 + $0x18] sm:$0xff]
                %184 = vst [vmem:[%s176 + $0x18] sm:$0xff] %v183
                %v185 = vld [vmem:[%s175 + $0x20] sm:$0xff]
                %186 = vst [vmem:[%s176 + $0x20] sm:$0xff] %v185
                %v187 = vld [vmem:[%s175 + $0x28] sm:$0xff]
                %188 = vst [vmem:[%s176 + $0x28] sm:$0xff] %v187
                %v189 = vld [vmem:[%s175 + $0x60] sm:$0xff]
                %190 = vst [vmem:[%s176 + $0x30] sm:$0xff] %v189
                %v191 = vld [vmem:[%s175 + $0x68] sm:$0xff]
                %192 = vst [vmem:[%s176 + $0x38] sm:$0xff] %v191
                %v193 = vld [vmem:[%s175 + $0x70] sm:$0xff]
                %194 = vst [vmem:[%s176 + $0x40] sm:$0xff] %v193
                %v195 = vld [vmem:[%s175 + $0x78] sm:$0xff]
                %196 = vst [vmem:[%s176 + $0x48] sm:$0xff] %v195
                %v197 = vld [vmem:[%s175 + $0x80] sm:$0xff]
                %198 = vst [vmem:[%s176 + $0x50] sm:$0xff] %v197
                %v199 = vld [vmem:[%s175 + $0x88] sm:$0xff]
                %200 = vst [vmem:[%s176 + $0x58] sm:$0xff] %v199
              $region41: #{fno2d_forward.3} parent=35 // loop_footer
                %s174 = sadd.s32 1, %s170
              $region42: #{fno2d_forward.3} parent=35 // loop_footer_branch
                %169 = sbr.rel target = $region38
              $region43: #{fno2d_forward.3} parent=35 // loop_exit
                _
            $region36: #{fno2d_forward.3} parent=31 // pred_fallthru
              _
            // Predicated region
            $region44: #{fno2d_forward.3} parent=31 // pred_check
              _
            $region45: #{fno2d_forward.3} parent=31 // pred_check_branch
              %202 = sbr.rel target = $region47
            $region46: #{fno2d_forward.3} parent=31 // pred_region
              _
            $region47: #{fno2d_forward.3} parent=31 // pred_fallthru
              _
          $region32: #{fno2d_forward.3} parent=27 // pred_fallthru
            _
          %203 = vnop
        $region28: #{fno2d_forward.3} parent=23 // pred_fallthru
          _
        // Predicated region
        $region48: #{fno2d_forward.3} parent=23 // pred_check
          %p204 = pneg %p98
        $region49: #{fno2d_forward.3} parent=23 // pred_check_branch
          %206 = sbr.rel (%p204) target = $region51
        $region50: #{fno2d_forward.3} parent=23 // pred_region
          %s207 = sand.u32 %s88, 1
          %s208 = sand.u32 %s88, 1
          %s209 = smul.addr %s208, 96
          %s210 = scalar_lea.vmem [#allocation3], %s209
          %s211 = smul.u32 6, %s10
          %s212 = smul.addr %s211, 8
          %s213 = scalar_lea.vmem %s3, %s212
          // Predicated region
          $region52: #{fno2d_forward.3} parent=50 // pred_check
            _
          $region53: #{fno2d_forward.3} parent=50 // pred_check_branch
            %215 = sbr.rel (0) target = $region55
          $region54: #{fno2d_forward.3} parent=50 // pred_region
            // Predicated region
            $region56: #{fno2d_forward.3} parent=54 // pred_check
              _
            $region57: #{fno2d_forward.3} parent=54 // pred_check_branch
              %217 = sbr.rel (0) target = $region59
            $region58: #{fno2d_forward.3} parent=54 // pred_region
              loop: start=0, step=1, limit=1
              $region60: #{fno2d_forward.3} parent=58 // loop_pre_header
                _
              $region61: #{fno2d_forward.3} parent=58 // loop_header
                %s219 = sphi 0, %s223
                %p220 = scmp.ge.s32.totalorder %s219, 1
                %s224 = sphi %s213, %s213
                %s225 = sphi %s210, %s210
              $region62: #{fno2d_forward.3} parent=58 // loop_header_branch
                %222 = sbr.rel (%p220) target = $region66
              $region63: #{fno2d_forward.3} parent=58 // loop_body
                %v226 = vld [vmem:[%s224] sm:$0xff]
                %227 = vst [vmem:[%s225] sm:$0xff] %v226
                %v228 = vld [vmem:[%s224 + $0x8] sm:$0xff]
                %229 = vst [vmem:[%s225 + $0x8] sm:$0xff] %v228
                %v230 = vld [vmem:[%s224 + $0x10] sm:$0xff]
                %231 = vst [vmem:[%s225 + $0x10] sm:$0xff] %v230
                %v232 = vld [vmem:[%s224 + $0x18] sm:$0xff]
                %233 = vst [vmem:[%s225 + $0x18] sm:$0xff] %v232
                %v234 = vld [vmem:[%s224 + $0x20] sm:$0xff]
                %235 = vst [vmem:[%s225 + $0x20] sm:$0xff] %v234
                %v236 = vld [vmem:[%s224 + $0x28] sm:$0xff]
                %237 = vst [vmem:[%s225 + $0x28] sm:$0xff] %v236
                %v238 = vld [vmem:[%s224 + $0x60] sm:$0xff]
                %239 = vst [vmem:[%s225 + $0x30] sm:$0xff] %v238
                %v240 = vld [vmem:[%s224 + $0x68] sm:$0xff]
                %241 = vst [vmem:[%s225 + $0x38] sm:$0xff] %v240
                %v242 = vld [vmem:[%s224 + $0x70] sm:$0xff]
                %243 = vst [vmem:[%s225 + $0x40] sm:$0xff] %v242
                %v244 = vld [vmem:[%s224 + $0x78] sm:$0xff]
                %245 = vst [vmem:[%s225 + $0x48] sm:$0xff] %v244
                %v246 = vld [vmem:[%s224 + $0x80] sm:$0xff]
                %247 = vst [vmem:[%s225 + $0x50] sm:$0xff] %v246
                %v248 = vld [vmem:[%s224 + $0x88] sm:$0xff]
                %249 = vst [vmem:[%s225 + $0x58] sm:$0xff] %v248
              $region64: #{fno2d_forward.3} parent=58 // loop_footer
                %s223 = sadd.s32 1, %s219
              $region65: #{fno2d_forward.3} parent=58 // loop_footer_branch
                %218 = sbr.rel target = $region61
              $region66: #{fno2d_forward.3} parent=58 // loop_exit
                _
            $region59: #{fno2d_forward.3} parent=54 // pred_fallthru
              _
            // Predicated region
            $region67: #{fno2d_forward.3} parent=54 // pred_check
              _
            $region68: #{fno2d_forward.3} parent=54 // pred_check_branch
              %251 = sbr.rel target = $region70
            $region69: #{fno2d_forward.3} parent=54 // pred_region
              _
            $region70: #{fno2d_forward.3} parent=54 // pred_fallthru
              _
          $region55: #{fno2d_forward.3} parent=50 // pred_fallthru
            _
          %252 = vnop
        $region51: #{fno2d_forward.3} parent=23 // pred_fallthru
          _
      $region24: #{fno2d_forward.3} parent=5 // pred_fallthru
        _
      %p253 = scmp.le.s32.totalorder 1, %s10
      %p254 = scmp.lt.s32.totalorder %s10, 3
      %p255 = pnand %p253, %p254
      %p256 = pneg %p255
      // Predicated region
      $region71: #{fno2d_forward.3} parent=5 // pred_check
        _
      $region72: #{fno2d_forward.3} parent=5 // pred_check_branch
        %258 = sbr.rel (%p255) target = $region74
      $region73: #{fno2d_forward.3} parent=5 // pred_region
        %s259 = ssub.s32 %s10, 1
        %s260 = sand.u32 %s65, 1
        %s261 = sand.u32 %s65, 1
        %s262 = smul.addr %s261, 96
        %s263 = scalar_lea.vmem [#allocation2], %s262
        // Predicated region
        $region75: #{fno2d_forward.3} parent=73 // pred_check
          %p264 = pneg %p78
        $region76: #{fno2d_forward.3} parent=73 // pred_check_branch
          %266 = sbr.rel (%p264) target = $region78
        $region77: #{fno2d_forward.3} parent=73 // pred_region
          _
        $region78: #{fno2d_forward.3} parent=73 // pred_fallthru
          _
        %s267 = sand.u32 %s91, 1
        %s268 = sand.u32 %s91, 1
        %s269 = smul.addr %s268, 96
        %s270 = scalar_lea.vmem [#allocation3], %s269
        // Predicated region
        $region79: #{fno2d_forward.3} parent=73 // pred_check
          %p271 = pneg %p104
        $region80: #{fno2d_forward.3} parent=73 // pred_check_branch
          %273 = sbr.rel (%p271) target = $region82
        $region81: #{fno2d_forward.3} parent=73 // pred_region
          _
        $region82: #{fno2d_forward.3} parent=73 // pred_fallthru
          _
        %p274 = pneg %p31
        %p275 = pneg %p28
        %p276 = pneg %p52
        %p277 = pneg %p49
        %s278 = sand.u32 %s65, 1
        %s279 = sand.u32 %s65, 1
        %s280 = smul.addr %s279, 96
        %s281 = scalar_lea.vmem [#allocation2], %s280
        %p282 = pneg %p78
        %p283 = pneg %p75
        %s284 = sand.u32 %s91, 1
        %s285 = sand.u32 %s91, 1
        %s286 = smul.addr %s285, 96
        %s287 = scalar_lea.vmem [#allocation3], %s286
        %p288 = pneg %p104
        %p289 = pneg %p101
        %p290 = pneg %p130
        %p291 = pneg %p127
        %s292 = sand.u32 %s117, 1
        %s293 = sand.u32 %s117, 1
        %s294 = smul.addr %s293, 96
        %s295 = scalar_lea.vmem [#allocation4], %s294
        %s296 = smul.u32 6, %s15
        %s297 = smul.u32 6, %s15
        %s298 = smul.u32 6, %s15
        %v299 = vld [vmem:[%s0] sm:$0xff]
        %v300 = vld [vmem:[%s0 + $0x8] sm:$0xff]
        %v301 = vld [vmem:[%s263] sm:$0xff]
        %v302 = vld [vmem:[%s263 + $0x8] sm:$0xff]
        %v303 = vld [vmem:[%s263 + $0x10] sm:$0xff]
        %v304 = vld [vmem:[%s263 + $0x18] sm:$0xff]
        %v305 = vld [vmem:[%s263 + $0x20] sm:$0xff]
        %v306 = vld [vmem:[%s263 + $0x28] sm:$0xff]
        %v307 = vld [vmem:[%s263 + $0x30] sm:$0xff]
        %v308 = vld [vmem:[%s263 + $0x38] sm:$0xff]
        %v309 = vld [vmem:[%s263 + $0x40] sm:$0xff]
        %v310 = vld [vmem:[%s263 + $0x48] sm:$0xff]
        %v311 = vld [vmem:[%s263 + $0x50] sm:$0xff]
        %v312 = vld [vmem:[%s263 + $0x58] sm:$0xff]
        %v313 = vld [vmem:[%s270] sm:$0xff]
        %v314 = vld [vmem:[%s270 + $0x8] sm:$0xff]
        %v315 = vld [vmem:[%s270 + $0x10] sm:$0xff]
        %v316 = vld [vmem:[%s270 + $0x18] sm:$0xff]
        %v317 = vld [vmem:[%s270 + $0x20] sm:$0xff]
        %v318 = vld [vmem:[%s270 + $0x28] sm:$0xff]
        %v319 = vld [vmem:[%s270 + $0x30] sm:$0xff]
        %v320 = vld [vmem:[%s270 + $0x38] sm:$0xff]
        %v321 = vld [vmem:[%s270 + $0x40] sm:$0xff]
        %v322 = vld [vmem:[%s270 + $0x48] sm:$0xff]
        %v323 = vld [vmem:[%s270 + $0x50] sm:$0xff]
        %v324 = vld [vmem:[%s270 + $0x58] sm:$0xff]
        %vm325 = vcmask 130048
        %v327 = vsel %vm325, %v299, 0
        %v330 = vsel %vm325, %v300, 0
        %332 = vmatprep.subr.mxu0 0.0
        %333 = vmatpush1.msra.mxu0 0.0
        %334 = vmatprep.subr.mxu0 0.0
        %335 = vmatpush1.msra.mxu0 0.0
        %336 = vmatprep.subr.mxu0 0.0
        %337 = vmatpush1.msra.mxu0 0.0
        %338 = vmatprep.subr.mxu0 0.0
        %339 = vmatpush1.msra.mxu0 0.0
        %340 = vmatprep.subr.mxu0 0.0
        %341 = vmatpush1.msra.mxu0 0.0
        %342 = vmatprep.subr.mxu0 0.0
        %343 = vmatpush1.msra.mxu0 0.0
        %344 = vmatprep.subr.mxu0 0.0
        %345 = vmatpush1.msra.mxu0 0.0
        %346 = vmatprep.subr.mxu0 0.0
        %347 = vmatpush1.msra.mxu0 0.0
        %348 = vmatprep.subr.mxu0 0.0
        %349 = vmatpush1.msra.mxu0 0.0
        %350 = vmatprep.subr.mxu0 0.0
        %351 = vmatpush1.msra.mxu0 0.0
        %352 = vmatprep.subr.mxu0 0.0
        %353 = vmatpush1.msra.mxu0 0.0
        %354 = vmatprep.subr.mxu0 0.0
        %355 = vmatpush1.msra.mxu0 0.0
        %356 = vmatprep.subr.mxu0 0.0
        %357 = vmatpush1.msra.mxu0 0.0
        %358 = vmatprep.subr.mxu0 0.0
        %359 = vmatpush1.msra.mxu0 0.0
        %v360 = vand.u32 %v308, 4294901760
        %361 = vmatprep.subr.mxu0 %v360
        %v362 = vand.u32 %v307, 4294901760
        %363 = vmatpush1.msra.mxu0 %v362
        %v364 = vand.u32 %v302, 4294901760
        %365 = vmatprep.subr.mxu0 %v364
        %v366 = vand.u32 %v301, 4294901760
        %367 = vmatpush1.msra.mxu0 %v366
        %368 = vmatprep.subr.mxu0 0.0
        %369 = vmatpush2.msra.mxu0 0.0
        %370 = vmatprep.subr.mxu0 0.0
        %371 = vmatpush2.msra.mxu0 0.0
        %372 = vmatprep.subr.mxu0 0.0
        %373 = vmatpush2.msra.mxu0 0.0
        %374 = vmatprep.subr.mxu0 0.0
        %375 = vmatpush2.msra.mxu0 0.0
        %376 = vmatprep.subr.mxu0 0.0
        %377 = vmatpush2.msra.mxu0 0.0
        %378 = vmatprep.subr.mxu0 0.0
        %379 = vmatpush2.msra.mxu0 0.0
        %380 = vmatprep.subr.mxu0 0.0
        %381 = vmatpush2.msra.mxu0 0.0
        %382 = vmatprep.subr.mxu0 0.0
        %383 = vmatpush2.msra.mxu0 0.0
        %384 = vmatprep.subr.mxu0 0.0
        %385 = vmatpush2.msra.mxu0 0.0
        %386 = vmatprep.subr.mxu0 0.0
        %387 = vmatpush2.msra.mxu0 0.0
        %388 = vmatprep.subr.mxu0 0.0
        %389 = vmatpush2.msra.mxu0 0.0
        %390 = vmatprep.subr.mxu0 0.0
        %391 = vmatpush2.msra.mxu0 0.0
        %392 = vmatprep.subr.mxu0 0.0
        %393 = vmatpush2.msra.mxu0 0.0
        %394 = vmatprep.subr.mxu0 0.0
        %395 = vmatpush2.msra.mxu0 0.0
        %396 = vmatprep.subr.mxu0 0.0
        %397 = vmatpush2.msra.mxu0 0.0
        %398 = vmatprep.subr.mxu0 0.0
        %399 = vmatpush2.msra.mxu0 0.0
        %400 = vmatprep.mubr.f32.mxu0 0.0
        %v401 = vand.u32 %v327, 4294901760
        %v402 = vsub.f32 %v327, %v401
        %v403 = vand.u32 %v402, 4294901760
        %v404 = vsub.f32 %v402, %v403
        %v405 = vand.u32 %v404, 4294901760
        %406 = vmatmul.mubr.f32.gmra.mxu0 %v405
        %v407 = vpop.f32.mrf.mxu0
        %v408 = vadd.f32 %v313, %v407
        %v409 = vpop.f32.mrf.mxu0
        %v410 = vadd.f32 %v314, %v409
        %411 = vmatprep.mubr.f32.mxu0 0.0
        %v412 = vand.u32 %v330, 4294901760
        %v413 = vsub.f32 %v330, %v412
        %v414 = vand.u32 %v413, 4294901760
        %v415 = vsub.f32 %v413, %v414
        %v416 = vand.u32 %v415, 4294901760
        %417 = vmatmul.mubr.f32.gmra.mxu0 %v416
        %v418 = vpop.f32.mrf.mxu0
        %v419 = vadd.f32 %v319, %v418
        %v420 = vpop.f32.mrf.mxu0
        %v421 = vadd.f32 %v320, %v420
        %422 = vdwg.mxu0
        %423 = vmatprep.subr.mxu0 0.0
        %424 = vmatpush1.msra.mxu0 0.0
        %425 = vmatprep.subr.mxu0 0.0
        %426 = vmatpush1.msra.mxu0 0.0
        %427 = vmatprep.subr.mxu0 0.0
        %428 = vmatpush1.msra.mxu0 0.0
        %429 = vmatprep.subr.mxu0 0.0
        %430 = vmatpush1.msra.mxu0 0.0
        %431 = vmatprep.subr.mxu0 0.0
        %432 = vmatpush1.msra.mxu0 0.0
        %433 = vmatprep.subr.mxu0 0.0
        %434 = vmatpush1.msra.mxu0 0.0
        %435 = vmatprep.subr.mxu0 0.0
        %436 = vmatpush1.msra.mxu0 0.0
        %437 = vmatprep.subr.mxu0 0.0
        %438 = vmatpush1.msra.mxu0 0.0
        %439 = vmatprep.subr.mxu0 0.0
        %440 = vmatpush1.msra.mxu0 0.0
        %441 = vmatprep.subr.mxu0 0.0
        %442 = vmatpush1.msra.mxu0 0.0
        %443 = vmatprep.subr.mxu0 0.0
        %444 = vmatpush1.msra.mxu0 0.0
        %445 = vmatprep.subr.mxu0 0.0
        %446 = vmatpush1.msra.mxu0 0.0
        %447 = vmatprep.subr.mxu0 0.0
        %448 = vmatpush1.msra.mxu0 0.0
        %449 = vmatprep.subr.mxu0 0.0
        %450 = vmatpush1.msra.mxu0 0.0
        %v451 = vand.u32 %v308, 4294901760
        %v452 = vsub.f32 %v308, %v451
        %v453 = vand.u32 %v452, 4294901760
        %v454 = vsub.f32 %v452, %v453
        %v455 = vand.u32 %v454, 4294901760
        %456 = vmatprep.subr.mxu0 %v455
        %v457 = vand.u32 %v307, 4294901760
        %v458 = vsub.f32 %v307, %v457
        %v459 = vand.u32 %v458, 4294901760
        %v460 = vsub.f32 %v458, %v459
        %v461 = vand.u32 %v460, 4294901760
        %462 = vmatpush1.msra.mxu0 %v461
        %v463 = vand.u32 %v302, 4294901760
        %v464 = vsub.f32 %v302, %v463
        %v465 = vand.u32 %v464, 4294901760
        %v466 = vsub.f32 %v464, %v465
        %v467 = vand.u32 %v466, 4294901760
        %468 = vmatprep.subr.mxu0 %v467
        %v469 = vand.u32 %v301, 4294901760
        %v470 = vsub.f32 %v301, %v469
        %v471 = vand.u32 %v470, 4294901760
        %v472 = vsub.f32 %v470, %v471
        %v473 = vand.u32 %v472, 4294901760
        %474 = vmatpush1.msra.mxu0 %v473
        %475 = vmatprep.subr.mxu0 0.0
        %476 = vmatpush2.msra.mxu0 0.0
        %477 = vmatprep.subr.mxu0 0.0
        %478 = vmatpush2.msra.mxu0 0.0
        %479 = vmatprep.subr.mxu0 0.0
        %480 = vmatpush2.msra.mxu0 0.0
        %481 = vmatprep.subr.mxu0 0.0
        %482 = vmatpush2.msra.mxu0 0.0
        %483 = vmatprep.subr.mxu0 0.0
        %484 = vmatpush2.msra.mxu0 0.0
        %485 = vmatprep.subr.mxu0 0.0
        %486 = vmatpush2.msra.mxu0 0.0
        %487 = vmatprep.subr.mxu0 0.0
        %488 = vmatpush2.msra.mxu0 0.0
        %489 = vmatprep.subr.mxu0 0.0
        %490 = vmatpush2.msra.mxu0 0.0
        %491 = vmatprep.subr.mxu0 0.0
        %492 = vmatpush2.msra.mxu0 0.0
        %493 = vmatprep.subr.mxu0 0.0
        %494 = vmatpush2.msra.mxu0 0.0
        %495 = vmatprep.subr.mxu0 0.0
        %496 = vmatpush2.msra.mxu0 0.0
        %497 = vmatprep.subr.mxu0 0.0
        %498 = vmatpush2.msra.mxu0 0.0
        %499 = vmatprep.subr.mxu0 0.0
        %500 = vmatpush2.msra.mxu0 0.0
        %501 = vmatprep.subr.mxu0 0.0
        %502 = vmatpush2.msra.mxu0 0.0
        %503 = vmatprep.subr.mxu0 0.0
        %504 = vmatpush2.msra.mxu0 0.0
        %505 = vmatprep.subr.mxu0 0.0
        %506 = vmatpush2.msra.mxu0 0.0
        %507 = vmatprep.mubr.f32.mxu0 0.0
        %v508 = vand.u32 %v327, 4294901760
        %509 = vmatmul.mubr.f32.gmra.mxu0 %v508
        %v510 = vpop.f32.mrf.mxu0
        %v511 = vadd.f32 %v408, %v510
        %v512 = vpop.f32.mrf.mxu0
        %v513 = vadd.f32 %v410, %v512
        %514 = vmatprep.mubr.f32.mxu0 0.0
        %v515 = vand.u32 %v330, 4294901760
        %516 = vmatmul.mubr.f32.gmra.mxu0 %v515
        %v517 = vpop.f32.mrf.mxu0
        %v518 = vadd.f32 %v419, %v517
        %v519 = vpop.f32.mrf.mxu0
        %v520 = vadd.f32 %v421, %v519
        %521 = vdwg.mxu0
        %522 = vmatprep.subr.mxu0 0.0
        %523 = vmatpush1.msra.mxu0 0.0
        %524 = vmatprep.subr.mxu0 0.0
        %525 = vmatpush1.msra.mxu0 0.0
        %526 = vmatprep.subr.mxu0 0.0
        %527 = vmatpush1.msra.mxu0 0.0
        %528 = vmatprep.subr.mxu0 0.0
        %529 = vmatpush1.msra.mxu0 0.0
        %530 = vmatprep.subr.mxu0 0.0
        %531 = vmatpush1.msra.mxu0 0.0
        %532 = vmatprep.subr.mxu0 0.0
        %533 = vmatpush1.msra.mxu0 0.0
        %534 = vmatprep.subr.mxu0 0.0
        %535 = vmatpush1.msra.mxu0 0.0
        %536 = vmatprep.subr.mxu0 0.0
        %537 = vmatpush1.msra.mxu0 0.0
        %538 = vmatprep.subr.mxu0 0.0
        %539 = vmatpush1.msra.mxu0 0.0
        %540 = vmatprep.subr.mxu0 0.0
        %541 = vmatpush1.msra.mxu0 0.0
        %542 = vmatprep.subr.mxu0 0.0
        %543 = vmatpush1.msra.mxu0 0.0
        %544 = vmatprep.subr.mxu0 0.0
        %545 = vmatpush1.msra.mxu0 0.0
        %546 = vmatprep.subr.mxu0 0.0
        %547 = vmatpush1.msra.mxu0 0.0
        %548 = vmatprep.subr.mxu0 0.0
        %549 = vmatpush1.msra.mxu0 0.0
        %v550 = vand.u32 %v308, 4294901760
        %v551 = vsub.f32 %v308, %v550
        %552 = vmatprep.subr.mxu0 %v551
        %v553 = vand.u32 %v307, 4294901760
        %v554 = vsub.f32 %v307, %v553
        %555 = vmatpush1.msra.mxu0 %v554
        %v556 = vand.u32 %v302, 4294901760
        %v557 = vsub.f32 %v302, %v556
        %558 = vmatprep.subr.mxu0 %v557
        %v559 = vand.u32 %v301, 4294901760
        %v560 = vsub.f32 %v301, %v559
        %561 = vmatpush1.msra.mxu0 %v560
        %562 = vmatprep.subr.mxu0 0.0
        %563 = vmatpush2.msra.mxu0 0.0
        %564 = vmatprep.subr.mxu0 0.0
        %565 = vmatpush2.msra.mxu0 0.0
        %566 = vmatprep.subr.mxu0 0.0
        %567 = vmatpush2.msra.mxu0 0.0
        %568 = vmatprep.subr.mxu0 0.0
        %569 = vmatpush2.msra.mxu0 0.0
        %570 = vmatprep.subr.mxu0 0.0
        %571 = vmatpush2.msra.mxu0 0.0
        %572 = vmatprep.subr.mxu0 0.0
        %573 = vmatpush2.msra.mxu0 0.0
        %574 = vmatprep.subr.mxu0 0.0
        %575 = vmatpush2.msra.mxu0 0.0
        %576 = vmatprep.subr.mxu0 0.0
        %577 = vmatpush2.msra.mxu0 0.0
        %578 = vmatprep.subr.mxu0 0.0
        %579 = vmatpush2.msra.mxu0 0.0
        %580 = vmatprep.subr.mxu0 0.0
        %581 = vmatpush2.msra.mxu0 0.0
        %582 = vmatprep.subr.mxu0 0.0
        %583 = vmatpush2.msra.mxu0 0.0
        %584 = vmatprep.subr.mxu0 0.0
        %585 = vmatpush2.msra.mxu0 0.0
        %586 = vmatprep.subr.mxu0 0.0
        %587 = vmatpush2.msra.mxu0 0.0
        %588 = vmatprep.subr.mxu0 0.0
        %589 = vmatpush2.msra.mxu0 0.0
        %590 = vmatprep.subr.mxu0 0.0
        %591 = vmatpush2.msra.mxu0 0.0
        %592 = vmatprep.subr.mxu0 0.0
        %593 = vmatpush2.msra.mxu0 0.0
        %594 = vmatprep.mubr.f32.mxu0 0.0
        %v595 = vand.u32 %v327, 4294901760
        %v596 = vsub.f32 %v327, %v595
        %597 = vmatmul.mubr.f32.gmra.mxu0 %v596
        %v598 = vpop.f32.mrf.mxu0
        %v599 = vadd.f32 %v511, %v598
        %v600 = vpop.f32.mrf.mxu0
        %v601 = vadd.f32 %v513, %v600
        %602 = vmatprep.mubr.f32.mxu0 0.0
        %v603 = vand.u32 %v330, 4294901760
        %v604 = vsub.f32 %v330, %v603
        %605 = vmatmul.mubr.f32.gmra.mxu0 %v604
        %v606 = vpop.f32.mrf.mxu0
        %v607 = vadd.f32 %v518, %v606
        %v608 = vpop.f32.mrf.mxu0
        %v609 = vadd.f32 %v520, %v608
        %610 = vdwg.mxu0
        %611 = vmatprep.subr.mxu0 0.0
        %612 = vmatpush1.msra.mxu0 0.0
        %613 = vmatprep.subr.mxu0 0.0
        %614 = vmatpush1.msra.mxu0 0.0
        %615 = vmatprep.subr.mxu0 0.0
        %616 = vmatpush1.msra.mxu0 0.0
        %617 = vmatprep.subr.mxu0 0.0
        %618 = vmatpush1.msra.mxu0 0.0
        %619 = vmatprep.subr.mxu0 0.0
        %620 = vmatpush1.msra.mxu0 0.0
        %621 = vmatprep.subr.mxu0 0.0
        %622 = vmatpush1.msra.mxu0 0.0
        %623 = vmatprep.subr.mxu0 0.0
        %624 = vmatpush1.msra.mxu0 0.0
        %625 = vmatprep.subr.mxu0 0.0
        %626 = vmatpush1.msra.mxu0 0.0
        %627 = vmatprep.subr.mxu0 0.0
        %628 = vmatpush1.msra.mxu0 0.0
        %629 = vmatprep.subr.mxu0 0.0
        %630 = vmatpush1.msra.mxu0 0.0
        %631 = vmatprep.subr.mxu0 0.0
        %632 = vmatpush1.msra.mxu0 0.0
        %633 = vmatprep.subr.mxu0 0.0
        %634 = vmatpush1.msra.mxu0 0.0
        %635 = vmatprep.subr.mxu0 0.0
        %636 = vmatpush1.msra.mxu0 0.0
        %637 = vmatprep.subr.mxu0 0.0
        %638 = vmatpush1.msra.mxu0 0.0
        %v639 = vand.u32 %v308, 4294901760
        %640 = vmatprep.subr.mxu0 %v639
        %v641 = vand.u32 %v307, 4294901760
        %642 = vmatpush1.msra.mxu0 %v641
        %v643 = vand.u32 %v302, 4294901760
        %644 = vmatprep.subr.mxu0 %v643
        %v645 = vand.u32 %v301, 4294901760
        %646 = vmatpush1.msra.mxu0 %v645
        %647 = vmatprep.subr.mxu0 0.0
        %648 = vmatpush2.msra.mxu0 0.0
        %649 = vmatprep.subr.mxu0 0.0
        %650 = vmatpush2.msra.mxu0 0.0
        %651 = vmatprep.subr.mxu0 0.0
        %652 = vmatpush2.msra.mxu0 0.0
        %653 = vmatprep.subr.mxu0 0.0
        %654 = vmatpush2.msra.mxu0 0.0
        %655 = vmatprep.subr.mxu0 0.0
        %656 = vmatpush2.msra.mxu0 0.0
        %657 = vmatprep.subr.mxu0 0.0
        %658 = vmatpush2.msra.mxu0 0.0
        %659 = vmatprep.subr.mxu0 0.0
        %660 = vmatpush2.msra.mxu0 0.0
        %661 = vmatprep.subr.mxu0 0.0
        %662 = vmatpush2.msra.mxu0 0.0
        %663 = vmatprep.subr.mxu0 0.0
        %664 = vmatpush2.msra.mxu0 0.0
        %665 = vmatprep.subr.mxu0 0.0
        %666 = vmatpush2.msra.mxu0 0.0
        %667 = vmatprep.subr.mxu0 0.0
        %668 = vmatpush2.msra.mxu0 0.0
        %669 = vmatprep.subr.mxu0 0.0
        %670 = vmatpush2.msra.mxu0 0.0
        %671 = vmatprep.subr.mxu0 0.0
        %672 = vmatpush2.msra.mxu0 0.0
        %673 = vmatprep.subr.mxu0 0.0
        %674 = vmatpush2.msra.mxu0 0.0
        %675 = vmatprep.subr.mxu0 0.0
        %676 = vmatpush2.msra.mxu0 0.0
        %677 = vmatprep.subr.mxu0 0.0
        %678 = vmatpush2.msra.mxu0 0.0
        %679 = vmatprep.mubr.f32.mxu0 0.0
        %v680 = vand.u32 %v327, 4294901760
        %v681 = vsub.f32 %v327, %v680
        %v682 = vand.u32 %v681, 4294901760
        %683 = vmatmul.mubr.f32.gmra.mxu0 %v682
        %v684 = vpop.f32.mrf.mxu0
        %v685 = vadd.f32 %v599, %v684
        %v686 = vpop.f32.mrf.mxu0
        %v687 = vadd.f32 %v601, %v686
        %688 = vmatprep.mubr.f32.mxu0 0.0
        %v689 = vand.u32 %v330, 4294901760
        %v690 = vsub.f32 %v330, %v689
        %v691 = vand.u32 %v690, 4294901760
        %692 = vmatmul.mubr.f32.gmra.mxu0 %v691
        %v693 = vpop.f32.mrf.mxu0
        %v694 = vadd.f32 %v607, %v693
        %v695 = vpop.f32.mrf.mxu0
        %v696 = vadd.f32 %v609, %v695
        %697 = vdwg.mxu0
        %698 = vmatprep.subr.mxu0 0.0
        %699 = vmatpush1.msra.mxu0 0.0
        %700 = vmatprep.subr.mxu0 0.0
        %701 = vmatpush1.msra.mxu0 0.0
        %702 = vmatprep.subr.mxu0 0.0
        %703 = vmatpush1.msra.mxu0 0.0
        %704 = vmatprep.subr.mxu0 0.0
        %705 = vmatpush1.msra.mxu0 0.0
        %706 = vmatprep.subr.mxu0 0.0
        %707 = vmatpush1.msra.mxu0 0.0
        %708 = vmatprep.subr.mxu0 0.0
        %709 = vmatpush1.msra.mxu0 0.0
        %710 = vmatprep.subr.mxu0 0.0
        %711 = vmatpush1.msra.mxu0 0.0
        %712 = vmatprep.subr.mxu0 0.0
        %713 = vmatpush1.msra.mxu0 0.0
        %714 = vmatprep.subr.mxu0 0.0
        %715 = vmatpush1.msra.mxu0 0.0
        %716 = vmatprep.subr.mxu0 0.0
        %717 = vmatpush1.msra.mxu0 0.0
        %718 = vmatprep.subr.mxu0 0.0
        %719 = vmatpush1.msra.mxu0 0.0
        %720 = vmatprep.subr.mxu0 0.0
        %721 = vmatpush1.msra.mxu0 0.0
        %722 = vmatprep.subr.mxu0 0.0
        %723 = vmatpush1.msra.mxu0 0.0
        %724 = vmatprep.subr.mxu0 0.0
        %725 = vmatpush1.msra.mxu0 0.0
        %v726 = vand.u32 %v308, 4294901760
        %v727 = vsub.f32 %v308, %v726
        %v728 = vand.u32 %v727, 4294901760
        %729 = vmatprep.subr.mxu0 %v728
        %v730 = vand.u32 %v307, 4294901760
        %v731 = vsub.f32 %v307, %v730
        %v732 = vand.u32 %v731, 4294901760
        %733 = vmatpush1.msra.mxu0 %v732
        %v734 = vand.u32 %v302, 4294901760
        %v735 = vsub.f32 %v302, %v734
        %v736 = vand.u32 %v735, 4294901760
        %737 = vmatprep.subr.mxu0 %v736
        %v738 = vand.u32 %v301, 4294901760
        %v739 = vsub.f32 %v301, %v738
        %v740 = vand.u32 %v739, 4294901760
        %741 = vmatpush1.msra.mxu0 %v740
        %742 = vmatprep.subr.mxu0 0.0
        %743 = vmatpush2.msra.mxu0 0.0
        %744 = vmatprep.subr.mxu0 0.0
        %745 = vmatpush2.msra.mxu0 0.0
        %746 = vmatprep.subr.mxu0 0.0
        %747 = vmatpush2.msra.mxu0 0.0
        %748 = vmatprep.subr.mxu0 0.0
        %749 = vmatpush2.msra.mxu0 0.0
        %750 = vmatprep.subr.mxu0 0.0
        %751 = vmatpush2.msra.mxu0 0.0
        %752 = vmatprep.subr.mxu0 0.0
        %753 = vmatpush2.msra.mxu0 0.0
        %754 = vmatprep.subr.mxu0 0.0
        %755 = vmatpush2.msra.mxu0 0.0
        %756 = vmatprep.subr.mxu0 0.0
        %757 = vmatpush2.msra.mxu0 0.0
        %758 = vmatprep.subr.mxu0 0.0
        %759 = vmatpush2.msra.mxu0 0.0
        %760 = vmatprep.subr.mxu0 0.0
        %761 = vmatpush2.msra.mxu0 0.0
        %762 = vmatprep.subr.mxu0 0.0
        %763 = vmatpush2.msra.mxu0 0.0
        %764 = vmatprep.subr.mxu0 0.0
        %765 = vmatpush2.msra.mxu0 0.0
        %766 = vmatprep.subr.mxu0 0.0
        %767 = vmatpush2.msra.mxu0 0.0
        %768 = vmatprep.subr.mxu0 0.0
        %769 = vmatpush2.msra.mxu0 0.0
        %770 = vmatprep.subr.mxu0 0.0
        %771 = vmatpush2.msra.mxu0 0.0
        %772 = vmatprep.subr.mxu0 0.0
        %773 = vmatpush2.msra.mxu0 0.0
        %774 = vmatprep.mubr.f32.mxu0 0.0
        %v775 = vand.u32 %v327, 4294901760
        %776 = vmatmul.mubr.f32.gmra.mxu0 %v775
        %v777 = vpop.f32.mrf.mxu0
        %v778 = vadd.f32 %v685, %v777
        %v779 = vpop.f32.mrf.mxu0
        %v780 = vadd.f32 %v687, %v779
        %781 = vmatprep.mubr.f32.mxu0 0.0
        %v782 = vand.u32 %v330, 4294901760
        %783 = vmatmul.mubr.f32.gmra.mxu0 %v782
        %v784 = vpop.f32.mrf.mxu0
        %v785 = vadd.f32 %v694, %v784
        %v786 = vpop.f32.mrf.mxu0
        %v787 = vadd.f32 %v696, %v786
        %788 = vdwg.mxu0
        %789 = vmatprep.subr.mxu0 0.0
        %790 = vmatpush1.msra.mxu0 0.0
        %791 = vmatprep.subr.mxu0 0.0
        %792 = vmatpush1.msra.mxu0 0.0
        %793 = vmatprep.subr.mxu0 0.0
        %794 = vmatpush1.msra.mxu0 0.0
        %795 = vmatprep.subr.mxu0 0.0
        %796 = vmatpush1.msra.mxu0 0.0
        %797 = vmatprep.subr.mxu0 0.0
        %798 = vmatpush1.msra.mxu0 0.0
        %799 = vmatprep.subr.mxu0 0.0
        %800 = vmatpush1.msra.mxu0 0.0
        %801 = vmatprep.subr.mxu0 0.0
        %802 = vmatpush1.msra.mxu0 0.0
        %803 = vmatprep.subr.mxu0 0.0
        %804 = vmatpush1.msra.mxu0 0.0
        %805 = vmatprep.subr.mxu0 0.0
        %806 = vmatpush1.msra.mxu0 0.0
        %807 = vmatprep.subr.mxu0 0.0
        %808 = vmatpush1.msra.mxu0 0.0
        %809 = vmatprep.subr.mxu0 0.0
        %810 = vmatpush1.msra.mxu0 0.0
        %811 = vmatprep.subr.mxu0 0.0
        %812 = vmatpush1.msra.mxu0 0.0
        %813 = vmatprep.subr.mxu0 0.0
        %814 = vmatpush1.msra.mxu0 0.0
        %815 = vmatprep.subr.mxu0 0.0
        %816 = vmatpush1.msra.mxu0 0.0
        %v817 = vand.u32 %v308, 4294901760
        %818 = vmatprep.subr.mxu0 %v817
        %v819 = vand.u32 %v307, 4294901760
        %820 = vmatpush1.msra.mxu0 %v819
        %v821 = vand.u32 %v302, 4294901760
        %822 = vmatprep.subr.mxu0 %v821
        %v823 = vand.u32 %v301, 4294901760
        %824 = vmatpush1.msra.mxu0 %v823
        %825 = vmatprep.subr.mxu0 0.0
        %826 = vmatpush2.msra.mxu0 0.0
        %827 = vmatprep.subr.mxu0 0.0
        %828 = vmatpush2.msra.mxu0 0.0
        %829 = vmatprep.subr.mxu0 0.0
        %830 = vmatpush2.msra.mxu0 0.0
        %831 = vmatprep.subr.mxu0 0.0
        %832 = vmatpush2.msra.mxu0 0.0
        %833 = vmatprep.subr.mxu0 0.0
        %834 = vmatpush2.msra.mxu0 0.0
        %835 = vmatprep.subr.mxu0 0.0
        %836 = vmatpush2.msra.mxu0 0.0
        %837 = vmatprep.subr.mxu0 0.0
        %838 = vmatpush2.msra.mxu0 0.0
        %839 = vmatprep.subr.mxu0 0.0
        %840 = vmatpush2.msra.mxu0 0.0
        %841 = vmatprep.subr.mxu0 0.0
        %842 = vmatpush2.msra.mxu0 0.0
        %843 = vmatprep.subr.mxu0 0.0
        %844 = vmatpush2.msra.mxu0 0.0
        %845 = vmatprep.subr.mxu0 0.0
        %846 = vmatpush2.msra.mxu0 0.0
        %847 = vmatprep.subr.mxu0 0.0
        %848 = vmatpush2.msra.mxu0 0.0
        %849 = vmatprep.subr.mxu0 0.0
        %850 = vmatpush2.msra.mxu0 0.0
        %851 = vmatprep.subr.mxu0 0.0
        %852 = vmatpush2.msra.mxu0 0.0
        %853 = vmatprep.subr.mxu0 0.0
        %854 = vmatpush2.msra.mxu0 0.0
        %855 = vmatprep.subr.mxu0 0.0
        %856 = vmatpush2.msra.mxu0 0.0
        %857 = vmatprep.mubr.f32.mxu0 0.0
        %v858 = vand.u32 %v327, 4294901760
        %859 = vmatmul.mubr.f32.gmra.mxu0 %v858
        %v860 = vpop.f32.mrf.mxu0
        %v861 = vadd.f32 %v778, %v860
        %v862 = vpop.f32.mrf.mxu0
        %v863 = vadd.f32 %v780, %v862
        %864 = vmatprep.mubr.f32.mxu0 0.0
        %v865 = vand.u32 %v330, 4294901760
        %866 = vmatmul.mubr.f32.gmra.mxu0 %v865
        %v867 = vpop.f32.mrf.mxu0
        %v868 = vadd.f32 %v785, %v867
        %v869 = vpop.f32.mrf.mxu0
        %v870 = vadd.f32 %v787, %v869
        %871 = vdwg.mxu0
        %872 = vmatprep.subr.mxu0 0.0
        %873 = vmatpush1.msra.mxu0 0.0
        %874 = vmatprep.subr.mxu0 0.0
        %875 = vmatpush1.msra.mxu0 0.0
        %876 = vmatprep.subr.mxu0 0.0
        %877 = vmatpush1.msra.mxu0 0.0
        %878 = vmatprep.subr.mxu0 0.0
        %879 = vmatpush1.msra.mxu0 0.0
        %880 = vmatprep.subr.mxu0 0.0
        %881 = vmatpush1.msra.mxu0 0.0
        %882 = vmatprep.subr.mxu0 0.0
        %883 = vmatpush1.msra.mxu0 0.0
        %884 = vmatprep.subr.mxu0 0.0
        %885 = vmatpush1.msra.mxu0 0.0
        %886 = vmatprep.subr.mxu0 0.0
        %887 = vmatpush1.msra.mxu0 0.0
        %888 = vmatprep.subr.mxu0 0.0
        %889 = vmatpush1.msra.mxu0 0.0
        %890 = vmatprep.subr.mxu0 0.0
        %891 = vmatpush1.msra.mxu0 0.0
        %892 = vmatprep.subr.mxu0 0.0
        %893 = vmatpush1.msra.mxu0 0.0
        %894 = vmatprep.subr.mxu0 0.0
        %895 = vmatpush1.msra.mxu0 0.0
        %896 = vmatprep.subr.mxu0 0.0
        %897 = vmatpush1.msra.mxu0 0.0
        %898 = vmatprep.subr.mxu0 0.0
        %899 = vmatpush1.msra.mxu0 0.0
        %v900 = vand.u32 %v310, 4294901760
        %901 = vmatprep.subr.mxu0 %v900
        %v902 = vand.u32 %v309, 4294901760
        %903 = vmatpush1.msra.mxu0 %v902
        %v904 = vand.u32 %v304, 4294901760
        %905 = vmatprep.subr.mxu0 %v904
        %v906 = vand.u32 %v303, 4294901760
        %907 = vmatpush1.msra.mxu0 %v906
        %908 = vmatprep.subr.mxu0 0.0
        %909 = vmatpush2.msra.mxu0 0.0
        %910 = vmatprep.subr.mxu0 0.0
        %911 = vmatpush2.msra.mxu0 0.0
        %912 = vmatprep.subr.mxu0 0.0
        %913 = vmatpush2.msra.mxu0 0.0
        %914 = vmatprep.subr.mxu0 0.0
        %915 = vmatpush2.msra.mxu0 0.0
        %916 = vmatprep.subr.mxu0 0.0
        %917 = vmatpush2.msra.mxu0 0.0
        %918 = vmatprep.subr.mxu0 0.0
        %919 = vmatpush2.msra.mxu0 0.0
        %920 = vmatprep.subr.mxu0 0.0
        %921 = vmatpush2.msra.mxu0 0.0
        %922 = vmatprep.subr.mxu0 0.0
        %923 = vmatpush2.msra.mxu0 0.0
        %924 = vmatprep.subr.mxu0 0.0
        %925 = vmatpush2.msra.mxu0 0.0
        %926 = vmatprep.subr.mxu0 0.0
        %927 = vmatpush2.msra.mxu0 0.0
        %928 = vmatprep.subr.mxu0 0.0
        %929 = vmatpush2.msra.mxu0 0.0
        %930 = vmatprep.subr.mxu0 0.0
        %931 = vmatpush2.msra.mxu0 0.0
        %932 = vmatprep.subr.mxu0 0.0
        %933 = vmatpush2.msra.mxu0 0.0
        %934 = vmatprep.subr.mxu0 0.0
        %935 = vmatpush2.msra.mxu0 0.0
        %936 = vmatprep.subr.mxu0 0.0
        %937 = vmatpush2.msra.mxu0 0.0
        %938 = vmatprep.subr.mxu0 0.0
        %939 = vmatpush2.msra.mxu0 0.0
        %940 = vmatprep.mubr.f32.mxu0 0.0
        %v941 = vand.u32 %v327, 4294901760
        %v942 = vsub.f32 %v327, %v941
        %v943 = vand.u32 %v942, 4294901760
        %v944 = vsub.f32 %v942, %v943
        %v945 = vand.u32 %v944, 4294901760
        %946 = vmatmul.mubr.f32.gmra.mxu0 %v945
        %v947 = vpop.f32.mrf.mxu0
        %v948 = vadd.f32 %v315, %v947
        %v949 = vpop.f32.mrf.mxu0
        %v950 = vadd.f32 %v316, %v949
        %951 = vmatprep.mubr.f32.mxu0 0.0
        %v952 = vand.u32 %v330, 4294901760
        %v953 = vsub.f32 %v330, %v952
        %v954 = vand.u32 %v953, 4294901760
        %v955 = vsub.f32 %v953, %v954
        %v956 = vand.u32 %v955, 4294901760
        %957 = vmatmul.mubr.f32.gmra.mxu0 %v956
        %v958 = vpop.f32.mrf.mxu0
        %v959 = vadd.f32 %v321, %v958
        %v960 = vpop.f32.mrf.mxu0
        %v961 = vadd.f32 %v322, %v960
        %962 = vdwg.mxu0
        %963 = vmatprep.subr.mxu0 0.0
        %964 = vmatpush1.msra.mxu0 0.0
        %965 = vmatprep.subr.mxu0 0.0
        %966 = vmatpush1.msra.mxu0 0.0
        %967 = vmatprep.subr.mxu0 0.0
        %968 = vmatpush1.msra.mxu0 0.0
        %969 = vmatprep.subr.mxu0 0.0
        %970 = vmatpush1.msra.mxu0 0.0
        %971 = vmatprep.subr.mxu0 0.0
        %972 = vmatpush1.msra.mxu0 0.0
        %973 = vmatprep.subr.mxu0 0.0
        %974 = vmatpush1.msra.mxu0 0.0
        %975 = vmatprep.subr.mxu0 0.0
        %976 = vmatpush1.msra.mxu0 0.0
        %977 = vmatprep.subr.mxu0 0.0
        %978 = vmatpush1.msra.mxu0 0.0
        %979 = vmatprep.subr.mxu0 0.0
        %980 = vmatpush1.msra.mxu0 0.0
        %981 = vmatprep.subr.mxu0 0.0
        %982 = vmatpush1.msra.mxu0 0.0
        %983 = vmatprep.subr.mxu0 0.0
        %984 = vmatpush1.msra.mxu0 0.0
        %985 = vmatprep.subr.mxu0 0.0
        %986 = vmatpush1.msra.mxu0 0.0
        %987 = vmatprep.subr.mxu0 0.0
        %988 = vmatpush1.msra.mxu0 0.0
        %989 = vmatprep.subr.mxu0 0.0
        %990 = vmatpush1.msra.mxu0 0.0
        %v991 = vand.u32 %v310, 4294901760
        %v992 = vsub.f32 %v310, %v991
        %v993 = vand.u32 %v992, 4294901760
        %v994 = vsub.f32 %v992, %v993
        %v995 = vand.u32 %v994, 4294901760
        %996 = vmatprep.subr.mxu0 %v995
        %v997 = vand.u32 %v309, 4294901760
        %v998 = vsub.f32 %v309, %v997
        %v999 = vand.u32 %v998, 4294901760
        %v1000 = vsub.f32 %v998, %v999
        %v1001 = vand.u32 %v1000, 4294901760
        %1002 = vmatpush1.msra.mxu0 %v1001
        %v1003 = vand.u32 %v304, 4294901760
        %v1004 = vsub.f32 %v304, %v1003
        %v1005 = vand.u32 %v1004, 4294901760
        %v1006 = vsub.f32 %v1004, %v1005
        %v1007 = vand.u32 %v1006, 4294901760
        %1008 = vmatprep.subr.mxu0 %v1007
        %v1009 = vand.u32 %v303, 4294901760
        %v1010 = vsub.f32 %v303, %v1009
        %v1011 = vand.u32 %v1010, 4294901760
        %v1012 = vsub.f32 %v1010, %v1011
        %v1013 = vand.u32 %v1012, 4294901760
        %1014 = vmatpush1.msra.mxu0 %v1013
        %1015 = vmatprep.subr.mxu0 0.0
        %1016 = vmatpush2.msra.mxu0 0.0
        %1017 = vmatprep.subr.mxu0 0.0
        %1018 = vmatpush2.msra.mxu0 0.0
        %1019 = vmatprep.subr.mxu0 0.0
        %1020 = vmatpush2.msra.mxu0 0.0
        %1021 = vmatprep.subr.mxu0 0.0
        %1022 = vmatpush2.msra.mxu0 0.0
        %1023 = vmatprep.subr.mxu0 0.0
        %1024 = vmatpush2.msra.mxu0 0.0
        %1025 = vmatprep.subr.mxu0 0.0
        %1026 = vmatpush2.msra.mxu0 0.0
        %1027 = vmatprep.subr.mxu0 0.0
        %1028 = vmatpush2.msra.mxu0 0.0
        %1029 = vmatprep.subr.mxu0 0.0
        %1030 = vmatpush2.msra.mxu0 0.0
        %1031 = vmatprep.subr.mxu0 0.0
        %1032 = vmatpush2.msra.mxu0 0.0
        %1033 = vmatprep.subr.mxu0 0.0
        %1034 = vmatpush2.msra.mxu0 0.0
        %1035 = vmatprep.subr.mxu0 0.0
        %1036 = vmatpush2.msra.mxu0 0.0
        %1037 = vmatprep.subr.mxu0 0.0
        %1038 = vmatpush2.msra.mxu0 0.0
        %1039 = vmatprep.subr.mxu0 0.0
        %1040 = vmatpush2.msra.mxu0 0.0
        %1041 = vmatprep.subr.mxu0 0.0
        %1042 = vmatpush2.msra.mxu0 0.0
        %1043 = vmatprep.subr.mxu0 0.0
        %1044 = vmatpush2.msra.mxu0 0.0
        %1045 = vmatprep.subr.mxu0 0.0
        %1046 = vmatpush2.msra.mxu0 0.0
        %1047 = vmatprep.mubr.f32.mxu0 0.0
        %v1048 = vand.u32 %v327, 4294901760
        %1049 = vmatmul.mubr.f32.gmra.mxu0 %v1048
        %v1050 = vpop.f32.mrf.mxu0
        %v1051 = vadd.f32 %v948, %v1050
        %v1052 = vpop.f32.mrf.mxu0
        %v1053 = vadd.f32 %v950, %v1052
        %1054 = vmatprep.mubr.f32.mxu0 0.0
        %v1055 = vand.u32 %v330, 4294901760
        %1056 = vmatmul.mubr.f32.gmra.mxu0 %v1055
        %v1057 = vpop.f32.mrf.mxu0
        %v1058 = vadd.f32 %v959, %v1057
        %v1059 = vpop.f32.mrf.mxu0
        %v1060 = vadd.f32 %v961, %v1059
        %1061 = vdwg.mxu0
        %1062 = vmatprep.subr.mxu0 0.0
        %1063 = vmatpush1.msra.mxu0 0.0
        %1064 = vmatprep.subr.mxu0 0.0
        %1065 = vmatpush1.msra.mxu0 0.0
        %1066 = vmatprep.subr.mxu0 0.0
        %1067 = vmatpush1.msra.mxu0 0.0
        %1068 = vmatprep.subr.mxu0 0.0
        %1069 = vmatpush1.msra.mxu0 0.0
        %1070 = vmatprep.subr.mxu0 0.0
        %1071 = vmatpush1.msra.mxu0 0.0
        %1072 = vmatprep.subr.mxu0 0.0
        %1073 = vmatpush1.msra.mxu0 0.0
        %1074 = vmatprep.subr.mxu0 0.0
        %1075 = vmatpush1.msra.mxu0 0.0
        %1076 = vmatprep.subr.mxu0 0.0
        %1077 = vmatpush1.msra.mxu0 0.0
        %1078 = vmatprep.subr.mxu0 0.0
        %1079 = vmatpush1.msra.mxu0 0.0
        %1080 = vmatprep.subr.mxu0 0.0
        %1081 = vmatpush1.msra.mxu0 0.0
        %1082 = vmatprep.subr.mxu0 0.0
        %1083 = vmatpush1.msra.mxu0 0.0
        %1084 = vmatprep.subr.mxu0 0.0
        %1085 = vmatpush1.msra.mxu0 0.0
        %1086 = vmatprep.subr.mxu0 0.0
        %1087 = vmatpush1.msra.mxu0 0.0
        %1088 = vmatprep.subr.mxu0 0.0
        %1089 = vmatpush1.msra.mxu0 0.0
        %v1090 = vand.u32 %v310, 4294901760
        %v1091 = vsub.f32 %v310, %v1090
        %1092 = vmatprep.subr.mxu0 %v1091
        %v1093 = vand.u32 %v309, 4294901760
        %v1094 = vsub.f32 %v309, %v1093
        %1095 = vmatpush1.msra.mxu0 %v1094
        %v1096 = vand.u32 %v304, 4294901760
        %v1097 = vsub.f32 %v304, %v1096
        %1098 = vmatprep.subr.mxu0 %v1097
        %v1099 = vand.u32 %v303, 4294901760
        %v1100 = vsub.f32 %v303, %v1099
        %1101 = vmatpush1.msra.mxu0 %v1100
        %1102 = vmatprep.subr.mxu0 0.0
        %1103 = vmatpush2.msra.mxu0 0.0
        %1104 = vmatprep.subr.mxu0 0.0
        %1105 = vmatpush2.msra.mxu0 0.0
        %1106 = vmatprep.subr.mxu0 0.0
        %1107 = vmatpush2.msra.mxu0 0.0
        %1108 = vmatprep.subr.mxu0 0.0
        %1109 = vmatpush2.msra.mxu0 0.0
        %1110 = vmatprep.subr.mxu0 0.0
        %1111 = vmatpush2.msra.mxu0 0.0
        %1112 = vmatprep.subr.mxu0 0.0
        %1113 = vmatpush2.msra.mxu0 0.0
        %1114 = vmatprep.subr.mxu0 0.0
        %1115 = vmatpush2.msra.mxu0 0.0
        %1116 = vmatprep.subr.mxu0 0.0
        %1117 = vmatpush2.msra.mxu0 0.0
        %1118 = vmatprep.subr.mxu0 0.0
        %1119 = vmatpush2.msra.mxu0 0.0
        %1120 = vmatprep.subr.mxu0 0.0
        %1121 = vmatpush2.msra.mxu0 0.0
        %1122 = vmatprep.subr.mxu0 0.0
        %1123 = vmatpush2.msra.mxu0 0.0
        %1124 = vmatprep.subr.mxu0 0.0
        %1125 = vmatpush2.msra.mxu0 0.0
        %1126 = vmatprep.subr.mxu0 0.0
        %1127 = vmatpush2.msra.mxu0 0.0
        %1128 = vmatprep.subr.mxu0 0.0
        %1129 = vmatpush2.msra.mxu0 0.0
        %1130 = vmatprep.subr.mxu0 0.0
        %1131 = vmatpush2.msra.mxu0 0.0
        %1132 = vmatprep.subr.mxu0 0.0
        %1133 = vmatpush2.msra.mxu0 0.0
        %1134 = vmatprep.mubr.f32.mxu0 0.0
        %v1135 = vand.u32 %v327, 4294901760
        %v1136 = vsub.f32 %v327, %v1135
        %1137 = vmatmul.mubr.f32.gmra.mxu0 %v1136
        %v1138 = vpop.f32.mrf.mxu0
        %v1139 = vadd.f32 %v1051, %v1138
        %v1140 = vpop.f32.mrf.mxu0
        %v1141 = vadd.f32 %v1053, %v1140
        %1142 = vmatprep.mubr.f32.mxu0 0.0
        %v1143 = vand.u32 %v330, 4294901760
        %v1144 = vsub.f32 %v330, %v1143
        %1145 = vmatmul.mubr.f32.gmra.mxu0 %v1144
        %v1146 = vpop.f32.mrf.mxu0
        %v1147 = vadd.f32 %v1058, %v1146
        %v1148 = vpop.f32.mrf.mxu0
        %v1149 = vadd.f32 %v1060, %v1148
        %1150 = vdwg.mxu0
        %1151 = vmatprep.subr.mxu0 0.0
        %1152 = vmatpush1.msra.mxu0 0.0
        %1153 = vmatprep.subr.mxu0 0.0
        %1154 = vmatpush1.msra.mxu0 0.0
        %1155 = vmatprep.subr.mxu0 0.0
        %1156 = vmatpush1.msra.mxu0 0.0
        %1157 = vmatprep.subr.mxu0 0.0
        %1158 = vmatpush1.msra.mxu0 0.0
        %1159 = vmatprep.subr.mxu0 0.0
        %1160 = vmatpush1.msra.mxu0 0.0
        %1161 = vmatprep.subr.mxu0 0.0
        %1162 = vmatpush1.msra.mxu0 0.0
        %1163 = vmatprep.subr.mxu0 0.0
        %1164 = vmatpush1.msra.mxu0 0.0
        %1165 = vmatprep.subr.mxu0 0.0
        %1166 = vmatpush1.msra.mxu0 0.0
        %1167 = vmatprep.subr.mxu0 0.0
        %1168 = vmatpush1.msra.mxu0 0.0
        %1169 = vmatprep.subr.mxu0 0.0
        %1170 = vmatpush1.msra.mxu0 0.0
        %1171 = vmatprep.subr.mxu0 0.0
        %1172 = vmatpush1.msra.mxu0 0.0
        %1173 = vmatprep.subr.mxu0 0.0
        %1174 = vmatpush1.msra.mxu0 0.0
        %1175 = vmatprep.subr.mxu0 0.0
        %1176 = vmatpush1.msra.mxu0 0.0
        %1177 = vmatprep.subr.mxu0 0.0
        %1178 = vmatpush1.msra.mxu0 0.0
        %v1179 = vand.u32 %v310, 4294901760
        %1180 = vmatprep.subr.mxu0 %v1179
        %v1181 = vand.u32 %v309, 4294901760
        %1182 = vmatpush1.msra.mxu0 %v1181
        %v1183 = vand.u32 %v304, 4294901760
        %1184 = vmatprep.subr.mxu0 %v1183
        %v1185 = vand.u32 %v303, 4294901760
        %1186 = vmatpush1.msra.mxu0 %v1185
        %1187 = vmatprep.subr.mxu0 0.0
        %1188 = vmatpush2.msra.mxu0 0.0
        %1189 = vmatprep.subr.mxu0 0.0
        %1190 = vmatpush2.msra.mxu0 0.0
        %1191 = vmatprep.subr.mxu0 0.0
        %1192 = vmatpush2.msra.mxu0 0.0
        %1193 = vmatprep.subr.mxu0 0.0
        %1194 = vmatpush2.msra.mxu0 0.0
        %1195 = vmatprep.subr.mxu0 0.0
        %1196 = vmatpush2.msra.mxu0 0.0
        %1197 = vmatprep.subr.mxu0 0.0
        %1198 = vmatpush2.msra.mxu0 0.0
        %1199 = vmatprep.subr.mxu0 0.0
        %1200 = vmatpush2.msra.mxu0 0.0
        %1201 = vmatprep.subr.mxu0 0.0
        %1202 = vmatpush2.msra.mxu0 0.0
        %1203 = vmatprep.subr.mxu0 0.0
        %1204 = vmatpush2.msra.mxu0 0.0
        %1205 = vmatprep.subr.mxu0 0.0
        %1206 = vmatpush2.msra.mxu0 0.0
        %1207 = vmatprep.subr.mxu0 0.0
        %1208 = vmatpush2.msra.mxu0 0.0
        %1209 = vmatprep.subr.mxu0 0.0
        %1210 = vmatpush2.msra.mxu0 0.0
        %1211 = vmatprep.subr.mxu0 0.0
        %1212 = vmatpush2.msra.mxu0 0.0
        %1213 = vmatprep.subr.mxu0 0.0
        %1214 = vmatpush2.msra.mxu0 0.0
        %1215 = vmatprep.subr.mxu0 0.0
        %1216 = vmatpush2.msra.mxu0 0.0
        %1217 = vmatprep.subr.mxu0 0.0
        %1218 = vmatpush2.msra.mxu0 0.0
        %1219 = vmatprep.mubr.f32.mxu0 0.0
        %v1220 = vand.u32 %v327, 4294901760
        %v1221 = vsub.f32 %v327, %v1220
        %v1222 = vand.u32 %v1221, 4294901760
        %1223 = vmatmul.mubr.f32.gmra.mxu0 %v1222
        %v1224 = vpop.f32.mrf.mxu0
        %v1225 = vadd.f32 %v1139, %v1224
        %v1226 = vpop.f32.mrf.mxu0
        %v1227 = vadd.f32 %v1141, %v1226
        %1228 = vmatprep.mubr.f32.mxu0 0.0
        %v1229 = vand.u32 %v330, 4294901760
        %v1230 = vsub.f32 %v330, %v1229
        %v1231 = vand.u32 %v1230, 4294901760
        %1232 = vmatmul.mubr.f32.gmra.mxu0 %v1231
        %v1233 = vpop.f32.mrf.mxu0
        %v1234 = vadd.f32 %v1147, %v1233
        %v1235 = vpop.f32.mrf.mxu0
        %v1236 = vadd.f32 %v1149, %v1235
        %1237 = vdwg.mxu0
        %1238 = vmatprep.subr.mxu0 0.0
        %1239 = vmatpush1.msra.mxu0 0.0
        %1240 = vmatprep.subr.mxu0 0.0
        %1241 = vmatpush1.msra.mxu0 0.0
        %1242 = vmatprep.subr.mxu0 0.0
        %1243 = vmatpush1.msra.mxu0 0.0
        %1244 = vmatprep.subr.mxu0 0.0
        %1245 = vmatpush1.msra.mxu0 0.0
        %1246 = vmatprep.subr.mxu0 0.0
        %1247 = vmatpush1.msra.mxu0 0.0
        %1248 = vmatprep.subr.mxu0 0.0
        %1249 = vmatpush1.msra.mxu0 0.0
        %1250 = vmatprep.subr.mxu0 0.0
        %1251 = vmatpush1.msra.mxu0 0.0
        %1252 = vmatprep.subr.mxu0 0.0
        %1253 = vmatpush1.msra.mxu0 0.0
        %1254 = vmatprep.subr.mxu0 0.0
        %1255 = vmatpush1.msra.mxu0 0.0
        %1256 = vmatprep.subr.mxu0 0.0
        %1257 = vmatpush1.msra.mxu0 0.0
        %1258 = vmatprep.subr.mxu0 0.0
        %1259 = vmatpush1.msra.mxu0 0.0
        %1260 = vmatprep.subr.mxu0 0.0
        %1261 = vmatpush1.msra.mxu0 0.0
        %1262 = vmatprep.subr.mxu0 0.0
        %1263 = vmatpush1.msra.mxu0 0.0
        %1264 = vmatprep.subr.mxu0 0.0
        %1265 = vmatpush1.msra.mxu0 0.0
        %v1266 = vand.u32 %v310, 4294901760
        %v1267 = vsub.f32 %v310, %v1266
        %v1268 = vand.u32 %v1267, 4294901760
        %1269 = vmatprep.subr.mxu0 %v1268
        %v1270 = vand.u32 %v309, 4294901760
        %v1271 = vsub.f32 %v309, %v1270
        %v1272 = vand.u32 %v1271, 4294901760
        %1273 = vmatpush1.msra.mxu0 %v1272
        %v1274 = vand.u32 %v304, 4294901760
        %v1275 = vsub.f32 %v304, %v1274
        %v1276 = vand.u32 %v1275, 4294901760
        %1277 = vmatprep.subr.mxu0 %v1276
        %v1278 = vand.u32 %v303, 4294901760
        %v1279 = vsub.f32 %v303, %v1278
        %v1280 = vand.u32 %v1279, 4294901760
        %1281 = vmatpush1.msra.mxu0 %v1280
        %1282 = vmatprep.subr.mxu0 0.0
        %1283 = vmatpush2.msra.mxu0 0.0
        %1284 = vmatprep.subr.mxu0 0.0
        %1285 = vmatpush2.msra.mxu0 0.0
        %1286 = vmatprep.subr.mxu0 0.0
        %1287 = vmatpush2.msra.mxu0 0.0
        %1288 = vmatprep.subr.mxu0 0.0
        %1289 = vmatpush2.msra.mxu0 0.0
        %1290 = vmatprep.subr.mxu0 0.0
        %1291 = vmatpush2.msra.mxu0 0.0
        %1292 = vmatprep.subr.mxu0 0.0
        %1293 = vmatpush2.msra.mxu0 0.0
        %1294 = vmatprep.subr.mxu0 0.0
        %1295 = vmatpush2.msra.mxu0 0.0
        %1296 = vmatprep.subr.mxu0 0.0
        %1297 = vmatpush2.msra.mxu0 0.0
        %1298 = vmatprep.subr.mxu0 0.0
        %1299 = vmatpush2.msra.mxu0 0.0
        %1300 = vmatprep.subr.mxu0 0.0
        %1301 = vmatpush2.msra.mxu0 0.0
        %1302 = vmatprep.subr.mxu0 0.0
        %1303 = vmatpush2.msra.mxu0 0.0
        %1304 = vmatprep.subr.mxu0 0.0
        %1305 = vmatpush2.msra.mxu0 0.0
        %1306 = vmatprep.subr.mxu0 0.0
        %1307 = vmatpush2.msra.mxu0 0.0
        %1308 = vmatprep.subr.mxu0 0.0
        %1309 = vmatpush2.msra.mxu0 0.0
        %1310 = vmatprep.subr.mxu0 0.0
        %1311 = vmatpush2.msra.mxu0 0.0
        %1312 = vmatprep.subr.mxu0 0.0
        %1313 = vmatpush2.msra.mxu0 0.0
        %1314 = vmatprep.mubr.f32.mxu0 0.0
        %v1315 = vand.u32 %v327, 4294901760
        %1316 = vmatmul.mubr.f32.gmra.mxu0 %v1315
        %v1317 = vpop.f32.mrf.mxu0
        %v1318 = vadd.f32 %v1225, %v1317
        %v1319 = vpop.f32.mrf.mxu0
        %v1320 = vadd.f32 %v1227, %v1319
        %1321 = vmatprep.mubr.f32.mxu0 0.0
        %v1322 = vand.u32 %v330, 4294901760
        %1323 = vmatmul.mubr.f32.gmra.mxu0 %v1322
        %v1324 = vpop.f32.mrf.mxu0
        %v1325 = vadd.f32 %v1234, %v1324
        %v1326 = vpop.f32.mrf.mxu0
        %v1327 = vadd.f32 %v1236, %v1326
        %1328 = vdwg.mxu0
        %1329 = vmatprep.subr.mxu0 0.0
        %1330 = vmatpush1.msra.mxu0 0.0
        %1331 = vmatprep.subr.mxu0 0.0
        %1332 = vmatpush1.msra.mxu0 0.0
        %1333 = vmatprep.subr.mxu0 0.0
        %1334 = vmatpush1.msra.mxu0 0.0
        %1335 = vmatprep.subr.mxu0 0.0
        %1336 = vmatpush1.msra.mxu0 0.0
        %1337 = vmatprep.subr.mxu0 0.0
        %1338 = vmatpush1.msra.mxu0 0.0
        %1339 = vmatprep.subr.mxu0 0.0
        %1340 = vmatpush1.msra.mxu0 0.0
        %1341 = vmatprep.subr.mxu0 0.0
        %1342 = vmatpush1.msra.mxu0 0.0
        %1343 = vmatprep.subr.mxu0 0.0
        %1344 = vmatpush1.msra.mxu0 0.0
        %1345 = vmatprep.subr.mxu0 0.0
        %1346 = vmatpush1.msra.mxu0 0.0
        %1347 = vmatprep.subr.mxu0 0.0
        %1348 = vmatpush1.msra.mxu0 0.0
        %1349 = vmatprep.subr.mxu0 0.0
        %1350 = vmatpush1.msra.mxu0 0.0
        %1351 = vmatprep.subr.mxu0 0.0
        %1352 = vmatpush1.msra.mxu0 0.0
        %1353 = vmatprep.subr.mxu0 0.0
        %1354 = vmatpush1.msra.mxu0 0.0
        %1355 = vmatprep.subr.mxu0 0.0
        %1356 = vmatpush1.msra.mxu0 0.0
        %v1357 = vand.u32 %v310, 4294901760
        %1358 = vmatprep.subr.mxu0 %v1357
        %v1359 = vand.u32 %v309, 4294901760
        %1360 = vmatpush1.msra.mxu0 %v1359
        %v1361 = vand.u32 %v304, 4294901760
        %1362 = vmatprep.subr.mxu0 %v1361
        %v1363 = vand.u32 %v303, 4294901760
        %1364 = vmatpush1.msra.mxu0 %v1363
        %1365 = vmatprep.subr.mxu0 0.0
        %1366 = vmatpush2.msra.mxu0 0.0
        %1367 = vmatprep.subr.mxu0 0.0
        %1368 = vmatpush2.msra.mxu0 0.0
        %1369 = vmatprep.subr.mxu0 0.0
        %1370 = vmatpush2.msra.mxu0 0.0
        %1371 = vmatprep.subr.mxu0 0.0
        %1372 = vmatpush2.msra.mxu0 0.0
        %1373 = vmatprep.subr.mxu0 0.0
        %1374 = vmatpush2.msra.mxu0 0.0
        %1375 = vmatprep.subr.mxu0 0.0
        %1376 = vmatpush2.msra.mxu0 0.0
        %1377 = vmatprep.subr.mxu0 0.0
        %1378 = vmatpush2.msra.mxu0 0.0
        %1379 = vmatprep.subr.mxu0 0.0
        %1380 = vmatpush2.msra.mxu0 0.0
        %1381 = vmatprep.subr.mxu0 0.0
        %1382 = vmatpush2.msra.mxu0 0.0
        %1383 = vmatprep.subr.mxu0 0.0
        %1384 = vmatpush2.msra.mxu0 0.0
        %1385 = vmatprep.subr.mxu0 0.0
        %1386 = vmatpush2.msra.mxu0 0.0
        %1387 = vmatprep.subr.mxu0 0.0
        %1388 = vmatpush2.msra.mxu0 0.0
        %1389 = vmatprep.subr.mxu0 0.0
        %1390 = vmatpush2.msra.mxu0 0.0
        %1391 = vmatprep.subr.mxu0 0.0
        %1392 = vmatpush2.msra.mxu0 0.0
        %1393 = vmatprep.subr.mxu0 0.0
        %1394 = vmatpush2.msra.mxu0 0.0
        %1395 = vmatprep.subr.mxu0 0.0
        %1396 = vmatpush2.msra.mxu0 0.0
        %1397 = vmatprep.mubr.f32.mxu0 0.0
        %v1398 = vand.u32 %v327, 4294901760
        %1399 = vmatmul.mubr.f32.gmra.mxu0 %v1398
        %v1400 = vpop.f32.mrf.mxu0
        %v1401 = vadd.f32 %v1318, %v1400
        %v1402 = vpop.f32.mrf.mxu0
        %v1403 = vadd.f32 %v1320, %v1402
        %1404 = vmatprep.mubr.f32.mxu0 0.0
        %v1405 = vand.u32 %v330, 4294901760
        %1406 = vmatmul.mubr.f32.gmra.mxu0 %v1405
        %v1407 = vpop.f32.mrf.mxu0
        %v1408 = vadd.f32 %v1325, %v1407
        %v1409 = vpop.f32.mrf.mxu0
        %v1410 = vadd.f32 %v1327, %v1409
        %1411 = vdwg.mxu0
        %1412 = vmatprep.subr.mxu0 0.0
        %1413 = vmatpush1.msra.mxu0 0.0
        %1414 = vmatprep.subr.mxu0 0.0
        %1415 = vmatpush1.msra.mxu0 0.0
        %1416 = vmatprep.subr.mxu0 0.0
        %1417 = vmatpush1.msra.mxu0 0.0
        %1418 = vmatprep.subr.mxu0 0.0
        %1419 = vmatpush1.msra.mxu0 0.0
        %1420 = vmatprep.subr.mxu0 0.0
        %1421 = vmatpush1.msra.mxu0 0.0
        %1422 = vmatprep.subr.mxu0 0.0
        %1423 = vmatpush1.msra.mxu0 0.0
        %1424 = vmatprep.subr.mxu0 0.0
        %1425 = vmatpush1.msra.mxu0 0.0
        %1426 = vmatprep.subr.mxu0 0.0
        %1427 = vmatpush1.msra.mxu0 0.0
        %1428 = vmatprep.subr.mxu0 0.0
        %1429 = vmatpush1.msra.mxu0 0.0
        %1430 = vmatprep.subr.mxu0 0.0
        %1431 = vmatpush1.msra.mxu0 0.0
        %1432 = vmatprep.subr.mxu0 0.0
        %1433 = vmatpush1.msra.mxu0 0.0
        %1434 = vmatprep.subr.mxu0 0.0
        %1435 = vmatpush1.msra.mxu0 0.0
        %1436 = vmatprep.subr.mxu0 0.0
        %1437 = vmatpush1.msra.mxu0 0.0
        %1438 = vmatprep.subr.mxu0 0.0
        %1439 = vmatpush1.msra.mxu0 0.0
        %v1440 = vand.u32 %v312, 4294901760
        %1441 = vmatprep.subr.mxu0 %v1440
        %v1442 = vand.u32 %v311, 4294901760
        %1443 = vmatpush1.msra.mxu0 %v1442
        %v1444 = vand.u32 %v306, 4294901760
        %1445 = vmatprep.subr.mxu0 %v1444
        %v1446 = vand.u32 %v305, 4294901760
        %1447 = vmatpush1.msra.mxu0 %v1446
        %1448 = vmatprep.subr.mxu0 0.0
        %1449 = vmatpush2.msra.mxu0 0.0
        %1450 = vmatprep.subr.mxu0 0.0
        %1451 = vmatpush2.msra.mxu0 0.0
        %1452 = vmatprep.subr.mxu0 0.0
        %1453 = vmatpush2.msra.mxu0 0.0
        %1454 = vmatprep.subr.mxu0 0.0
        %1455 = vmatpush2.msra.mxu0 0.0
        %1456 = vmatprep.subr.mxu0 0.0
        %1457 = vmatpush2.msra.mxu0 0.0
        %1458 = vmatprep.subr.mxu0 0.0
        %1459 = vmatpush2.msra.mxu0 0.0
        %1460 = vmatprep.subr.mxu0 0.0
        %1461 = vmatpush2.msra.mxu0 0.0
        %1462 = vmatprep.subr.mxu0 0.0
        %1463 = vmatpush2.msra.mxu0 0.0
        %1464 = vmatprep.subr.mxu0 0.0
        %1465 = vmatpush2.msra.mxu0 0.0
        %1466 = vmatprep.subr.mxu0 0.0
        %1467 = vmatpush2.msra.mxu0 0.0
        %1468 = vmatprep.subr.mxu0 0.0
        %1469 = vmatpush2.msra.mxu0 0.0
        %1470 = vmatprep.subr.mxu0 0.0
        %1471 = vmatpush2.msra.mxu0 0.0
        %1472 = vmatprep.subr.mxu0 0.0
        %1473 = vmatpush2.msra.mxu0 0.0
        %1474 = vmatprep.subr.mxu0 0.0
        %1475 = vmatpush2.msra.mxu0 0.0
        %1476 = vmatprep.subr.mxu0 0.0
        %1477 = vmatpush2.msra.mxu0 0.0
        %1478 = vmatprep.subr.mxu0 0.0
        %1479 = vmatpush2.msra.mxu0 0.0
        %1480 = vmatprep.mubr.f32.mxu0 0.0
        %v1481 = vand.u32 %v327, 4294901760
        %v1482 = vsub.f32 %v327, %v1481
        %v1483 = vand.u32 %v1482, 4294901760
        %v1484 = vsub.f32 %v1482, %v1483
        %v1485 = vand.u32 %v1484, 4294901760
        %1486 = vmatmul.mubr.f32.gmra.mxu0 %v1485
        %v1487 = vpop.f32.mrf.mxu0
        %v1488 = vadd.f32 %v317, %v1487
        %v1489 = vpop.f32.mrf.mxu0
        %v1490 = vadd.f32 %v318, %v1489
        %1491 = vmatprep.mubr.f32.mxu0 0.0
        %v1492 = vand.u32 %v330, 4294901760
        %v1493 = vsub.f32 %v330, %v1492
        %v1494 = vand.u32 %v1493, 4294901760
        %v1495 = vsub.f32 %v1493, %v1494
        %v1496 = vand.u32 %v1495, 4294901760
        %1497 = vmatmul.mubr.f32.gmra.mxu0 %v1496
        %v1498 = vpop.f32.mrf.mxu0
        %v1499 = vadd.f32 %v323, %v1498
        %v1500 = vpop.f32.mrf.mxu0
        %v1501 = vadd.f32 %v324, %v1500
        %1502 = vdwg.mxu0
        %1503 = vmatprep.subr.mxu0 0.0
        %1504 = vmatpush1.msra.mxu0 0.0
        %1505 = vmatprep.subr.mxu0 0.0
        %1506 = vmatpush1.msra.mxu0 0.0
        %1507 = vmatprep.subr.mxu0 0.0
        %1508 = vmatpush1.msra.mxu0 0.0
        %1509 = vmatprep.subr.mxu0 0.0
        %1510 = vmatpush1.msra.mxu0 0.0
        %1511 = vmatprep.subr.mxu0 0.0
        %1512 = vmatpush1.msra.mxu0 0.0
        %1513 = vmatprep.subr.mxu0 0.0
        %1514 = vmatpush1.msra.mxu0 0.0
        %1515 = vmatprep.subr.mxu0 0.0
        %1516 = vmatpush1.msra.mxu0 0.0
        %1517 = vmatprep.subr.mxu0 0.0
        %1518 = vmatpush1.msra.mxu0 0.0
        %1519 = vmatprep.subr.mxu0 0.0
        %1520 = vmatpush1.msra.mxu0 0.0
        %1521 = vmatprep.subr.mxu0 0.0
        %1522 = vmatpush1.msra.mxu0 0.0
        %1523 = vmatprep.subr.mxu0 0.0
        %1524 = vmatpush1.msra.mxu0 0.0
        %1525 = vmatprep.subr.mxu0 0.0
        %1526 = vmatpush1.msra.mxu0 0.0
        %1527 = vmatprep.subr.mxu0 0.0
        %1528 = vmatpush1.msra.mxu0 0.0
        %1529 = vmatprep.subr.mxu0 0.0
        %1530 = vmatpush1.msra.mxu0 0.0
        %v1531 = vand.u32 %v312, 4294901760
        %v1532 = vsub.f32 %v312, %v1531
        %v1533 = vand.u32 %v1532, 4294901760
        %v1534 = vsub.f32 %v1532, %v1533
        %v1535 = vand.u32 %v1534, 4294901760
        %1536 = vmatprep.subr.mxu0 %v1535
        %v1537 = vand.u32 %v311, 4294901760
        %v1538 = vsub.f32 %v311, %v1537
        %v1539 = vand.u32 %v1538, 4294901760
        %v1540 = vsub.f32 %v1538, %v1539
        %v1541 = vand.u32 %v1540, 4294901760
        %1542 = vmatpush1.msra.mxu0 %v1541
        %v1543 = vand.u32 %v306, 4294901760
        %v1544 = vsub.f32 %v306, %v1543
        %v1545 = vand.u32 %v1544, 4294901760
        %v1546 = vsub.f32 %v1544, %v1545
        %v1547 = vand.u32 %v1546, 4294901760
        %1548 = vmatprep.subr.mxu0 %v1547
        %v1549 = vand.u32 %v305, 4294901760
        %v1550 = vsub.f32 %v305, %v1549
        %v1551 = vand.u32 %v1550, 4294901760
        %v1552 = vsub.f32 %v1550, %v1551
        %v1553 = vand.u32 %v1552, 4294901760
        %1554 = vmatpush1.msra.mxu0 %v1553
        %1555 = vmatprep.subr.mxu0 0.0
        %1556 = vmatpush2.msra.mxu0 0.0
        %1557 = vmatprep.subr.mxu0 0.0
        %1558 = vmatpush2.msra.mxu0 0.0
        %1559 = vmatprep.subr.mxu0 0.0
        %1560 = vmatpush2.msra.mxu0 0.0
        %1561 = vmatprep.subr.mxu0 0.0
        %1562 = vmatpush2.msra.mxu0 0.0
        %1563 = vmatprep.subr.mxu0 0.0
        %1564 = vmatpush2.msra.mxu0 0.0
        %1565 = vmatprep.subr.mxu0 0.0
        %1566 = vmatpush2.msra.mxu0 0.0
        %1567 = vmatprep.subr.mxu0 0.0
        %1568 = vmatpush2.msra.mxu0 0.0
        %1569 = vmatprep.subr.mxu0 0.0
        %1570 = vmatpush2.msra.mxu0 0.0
        %1571 = vmatprep.subr.mxu0 0.0
        %1572 = vmatpush2.msra.mxu0 0.0
        %1573 = vmatprep.subr.mxu0 0.0
        %1574 = vmatpush2.msra.mxu0 0.0
        %1575 = vmatprep.subr.mxu0 0.0
        %1576 = vmatpush2.msra.mxu0 0.0
        %1577 = vmatprep.subr.mxu0 0.0
        %1578 = vmatpush2.msra.mxu0 0.0
        %1579 = vmatprep.subr.mxu0 0.0
        %1580 = vmatpush2.msra.mxu0 0.0
        %1581 = vmatprep.subr.mxu0 0.0
        %1582 = vmatpush2.msra.mxu0 0.0
        %1583 = vmatprep.subr.mxu0 0.0
        %1584 = vmatpush2.msra.mxu0 0.0
        %1585 = vmatprep.subr.mxu0 0.0
        %1586 = vmatpush2.msra.mxu0 0.0
        %1587 = vmatprep.mubr.f32.mxu0 0.0
        %v1588 = vand.u32 %v327, 4294901760
        %1589 = vmatmul.mubr.f32.gmra.mxu0 %v1588
        %v1590 = vpop.f32.mrf.mxu0
        %v1591 = vadd.f32 %v1488, %v1590
        %v1592 = vpop.f32.mrf.mxu0
        %v1593 = vadd.f32 %v1490, %v1592
        %1594 = vmatprep.mubr.f32.mxu0 0.0
        %v1595 = vand.u32 %v330, 4294901760
        %1596 = vmatmul.mubr.f32.gmra.mxu0 %v1595
        %v1597 = vpop.f32.mrf.mxu0
        %v1598 = vadd.f32 %v1499, %v1597
        %v1599 = vpop.f32.mrf.mxu0
        %v1600 = vadd.f32 %v1501, %v1599
        %1601 = vdwg.mxu0
        %1602 = vmatprep.subr.mxu0 0.0
        %1603 = vmatpush1.msra.mxu0 0.0
        %1604 = vmatprep.subr.mxu0 0.0
        %1605 = vmatpush1.msra.mxu0 0.0
        %1606 = vmatprep.subr.mxu0 0.0
        %1607 = vmatpush1.msra.mxu0 0.0
        %1608 = vmatprep.subr.mxu0 0.0
        %1609 = vmatpush1.msra.mxu0 0.0
        %1610 = vmatprep.subr.mxu0 0.0
        %1611 = vmatpush1.msra.mxu0 0.0
        %1612 = vmatprep.subr.mxu0 0.0
        %1613 = vmatpush1.msra.mxu0 0.0
        %1614 = vmatprep.subr.mxu0 0.0
        %1615 = vmatpush1.msra.mxu0 0.0
        %1616 = vmatprep.subr.mxu0 0.0
        %1617 = vmatpush1.msra.mxu0 0.0
        %1618 = vmatprep.subr.mxu0 0.0
        %1619 = vmatpush1.msra.mxu0 0.0
        %1620 = vmatprep.subr.mxu0 0.0
        %1621 = vmatpush1.msra.mxu0 0.0
        %1622 = vmatprep.subr.mxu0 0.0
        %1623 = vmatpush1.msra.mxu0 0.0
        %1624 = vmatprep.subr.mxu0 0.0
        %1625 = vmatpush1.msra.mxu0 0.0
        %1626 = vmatprep.subr.mxu0 0.0
        %1627 = vmatpush1.msra.mxu0 0.0
        %1628 = vmatprep.subr.mxu0 0.0
        %1629 = vmatpush1.msra.mxu0 0.0
        %v1630 = vand.u32 %v312, 4294901760
        %v1631 = vsub.f32 %v312, %v1630
        %1632 = vmatprep.subr.mxu0 %v1631
        %v1633 = vand.u32 %v311, 4294901760
        %v1634 = vsub.f32 %v311, %v1633
        %1635 = vmatpush1.msra.mxu0 %v1634
        %v1636 = vand.u32 %v306, 4294901760
        %v1637 = vsub.f32 %v306, %v1636
        %1638 = vmatprep.subr.mxu0 %v1637
        %v1639 = vand.u32 %v305, 4294901760
        %v1640 = vsub.f32 %v305, %v1639
        %1641 = vmatpush1.msra.mxu0 %v1640
        %1642 = vmatprep.subr.mxu0 0.0
        %1643 = vmatpush2.msra.mxu0 0.0
        %1644 = vmatprep.subr.mxu0 0.0
        %1645 = vmatpush2.msra.mxu0 0.0
        %1646 = vmatprep.subr.mxu0 0.0
        %1647 = vmatpush2.msra.mxu0 0.0
        %1648 = vmatprep.subr.mxu0 0.0
        %1649 = vmatpush2.msra.mxu0 0.0
        %1650 = vmatprep.subr.mxu0 0.0
        %1651 = vmatpush2.msra.mxu0 0.0
        %1652 = vmatprep.subr.mxu0 0.0
        %1653 = vmatpush2.msra.mxu0 0.0
        %1654 = vmatprep.subr.mxu0 0.0
        %1655 = vmatpush2.msra.mxu0 0.0
        %1656 = vmatprep.subr.mxu0 0.0
        %1657 = vmatpush2.msra.mxu0 0.0
        %1658 = vmatprep.subr.mxu0 0.0
        %1659 = vmatpush2.msra.mxu0 0.0
        %1660 = vmatprep.subr.mxu0 0.0
        %1661 = vmatpush2.msra.mxu0 0.0
        %1662 = vmatprep.subr.mxu0 0.0
        %1663 = vmatpush2.msra.mxu0 0.0
        %1664 = vmatprep.subr.mxu0 0.0
        %1665 = vmatpush2.msra.mxu0 0.0
        %1666 = vmatprep.subr.mxu0 0.0
        %1667 = vmatpush2.msra.mxu0 0.0
        %1668 = vmatprep.subr.mxu0 0.0
        %1669 = vmatpush2.msra.mxu0 0.0
        %1670 = vmatprep.subr.mxu0 0.0
        %1671 = vmatpush2.msra.mxu0 0.0
        %1672 = vmatprep.subr.mxu0 0.0
        %1673 = vmatpush2.msra.mxu0 0.0
        %1674 = vmatprep.mubr.f32.mxu0 0.0
        %v1675 = vand.u32 %v327, 4294901760
        %v1676 = vsub.f32 %v327, %v1675
        %1677 = vmatmul.mubr.f32.gmra.mxu0 %v1676
        %v1678 = vpop.f32.mrf.mxu0
        %v1679 = vadd.f32 %v1591, %v1678
        %v1680 = vpop.f32.mrf.mxu0
        %v1681 = vadd.f32 %v1593, %v1680
        %1682 = vmatprep.mubr.f32.mxu0 0.0
        %v1683 = vand.u32 %v330, 4294901760
        %v1684 = vsub.f32 %v330, %v1683
        %1685 = vmatmul.mubr.f32.gmra.mxu0 %v1684
        %v1686 = vpop.f32.mrf.mxu0
        %v1687 = vadd.f32 %v1598, %v1686
        %v1688 = vpop.f32.mrf.mxu0
        %v1689 = vadd.f32 %v1600, %v1688
        %1690 = vdwg.mxu0
        %1691 = vmatprep.subr.mxu0 0.0
        %1692 = vmatpush1.msra.mxu0 0.0
        %1693 = vmatprep.subr.mxu0 0.0
        %1694 = vmatpush1.msra.mxu0 0.0
        %1695 = vmatprep.subr.mxu0 0.0
        %1696 = vmatpush1.msra.mxu0 0.0
        %1697 = vmatprep.subr.mxu0 0.0
        %1698 = vmatpush1.msra.mxu0 0.0
        %1699 = vmatprep.subr.mxu0 0.0
        %1700 = vmatpush1.msra.mxu0 0.0
        %1701 = vmatprep.subr.mxu0 0.0
        %1702 = vmatpush1.msra.mxu0 0.0
        %1703 = vmatprep.subr.mxu0 0.0
        %1704 = vmatpush1.msra.mxu0 0.0
        %1705 = vmatprep.subr.mxu0 0.0
        %1706 = vmatpush1.msra.mxu0 0.0
        %1707 = vmatprep.subr.mxu0 0.0
        %1708 = vmatpush1.msra.mxu0 0.0
        %1709 = vmatprep.subr.mxu0 0.0
        %1710 = vmatpush1.msra.mxu0 0.0
        %1711 = vmatprep.subr.mxu0 0.0
        %1712 = vmatpush1.msra.mxu0 0.0
        %1713 = vmatprep.subr.mxu0 0.0
        %1714 = vmatpush1.msra.mxu0 0.0
        %1715 = vmatprep.subr.mxu0 0.0
        %1716 = vmatpush1.msra.mxu0 0.0
        %1717 = vmatprep.subr.mxu0 0.0
        %1718 = vmatpush1.msra.mxu0 0.0
        %v1719 = vand.u32 %v312, 4294901760
        %1720 = vmatprep.subr.mxu0 %v1719
        %v1721 = vand.u32 %v311, 4294901760
        %1722 = vmatpush1.msra.mxu0 %v1721
        %v1723 = vand.u32 %v306, 4294901760
        %1724 = vmatprep.subr.mxu0 %v1723
        %v1725 = vand.u32 %v305, 4294901760
        %1726 = vmatpush1.msra.mxu0 %v1725
        %1727 = vmatprep.subr.mxu0 0.0
        %1728 = vmatpush2.msra.mxu0 0.0
        %1729 = vmatprep.subr.mxu0 0.0
        %1730 = vmatpush2.msra.mxu0 0.0
        %1731 = vmatprep.subr.mxu0 0.0
        %1732 = vmatpush2.msra.mxu0 0.0
        %1733 = vmatprep.subr.mxu0 0.0
        %1734 = vmatpush2.msra.mxu0 0.0
        %1735 = vmatprep.subr.mxu0 0.0
        %1736 = vmatpush2.msra.mxu0 0.0
        %1737 = vmatprep.subr.mxu0 0.0
        %1738 = vmatpush2.msra.mxu0 0.0
        %1739 = vmatprep.subr.mxu0 0.0
        %1740 = vmatpush2.msra.mxu0 0.0
        %1741 = vmatprep.subr.mxu0 0.0
        %1742 = vmatpush2.msra.mxu0 0.0
        %1743 = vmatprep.subr.mxu0 0.0
        %1744 = vmatpush2.msra.mxu0 0.0
        %1745 = vmatprep.subr.mxu0 0.0
        %1746 = vmatpush2.msra.mxu0 0.0
        %1747 = vmatprep.subr.mxu0 0.0
        %1748 = vmatpush2.msra.mxu0 0.0
        %1749 = vmatprep.subr.mxu0 0.0
        %1750 = vmatpush2.msra.mxu0 0.0
        %1751 = vmatprep.subr.mxu0 0.0
        %1752 = vmatpush2.msra.mxu0 0.0
        %1753 = vmatprep.subr.mxu0 0.0
        %1754 = vmatpush2.msra.mxu0 0.0
        %1755 = vmatprep.subr.mxu0 0.0
        %1756 = vmatpush2.msra.mxu0 0.0
        %1757 = vmatprep.subr.mxu0 0.0
        %1758 = vmatpush2.msra.mxu0 0.0
        %1759 = vmatprep.mubr.f32.mxu0 0.0
        %v1760 = vand.u32 %v327, 4294901760
        %v1761 = vsub.f32 %v327, %v1760
        %v1762 = vand.u32 %v1761, 4294901760
        %1763 = vmatmul.mubr.f32.gmra.mxu0 %v1762
        %v1764 = vpop.f32.mrf.mxu0
        %v1765 = vadd.f32 %v1679, %v1764
        %v1766 = vpop.f32.mrf.mxu0
        %v1767 = vadd.f32 %v1681, %v1766
        %1768 = vmatprep.mubr.f32.mxu0 0.0
        %v1769 = vand.u32 %v330, 4294901760
        %v1770 = vsub.f32 %v330, %v1769
        %v1771 = vand.u32 %v1770, 4294901760
        %1772 = vmatmul.mubr.f32.gmra.mxu0 %v1771
        %v1773 = vpop.f32.mrf.mxu0
        %v1774 = vadd.f32 %v1687, %v1773
        %v1775 = vpop.f32.mrf.mxu0
        %v1776 = vadd.f32 %v1689, %v1775
        %1777 = vdwg.mxu0
        %1778 = vmatprep.subr.mxu0 0.0
        %1779 = vmatpush1.msra.mxu0 0.0
        %1780 = vmatprep.subr.mxu0 0.0
        %1781 = vmatpush1.msra.mxu0 0.0
        %1782 = vmatprep.subr.mxu0 0.0
        %1783 = vmatpush1.msra.mxu0 0.0
        %1784 = vmatprep.subr.mxu0 0.0
        %1785 = vmatpush1.msra.mxu0 0.0
        %1786 = vmatprep.subr.mxu0 0.0
        %1787 = vmatpush1.msra.mxu0 0.0
        %1788 = vmatprep.subr.mxu0 0.0
        %1789 = vmatpush1.msra.mxu0 0.0
        %1790 = vmatprep.subr.mxu0 0.0
        %1791 = vmatpush1.msra.mxu0 0.0
        %1792 = vmatprep.subr.mxu0 0.0
        %1793 = vmatpush1.msra.mxu0 0.0
        %1794 = vmatprep.subr.mxu0 0.0
        %1795 = vmatpush1.msra.mxu0 0.0
        %1796 = vmatprep.subr.mxu0 0.0
        %1797 = vmatpush1.msra.mxu0 0.0
        %1798 = vmatprep.subr.mxu0 0.0
        %1799 = vmatpush1.msra.mxu0 0.0
        %1800 = vmatprep.subr.mxu0 0.0
        %1801 = vmatpush1.msra.mxu0 0.0
        %1802 = vmatprep.subr.mxu0 0.0
        %1803 = vmatpush1.msra.mxu0 0.0
        %1804 = vmatprep.subr.mxu0 0.0
        %1805 = vmatpush1.msra.mxu0 0.0
        %v1806 = vand.u32 %v312, 4294901760
        %v1807 = vsub.f32 %v312, %v1806
        %v1808 = vand.u32 %v1807, 4294901760
        %1809 = vmatprep.subr.mxu0 %v1808
        %v1810 = vand.u32 %v311, 4294901760
        %v1811 = vsub.f32 %v311, %v1810
        %v1812 = vand.u32 %v1811, 4294901760
        %1813 = vmatpush1.msra.mxu0 %v1812
        %v1814 = vand.u32 %v306, 4294901760
        %v1815 = vsub.f32 %v306, %v1814
        %v1816 = vand.u32 %v1815, 4294901760
        %1817 = vmatprep.subr.mxu0 %v1816
        %v1818 = vand.u32 %v305, 4294901760
        %v1819 = vsub.f32 %v305, %v1818
        %v1820 = vand.u32 %v1819, 4294901760
        %1821 = vmatpush1.msra.mxu0 %v1820
        %1822 = vmatprep.subr.mxu0 0.0
        %1823 = vmatpush2.msra.mxu0 0.0
        %1824 = vmatprep.subr.mxu0 0.0
        %1825 = vmatpush2.msra.mxu0 0.0
        %1826 = vmatprep.subr.mxu0 0.0
        %1827 = vmatpush2.msra.mxu0 0.0
        %1828 = vmatprep.subr.mxu0 0.0
        %1829 = vmatpush2.msra.mxu0 0.0
        %1830 = vmatprep.subr.mxu0 0.0
        %1831 = vmatpush2.msra.mxu0 0.0
        %1832 = vmatprep.subr.mxu0 0.0
        %1833 = vmatpush2.msra.mxu0 0.0
        %1834 = vmatprep.subr.mxu0 0.0
        %1835 = vmatpush2.msra.mxu0 0.0
        %1836 = vmatprep.subr.mxu0 0.0
        %1837 = vmatpush2.msra.mxu0 0.0
        %1838 = vmatprep.subr.mxu0 0.0
        %1839 = vmatpush2.msra.mxu0 0.0
        %1840 = vmatprep.subr.mxu0 0.0
        %1841 = vmatpush2.msra.mxu0 0.0
        %1842 = vmatprep.subr.mxu0 0.0
        %1843 = vmatpush2.msra.mxu0 0.0
        %1844 = vmatprep.subr.mxu0 0.0
        %1845 = vmatpush2.msra.mxu0 0.0
        %1846 = vmatprep.subr.mxu0 0.0
        %1847 = vmatpush2.msra.mxu0 0.0
        %1848 = vmatprep.subr.mxu0 0.0
        %1849 = vmatpush2.msra.mxu0 0.0
        %1850 = vmatprep.subr.mxu0 0.0
        %1851 = vmatpush2.msra.mxu0 0.0
        %1852 = vmatprep.subr.mxu0 0.0
        %1853 = vmatpush2.msra.mxu0 0.0
        %1854 = vmatprep.mubr.f32.mxu0 0.0
        %v1855 = vand.u32 %v327, 4294901760
        %1856 = vmatmul.mubr.f32.gmra.mxu0 %v1855
        %v1857 = vpop.f32.mrf.mxu0
        %v1858 = vadd.f32 %v1765, %v1857
        %v1859 = vpop.f32.mrf.mxu0
        %v1860 = vadd.f32 %v1767, %v1859
        %1861 = vmatprep.mubr.f32.mxu0 0.0
        %v1862 = vand.u32 %v330, 4294901760
        %1863 = vmatmul.mubr.f32.gmra.mxu0 %v1862
        %v1864 = vpop.f32.mrf.mxu0
        %v1865 = vadd.f32 %v1774, %v1864
        %v1866 = vpop.f32.mrf.mxu0
        %v1867 = vadd.f32 %v1776, %v1866
        %1868 = vdwg.mxu0
        %1869 = vmatprep.subr.mxu0 0.0
        %1870 = vmatpush1.msra.mxu0 0.0
        %1871 = vmatprep.subr.mxu0 0.0
        %1872 = vmatpush1.msra.mxu0 0.0
        %1873 = vmatprep.subr.mxu0 0.0
        %1874 = vmatpush1.msra.mxu0 0.0
        %1875 = vmatprep.subr.mxu0 0.0
        %1876 = vmatpush1.msra.mxu0 0.0
        %1877 = vmatprep.subr.mxu0 0.0
        %1878 = vmatpush1.msra.mxu0 0.0
        %1879 = vmatprep.subr.mxu0 0.0
        %1880 = vmatpush1.msra.mxu0 0.0
        %1881 = vmatprep.subr.mxu0 0.0
        %1882 = vmatpush1.msra.mxu0 0.0
        %1883 = vmatprep.subr.mxu0 0.0
        %1884 = vmatpush1.msra.mxu0 0.0
        %1885 = vmatprep.subr.mxu0 0.0
        %1886 = vmatpush1.msra.mxu0 0.0
        %1887 = vmatprep.subr.mxu0 0.0
        %1888 = vmatpush1.msra.mxu0 0.0
        %1889 = vmatprep.subr.mxu0 0.0
        %1890 = vmatpush1.msra.mxu0 0.0
        %1891 = vmatprep.subr.mxu0 0.0
        %1892 = vmatpush1.msra.mxu0 0.0
        %1893 = vmatprep.subr.mxu0 0.0
        %1894 = vmatpush1.msra.mxu0 0.0
        %1895 = vmatprep.subr.mxu0 0.0
        %1896 = vmatpush1.msra.mxu0 0.0
        %v1897 = vand.u32 %v312, 4294901760
        %1898 = vmatprep.subr.mxu0 %v1897
        %v1899 = vand.u32 %v311, 4294901760
        %1900 = vmatpush1.msra.mxu0 %v1899
        %v1901 = vand.u32 %v306, 4294901760
        %1902 = vmatprep.subr.mxu0 %v1901
        %v1903 = vand.u32 %v305, 4294901760
        %1904 = vmatpush1.msra.mxu0 %v1903
        %1905 = vmatprep.subr.mxu0 0.0
        %1906 = vmatpush2.msra.mxu0 0.0
        %1907 = vmatprep.subr.mxu0 0.0
        %1908 = vmatpush2.msra.mxu0 0.0
        %1909 = vmatprep.subr.mxu0 0.0
        %1910 = vmatpush2.msra.mxu0 0.0
        %1911 = vmatprep.subr.mxu0 0.0
        %1912 = vmatpush2.msra.mxu0 0.0
        %1913 = vmatprep.subr.mxu0 0.0
        %1914 = vmatpush2.msra.mxu0 0.0
        %1915 = vmatprep.subr.mxu0 0.0
        %1916 = vmatpush2.msra.mxu0 0.0
        %1917 = vmatprep.subr.mxu0 0.0
        %1918 = vmatpush2.msra.mxu0 0.0
        %1919 = vmatprep.subr.mxu0 0.0
        %1920 = vmatpush2.msra.mxu0 0.0
        %1921 = vmatprep.subr.mxu0 0.0
        %1922 = vmatpush2.msra.mxu0 0.0
        %1923 = vmatprep.subr.mxu0 0.0
        %1924 = vmatpush2.msra.mxu0 0.0
        %1925 = vmatprep.subr.mxu0 0.0
        %1926 = vmatpush2.msra.mxu0 0.0
        %1927 = vmatprep.subr.mxu0 0.0
        %1928 = vmatpush2.msra.mxu0 0.0
        %1929 = vmatprep.subr.mxu0 0.0
        %1930 = vmatpush2.msra.mxu0 0.0
        %1931 = vmatprep.subr.mxu0 0.0
        %1932 = vmatpush2.msra.mxu0 0.0
        %1933 = vmatprep.subr.mxu0 0.0
        %1934 = vmatpush2.msra.mxu0 0.0
        %1935 = vmatprep.subr.mxu0 0.0
        %1936 = vmatpush2.msra.mxu0 0.0
        %1937 = vmatprep.mubr.f32.mxu0 0.0
        %v1938 = vand.u32 %v327, 4294901760
        %1939 = vmatmul.mubr.f32.gmra.mxu0 %v1938
        %v1940 = vpop.f32.mrf.mxu0
        %v1941 = vadd.f32 %v1858, %v1940
        %v1942 = vpop.f32.mrf.mxu0
        %v1943 = vadd.f32 %v1860, %v1942
        %1944 = vmatprep.mubr.f32.mxu0 0.0
        %v1945 = vand.u32 %v330, 4294901760
        %1946 = vmatmul.mubr.f32.gmra.mxu0 %v1945
        %v1947 = vpop.f32.mrf.mxu0
        %v1948 = vadd.f32 %v1865, %v1947
        %v1949 = vpop.f32.mrf.mxu0
        %v1950 = vadd.f32 %v1867, %v1949
        %1951 = vdwg.mxu0
        %v1952 = vld [vmem:[%s1] sm:$0xff]
        %v1953 = vld [vmem:[%s1 + $0x8] sm:$0xff]
        %1955 = vset.pattern.permute.xlu0 0
        %1956 = vperm.xlu0 %1955, %v1952
        %v1957 = vpop.permute.xlu0 %1956
        %1960 = vset.pattern.permute.xlu0 0
        %1961 = vperm.xlu0 %1960, %v1953
        %v1962 = vpop.permute.xlu0 %1961
        %v1964 = vadd.f32 %v861, %v1957
        %v1965 = vadd.f32 %v863, %v1957
        %v1966 = vadd.f32 %v1401, %v1957
        %v1967 = vadd.f32 %v1403, %v1957
        %v1968 = vadd.f32 %v1941, %v1957
        %v1969 = vadd.f32 %v1943, %v1957
        %v1970 = vadd.f32 %v868, %v1962
        %v1971 = vadd.f32 %v870, %v1962
        %v1972 = vadd.f32 %v1408, %v1962
        %v1973 = vadd.f32 %v1410, %v1962
        %v1974 = vadd.f32 %v1948, %v1962
        %v1975 = vadd.f32 %v1950, %v1962
        %v1976 = vmul.f32 %v1964, 0.5
        %v1977 = vmul.f32 %v1965, 0.5
        %v1978 = vmul.f32 %v1966, 0.5
        %v1979 = vmul.f32 %v1967, 0.5
        %v1980 = vmul.f32 %v1968, 0.5
        %v1981 = vmul.f32 %v1969, 0.5
        %v1982 = vmul.f32 %v1970, 0.5
        %v1983 = vmul.f32 %v1971, 0.5
        %v1984 = vmul.f32 %v1972, 0.5
        %v1985 = vmul.f32 %v1973, 0.5
        %v1986 = vmul.f32 %v1974, 0.5
        %v1987 = vmul.f32 %v1975, 0.5
        %v1988 = vmul.f32 %v1964, 0.70710677
        %v1989 = vmul.f32 %v1965, 0.70710677
        %v1990 = vmul.f32 %v1966, 0.70710677
        %v1991 = vmul.f32 %v1967, 0.70710677
        %v1992 = vmul.f32 %v1968, 0.70710677
        %v1993 = vmul.f32 %v1969, 0.70710677
        %v1994 = vmul.f32 %v1970, 0.70710677
        %v1995 = vmul.f32 %v1971, 0.70710677
        %v1996 = vmul.f32 %v1972, 0.70710677
        %v1997 = vmul.f32 %v1973, 0.70710677
        %v1998 = vmul.f32 %v1974, 0.70710677
        %v1999 = vmul.f32 %v1975, 0.70710677
        %v2000 = vand.u32 2147483647, %v1988
        %v2001 = vand.u32 2147483647, %v1989
        %v2002 = vand.u32 2147483647, %v1990
        %v2003 = vand.u32 2147483647, %v1991
        %v2004 = vand.u32 2147483647, %v1992
        %v2005 = vand.u32 2147483647, %v1993
        %v2006 = vand.u32 2147483647, %v1994
        %v2007 = vand.u32 2147483647, %v1995
        %v2008 = vand.u32 2147483647, %v1996
        %v2009 = vand.u32 2147483647, %v1997
        %v2010 = vand.u32 2147483647, %v1998
        %v2011 = vand.u32 2147483647, %v1999
        %v2012 = vmul.f32 %v2000, 0.3275911
        %v2013 = vmul.f32 %v2001, 0.3275911
        %v2014 = vmul.f32 %v2002, 0.3275911
        %v2015 = vmul.f32 %v2003, 0.3275911
        %v2016 = vmul.f32 %v2004, 0.3275911
        %v2017 = vmul.f32 %v2005, 0.3275911
        %v2018 = vmul.f32 %v2006, 0.3275911
        %v2019 = vmul.f32 %v2007, 0.3275911
        %v2020 = vmul.f32 %v2008, 0.3275911
        %v2021 = vmul.f32 %v2009, 0.3275911
        %v2022 = vmul.f32 %v2010, 0.3275911
        %v2023 = vmul.f32 %v2011, 0.3275911
        %v2024 = vadd.f32 %v2012, 1.0
        %v2025 = vadd.f32 %v2013, 1.0
        %v2026 = vadd.f32 %v2014, 1.0
        %v2027 = vadd.f32 %v2015, 1.0
        %v2028 = vadd.f32 %v2016, 1.0
        %v2029 = vadd.f32 %v2017, 1.0
        %v2030 = vadd.f32 %v2018, 1.0
        %v2031 = vadd.f32 %v2019, 1.0
        %v2032 = vadd.f32 %v2020, 1.0
        %v2033 = vadd.f32 %v2021, 1.0
        %v2034 = vadd.f32 %v2022, 1.0
        %v2035 = vadd.f32 %v2023, 1.0
        %v2036 = vrcp.pop %v2024
        %v2037 = vmul.f32 1.0, %v2036
        %v2038 = vrcp.pop %v2025
        %v2039 = vmul.f32 1.0, %v2038
        %v2040 = vrcp.pop %v2026
        %v2041 = vmul.f32 1.0, %v2040
        %v2042 = vrcp.pop %v2027
        %v2043 = vmul.f32 1.0, %v2042
        %v2044 = vrcp.pop %v2028
        %v2045 = vmul.f32 1.0, %v2044
        %v2046 = vrcp.pop %v2029
        %v2047 = vmul.f32 1.0, %v2046
        %v2048 = vrcp.pop %v2030
        %v2049 = vmul.f32 1.0, %v2048
        %v2050 = vrcp.pop %v2031
        %v2051 = vmul.f32 1.0, %v2050
        %v2052 = vrcp.pop %v2032
        %v2053 = vmul.f32 1.0, %v2052
        %v2054 = vrcp.pop %v2033
        %v2055 = vmul.f32 1.0, %v2054
        %v2056 = vrcp.pop %v2034
        %v2057 = vmul.f32 1.0, %v2056
        %v2058 = vrcp.pop %v2035
        %v2059 = vmul.f32 1.0, %v2058
        %v2060 = vmul.f32 %v2037, 1.0614054
        %v2061 = vmul.f32 %v2039, 1.0614054
        %v2062 = vmul.f32 %v2041, 1.0614054
        %v2063 = vmul.f32 %v2043, 1.0614054
        %v2064 = vmul.f32 %v2045, 1.0614054
        %v2065 = vmul.f32 %v2047, 1.0614054
        %v2066 = vmul.f32 %v2049, 1.0614054
        %v2067 = vmul.f32 %v2051, 1.0614054
        %v2068 = vmul.f32 %v2053, 1.0614054
        %v2069 = vmul.f32 %v2055, 1.0614054
        %v2070 = vmul.f32 %v2057, 1.0614054
        %v2071 = vmul.f32 %v2059, 1.0614054
        %v2072 = vadd.f32 %v2060, -1.4531521
        %v2073 = vadd.f32 %v2061, -1.4531521
        %v2074 = vadd.f32 %v2062, -1.4531521
        %v2075 = vadd.f32 %v2063, -1.4531521
        %v2076 = vadd.f32 %v2064, -1.4531521
        %v2077 = vadd.f32 %v2065, -1.4531521
        %v2078 = vadd.f32 %v2066, -1.4531521
        %v2079 = vadd.f32 %v2067, -1.4531521
        %v2080 = vadd.f32 %v2068, -1.4531521
        %v2081 = vadd.f32 %v2069, -1.4531521
        %v2082 = vadd.f32 %v2070, -1.4531521
        %v2083 = vadd.f32 %v2071, -1.4531521
        %v2084 = vmul.f32 %v2072, %v2037
        %v2085 = vmul.f32 %v2073, %v2039
        %v2086 = vmul.f32 %v2074, %v2041
        %v2087 = vmul.f32 %v2075, %v2043
        %v2088 = vmul.f32 %v2076, %v2045
        %v2089 = vmul.f32 %v2077, %v2047
        %v2090 = vmul.f32 %v2078, %v2049
        %v2091 = vmul.f32 %v2079, %v2051
        %v2092 = vmul.f32 %v2080, %v2053
        %v2093 = vmul.f32 %v2081, %v2055
        %v2094 = vmul.f32 %v2082, %v2057
        %v2095 = vmul.f32 %v2083, %v2059
        %v2096 = vadd.f32 %v2084, 1.4214138
        %v2097 = vadd.f32 %v2085, 1.4214138
        %v2098 = vadd.f32 %v2086, 1.4214138
        %v2099 = vadd.f32 %v2087, 1.4214138
        %v2100 = vadd.f32 %v2088, 1.4214138
        %v2101 = vadd.f32 %v2089, 1.4214138
        %v2102 = vadd.f32 %v2090, 1.4214138
        %v2103 = vadd.f32 %v2091, 1.4214138
        %v2104 = vadd.f32 %v2092, 1.4214138
        %v2105 = vadd.f32 %v2093, 1.4214138
        %v2106 = vadd.f32 %v2094, 1.4214138
        %v2107 = vadd.f32 %v2095, 1.4214138
        %v2108 = vmul.f32 %v2096, %v2037
        %v2109 = vmul.f32 %v2097, %v2039
        %v2110 = vmul.f32 %v2098, %v2041
        %v2111 = vmul.f32 %v2099, %v2043
        %v2112 = vmul.f32 %v2100, %v2045
        %v2113 = vmul.f32 %v2101, %v2047
        %v2114 = vmul.f32 %v2102, %v2049
        %v2115 = vmul.f32 %v2103, %v2051
        %v2116 = vmul.f32 %v2104, %v2053
        %v2117 = vmul.f32 %v2105, %v2055
        %v2118 = vmul.f32 %v2106, %v2057
        %v2119 = vmul.f32 %v2107, %v2059
        %v2120 = vadd.f32 %v2108, -0.28449672
        %v2121 = vadd.f32 %v2109, -0.28449672
        %v2122 = vadd.f32 %v2110, -0.28449672
        %v2123 = vadd.f32 %v2111, -0.28449672
        %v2124 = vadd.f32 %v2112, -0.28449672
        %v2125 = vadd.f32 %v2113, -0.28449672
        %v2126 = vadd.f32 %v2114, -0.28449672
        %v2127 = vadd.f32 %v2115, -0.28449672
        %v2128 = vadd.f32 %v2116, -0.28449672
        %v2129 = vadd.f32 %v2117, -0.28449672
        %v2130 = vadd.f32 %v2118, -0.28449672
        %v2131 = vadd.f32 %v2119, -0.28449672
        %v2132 = vmul.f32 %v2120, %v2037
        %v2133 = vmul.f32 %v2121, %v2039
        %v2134 = vmul.f32 %v2122, %v2041
        %v2135 = vmul.f32 %v2123, %v2043
        %v2136 = vmul.f32 %v2124, %v2045
        %v2137 = vmul.f32 %v2125, %v2047
        %v2138 = vmul.f32 %v2126, %v2049
        %v2139 = vmul.f32 %v2127, %v2051
        %v2140 = vmul.f32 %v2128, %v2053
        %v2141 = vmul.f32 %v2129, %v2055
        %v2142 = vmul.f32 %v2130, %v2057
        %v2143 = vmul.f32 %v2131, %v2059
        %v2144 = vadd.f32 %v2132, 0.2548296
        %v2145 = vadd.f32 %v2133, 0.2548296
        %v2146 = vadd.f32 %v2134, 0.2548296
        %v2147 = vadd.f32 %v2135, 0.2548296
        %v2148 = vadd.f32 %v2136, 0.2548296
        %v2149 = vadd.f32 %v2137, 0.2548296
        %v2150 = vadd.f32 %v2138, 0.2548296
        %v2151 = vadd.f32 %v2139, 0.2548296
        %v2152 = vadd.f32 %v2140, 0.2548296
        %v2153 = vadd.f32 %v2141, 0.2548296
        %v2154 = vadd.f32 %v2142, 0.2548296
        %v2155 = vadd.f32 %v2143, 0.2548296
        %v2156 = vmul.f32 %v2144, %v2037
        %v2157 = vmul.f32 %v2145, %v2039
        %v2158 = vmul.f32 %v2146, %v2041
        %v2159 = vmul.f32 %v2147, %v2043
        %v2160 = vmul.f32 %v2148, %v2045
        %v2161 = vmul.f32 %v2149, %v2047
        %v2162 = vmul.f32 %v2150, %v2049
        %v2163 = vmul.f32 %v2151, %v2051
        %v2164 = vmul.f32 %v2152, %v2053
        %v2165 = vmul.f32 %v2153, %v2055
        %v2166 = vmul.f32 %v2154, %v2057
        %v2167 = vmul.f32 %v2155, %v2059
        %v2168 = vsub.f32 0.0, %v2000
        %v2169 = vsub.f32 0.0, %v2001
        %v2170 = vsub.f32 0.0, %v2002
        %v2171 = vsub.f32 0.0, %v2003
        %v2172 = vsub.f32 0.0, %v2004
        %v2173 = vsub.f32 0.0, %v2005
        %v2174 = vsub.f32 0.0, %v2006
        %v2175 = vsub.f32 0.0, %v2007
        %v2176 = vsub.f32 0.0, %v2008
        %v2177 = vsub.f32 0.0, %v2009
        %v2178 = vsub.f32 0.0, %v2010
        %v2179 = vsub.f32 0.0, %v2011
        %v2180 = vmul.f32 %v2168, %v2000
        %v2181 = vmul.f32 %v2169, %v2001
        %v2182 = vmul.f32 %v2170, %v2002
        %v2183 = vmul.f32 %v2171, %v2003
        %v2184 = vmul.f32 %v2172, %v2004
        %v2185 = vmul.f32 %v2173, %v2005
        %v2186 = vmul.f32 %v2174, %v2006
        %v2187 = vmul.f32 %v2175, %v2007
        %v2188 = vmul.f32 %v2176, %v2008
        %v2189 = vmul.f32 %v2177, %v2009
        %v2190 = vmul.f32 %v2178, %v2010
        %v2191 = vmul.f32 %v2179, %v2011
        %v2192 = vmul.f32 %v2180, 1.442695
        %v2193 = vpow.pop %v2192
        %v2194 = vmul.f32 %v2181, 1.442695
        %v2195 = vpow.pop %v2194
        %v2196 = vmul.f32 %v2182, 1.442695
        %v2197 = vpow.pop %v2196
        %v2198 = vmul.f32 %v2183, 1.442695
        %v2199 = vpow.pop %v2198
        %v2200 = vmul.f32 %v2184, 1.442695
        %v2201 = vpow.pop %v2200
        %v2202 = vmul.f32 %v2185, 1.442695
        %v2203 = vpow.pop %v2202
        %v2204 = vmul.f32 %v2186, 1.442695
        %v2205 = vpow.pop %v2204
        %v2206 = vmul.f32 %v2187, 1.442695
        %v2207 = vpow.pop %v2206
        %v2208 = vmul.f32 %v2188, 1.442695
        %v2209 = vpow.pop %v2208
        %v2210 = vmul.f32 %v2189, 1.442695
        %v2211 = vpow.pop %v2210
        %v2212 = vmul.f32 %v2190, 1.442695
        %v2213 = vpow.pop %v2212
        %v2214 = vmul.f32 %v2191, 1.442695
        %v2215 = vpow.pop %v2214
        %v2216 = vmul.f32 %v2156, %v2193
        %v2217 = vmul.f32 %v2157, %v2195
        %v2218 = vmul.f32 %v2158, %v2197
        %v2219 = vmul.f32 %v2159, %v2199
        %v2220 = vmul.f32 %v2160, %v2201
        %v2221 = vmul.f32 %v2161, %v2203
        %v2222 = vmul.f32 %v2162, %v2205
        %v2223 = vmul.f32 %v2163, %v2207
        %v2224 = vmul.f32 %v2164, %v2209
        %v2225 = vmul.f32 %v2165, %v2211
        %v2226 = vmul.f32 %v2166, %v2213
        %v2227 = vmul.f32 %v2167, %v2215
        %v2228 = vsub.f32 1.0, %v2216
        %v2229 = vsub.f32 1.0, %v2217
        %v2230 = vsub.f32 1.0, %v2218
        %v2231 = vsub.f32 1.0, %v2219
        %v2232 = vsub.f32 1.0, %v2220
        %v2233 = vsub.f32 1.0, %v2221
        %v2234 = vsub.f32 1.0, %v2222
        %v2235 = vsub.f32 1.0, %v2223
        %v2236 = vsub.f32 1.0, %v2224
        %v2237 = vsub.f32 1.0, %v2225
        %v2238 = vsub.f32 1.0, %v2226
        %v2239 = vsub.f32 1.0, %v2227
        %vm2240 = vcmp.lt.f32.partialorder %v1988, 0.0
        %vm2241 = vcmp.lt.f32.partialorder %v1989, 0.0
        %vm2242 = vcmp.lt.f32.partialorder %v1990, 0.0
        %vm2243 = vcmp.lt.f32.partialorder %v1991, 0.0
        %vm2244 = vcmp.lt.f32.partialorder %v1992, 0.0
        %vm2245 = vcmp.lt.f32.partialorder %v1993, 0.0
        %vm2246 = vcmp.lt.f32.partialorder %v1994, 0.0
        %vm2247 = vcmp.lt.f32.partialorder %v1995, 0.0
        %vm2248 = vcmp.lt.f32.partialorder %v1996, 0.0
        %vm2249 = vcmp.lt.f32.partialorder %v1997, 0.0
        %vm2250 = vcmp.lt.f32.partialorder %v1998, 0.0
        %vm2251 = vcmp.lt.f32.partialorder %v1999, 0.0
        %v2252 = vsub.f32 0.0, %v2228
        %v2253 = vsub.f32 0.0, %v2229
        %v2254 = vsub.f32 0.0, %v2230
        %v2255 = vsub.f32 0.0, %v2231
        %v2256 = vsub.f32 0.0, %v2232
        %v2257 = vsub.f32 0.0, %v2233
        %v2258 = vsub.f32 0.0, %v2234
        %v2259 = vsub.f32 0.0, %v2235
        %v2260 = vsub.f32 0.0, %v2236
        %v2261 = vsub.f32 0.0, %v2237
        %v2262 = vsub.f32 0.0, %v2238
        %v2263 = vsub.f32 0.0, %v2239
        %v2264 = vsel %vm2240, %v2252, %v2228
        %v2265 = vsel %vm2241, %v2253, %v2229
        %v2266 = vsel %vm2242, %v2254, %v2230
        %v2267 = vsel %vm2243, %v2255, %v2231
        %v2268 = vsel %vm2244, %v2256, %v2232
        %v2269 = vsel %vm2245, %v2257, %v2233
        %v2270 = vsel %vm2246, %v2258, %v2234
        %v2271 = vsel %vm2247, %v2259, %v2235
        %v2272 = vsel %vm2248, %v2260, %v2236
        %v2273 = vsel %vm2249, %v2261, %v2237
        %v2274 = vsel %vm2250, %v2262, %v2238
        %v2275 = vsel %vm2251, %v2263, %v2239
        %v2276 = vadd.f32 %v2264, 1.0
        %v2277 = vadd.f32 %v2265, 1.0
        %v2278 = vadd.f32 %v2266, 1.0
        %v2279 = vadd.f32 %v2267, 1.0
        %v2280 = vadd.f32 %v2268, 1.0
        %v2281 = vadd.f32 %v2269, 1.0
        %v2282 = vadd.f32 %v2270, 1.0
        %v2283 = vadd.f32 %v2271, 1.0
        %v2284 = vadd.f32 %v2272, 1.0
        %v2285 = vadd.f32 %v2273, 1.0
        %v2286 = vadd.f32 %v2274, 1.0
        %v2287 = vadd.f32 %v2275, 1.0
        %v2288 = vmul.f32 %v1976, %v2276
        %v2289 = vmul.f32 %v1977, %v2277
        %v2290 = vmul.f32 %v1978, %v2278
        %v2291 = vmul.f32 %v1979, %v2279
        %v2292 = vmul.f32 %v1980, %v2280
        %v2293 = vmul.f32 %v1981, %v2281
        %v2294 = vmul.f32 %v1982, %v2282
        %v2295 = vmul.f32 %v1983, %v2283
        %v2296 = vmul.f32 %v1984, %v2284
        %v2297 = vmul.f32 %v1985, %v2285
        %v2298 = vmul.f32 %v1986, %v2286
        %v2299 = vmul.f32 %v1987, %v2287
        %2300 = vst [vmem:[%s295] sm:$0xff] %v2288
        %2301 = vst [vmem:[%s295 + $0x8] sm:$0xff] %v2289
        %2302 = vst [vmem:[%s295 + $0x10] sm:$0xff] %v2290
        %2303 = vst [vmem:[%s295 + $0x18] sm:$0xff] %v2291
        %2304 = vst [vmem:[%s295 + $0x20] sm:$0xff] %v2292
        %2305 = vst [vmem:[%s295 + $0x28] sm:$0xff] %v2293
        %2306 = vst [vmem:[%s295 + $0x30] sm:$0xff] %v2294
        %2307 = vst [vmem:[%s295 + $0x38] sm:$0xff] %v2295
        %2308 = vst [vmem:[%s295 + $0x40] sm:$0xff] %v2296
        %2309 = vst [vmem:[%s295 + $0x48] sm:$0xff] %v2297
        %2310 = vst [vmem:[%s295 + $0x50] sm:$0xff] %v2298
        %2311 = vst [vmem:[%s295 + $0x58] sm:$0xff] %v2299
        %s2312 = sand.u32 %s117, 1
        %s2313 = sand.u32 %s117, 1
        %s2314 = smul.addr %s2313, 96
        %s2315 = scalar_lea.vmem [#allocation4], %s2314
        // Predicated region
        $region83: #{fno2d_forward.3} parent=73 // pred_check
          %p2316 = pneg %p127
        $region84: #{fno2d_forward.3} parent=73 // pred_check_branch
          %2318 = sbr.rel (%p2316) target = $region86
        $region85: #{fno2d_forward.3} parent=73 // pred_region
          %s2319 = smul.u32 6, %s15
          %s2320 = smul.addr %s2319, 8
          %s2321 = scalar_lea.vmem %s4, %s2320
          // Predicated region
          $region87: #{fno2d_forward.3} parent=85 // pred_check
            _
          $region88: #{fno2d_forward.3} parent=85 // pred_check_branch
            %2323 = sbr.rel (0) target = $region90
          $region89: #{fno2d_forward.3} parent=85 // pred_region
            // Predicated region
            $region91: #{fno2d_forward.3} parent=89 // pred_check
              _
            $region92: #{fno2d_forward.3} parent=89 // pred_check_branch
              %2325 = sbr.rel (0) target = $region94
            $region93: #{fno2d_forward.3} parent=89 // pred_region
              loop: start=0, step=1, limit=1
              $region95: #{fno2d_forward.3} parent=93 // loop_pre_header
                _
              $region96: #{fno2d_forward.3} parent=93 // loop_header
                %s2327 = sphi 0, %s2331
                %p2328 = scmp.ge.s32.totalorder %s2327, 1
                %s2332 = sphi %s2315, %s2315
                %s2333 = sphi %s2321, %s2321
              $region97: #{fno2d_forward.3} parent=93 // loop_header_branch
                %2330 = sbr.rel (%p2328) target = $region101
              $region98: #{fno2d_forward.3} parent=93 // loop_body
                %v2334 = vld [vmem:[%s2332] sm:$0xff]
                %2335 = vst [vmem:[%s2333] sm:$0xff] %v2334
                %v2336 = vld [vmem:[%s2332 + $0x8] sm:$0xff]
                %2337 = vst [vmem:[%s2333 + $0x8] sm:$0xff] %v2336
                %v2338 = vld [vmem:[%s2332 + $0x10] sm:$0xff]
                %2339 = vst [vmem:[%s2333 + $0x10] sm:$0xff] %v2338
                %v2340 = vld [vmem:[%s2332 + $0x18] sm:$0xff]
                %2341 = vst [vmem:[%s2333 + $0x18] sm:$0xff] %v2340
                %v2342 = vld [vmem:[%s2332 + $0x20] sm:$0xff]
                %2343 = vst [vmem:[%s2333 + $0x20] sm:$0xff] %v2342
                %v2344 = vld [vmem:[%s2332 + $0x28] sm:$0xff]
                %2345 = vst [vmem:[%s2333 + $0x28] sm:$0xff] %v2344
                %v2346 = vld [vmem:[%s2332 + $0x30] sm:$0xff]
                %2347 = vst [vmem:[%s2333 + $0x60] sm:$0xff] %v2346
                %v2348 = vld [vmem:[%s2332 + $0x38] sm:$0xff]
                %2349 = vst [vmem:[%s2333 + $0x68] sm:$0xff] %v2348
                %v2350 = vld [vmem:[%s2332 + $0x40] sm:$0xff]
                %2351 = vst [vmem:[%s2333 + $0x70] sm:$0xff] %v2350
                %v2352 = vld [vmem:[%s2332 + $0x48] sm:$0xff]
                %2353 = vst [vmem:[%s2333 + $0x78] sm:$0xff] %v2352
                %v2354 = vld [vmem:[%s2332 + $0x50] sm:$0xff]
                %2355 = vst [vmem:[%s2333 + $0x80] sm:$0xff] %v2354
                %v2356 = vld [vmem:[%s2332 + $0x58] sm:$0xff]
                %2357 = vst [vmem:[%s2333 + $0x88] sm:$0xff] %v2356
              $region99: #{fno2d_forward.3} parent=93 // loop_footer
                %s2331 = sadd.s32 1, %s2327
              $region100: #{fno2d_forward.3} parent=93 // loop_footer_branch
                %2326 = sbr.rel target = $region96
              $region101: #{fno2d_forward.3} parent=93 // loop_exit
                _
            $region94: #{fno2d_forward.3} parent=89 // pred_fallthru
              _
            // Predicated region
            $region102: #{fno2d_forward.3} parent=89 // pred_check
              _
            $region103: #{fno2d_forward.3} parent=89 // pred_check_branch
              %2359 = sbr.rel target = $region105
            $region104: #{fno2d_forward.3} parent=89 // pred_region
              _
            $region105: #{fno2d_forward.3} parent=89 // pred_fallthru
              _
          $region90: #{fno2d_forward.3} parent=85 // pred_fallthru
            _
          %2360 = vnop
        $region86: #{fno2d_forward.3} parent=73 // pred_fallthru
          _
      $region74: #{fno2d_forward.3} parent=5 // pred_fallthru
        _
      %p2361 = scmp.le.s32.totalorder 2, %s10
      // Predicated region
      $region106: #{fno2d_forward.3} parent=5 // pred_check
        %p2362 = pneg %p2361
      $region107: #{fno2d_forward.3} parent=5 // pred_check_branch
        %2364 = sbr.rel (%p2362) target = $region109
      $region108: #{fno2d_forward.3} parent=5 // pred_region
        %s2365 = ssub.s32 %s10, 2
        // Predicated region
        $region110: #{fno2d_forward.3} parent=108 // pred_check
          %p2366 = pneg %p133
        $region111: #{fno2d_forward.3} parent=108 // pred_check_branch
          %2368 = sbr.rel (%p2366) target = $region113
        $region112: #{fno2d_forward.3} parent=108 // pred_region
          %s2369 = sand.u32 %s118, 1
          %s2370 = sand.u32 %s118, 1
          %s2371 = smul.addr %s2370, 96
          %s2372 = scalar_lea.vmem [#allocation4], %s2371
        $region113: #{fno2d_forward.3} parent=108 // pred_fallthru
          _
      $region109: #{fno2d_forward.3} parent=5 // pred_fallthru
        _
    $region6: #{fno2d_forward.3} parent=1 // loop_footer
      %s14 = sadd.s32 1, %s10
    $region7: #{fno2d_forward.3} parent=1 // loop_footer_branch
      %9 = sbr.rel target = $region3
    $region8: #{fno2d_forward.3} parent=1 // loop_exit
      _

</llo_original>
